<compile_context>
chip_gen: v6e
topology: v6e:2x2x1
jax: 0.10.0
libtpu: 0.0.40
codegen_flags: <defaults>
</compile_context>

<pallas_src>
from functools import partial

import numpy as np
import jax
import jax.numpy as jnp
from jax import lax
from jax.experimental import pallas as pl
from jax.experimental.pallas import tpu as pltpu

_CUBIC_A = -0.75  # PyTorch's bicubic coefficient


def _bicubic_matrix(in_size: int, scale: int) -> np.ndarray:
    """1-D interpolation matrix matching torch F.interpolate(mode='bicubic',
    align_corners=False) for an integer scale factor (border-clamped taps)."""
    a = _CUBIC_A
    out_size = in_size * scale

    def w_near(x):  # |x| <= 1
        return ((a + 2.0) * x - (a + 3.0)) * x * x + 1.0

    def w_far(x):   # 1 < |x| < 2
        return (((a * x) - 5.0 * a) * x + 8.0 * a) * x - 4.0 * a

    m = np.zeros((out_size, in_size), dtype=np.float64)
    for i_out in range(out_size):
        src = (i_out + 0.5) / scale - 0.5
        i0 = int(np.floor(src))
        t = src - i0
        weights = (w_far(1.0 + t), w_near(t), w_near(1.0 - t), w_far(2.0 - t))
        for tap, wgt in zip((i0 - 1, i0, i0 + 1, i0 + 2), weights):
            m[i_out, min(max(tap, 0), in_size - 1)] += wgt
    return m.astype(np.float32)


def _upsample_conv_kernel(x_ref, g_ref, w_ref, b_ref, o_ref, cols_ref, *, kk, lb):
    # x_ref   : (C_in, H*W)       bf16  low-res input plane (lane-dense)
    # g_ref   : (H*W, kk*lb)      bf16  fused upsample+pad+tap-shift operator
    #                                    restricted to this output-row block
    # w_ref   : (C_out, kk*C_in)  bf16  conv taps, (tap, cin)-major
    # b_ref   : (C_out, 1)        f32   conv bias
    # o_ref   : (C_out, lb)       f32   output rows for this block (lane-dense)
    # cols_ref: (kk*C_in, lb)     bf16  im2col stack scratch
    c_in = x_ref.shape[0]

    # One MXU matmul: for every conv tap t=(di,dj) produce the upsampled,
    # zero-padded plane shifted by (di,dj), restricted to this row block.
    up = jnp.dot(x_ref[...], g_ref[...],
                 preferred_element_type=jnp.float32)            # (C_in, kk*lb)
    up = up.astype(jnp.bfloat16)

    # Restack to im2col layout (kk*C_in, lb). Every slice starts at a multiple
    # of 128 lanes (lb % 128 == 0): cheap sublane copies, no XLU lane shifts.
    for t in range(kk):                                         # static, kk small
        cols_ref[t * c_in:(t + 1) * c_in, :] = up[:, t * lb:(t + 1) * lb]

    # Single fused conv matmul over all taps and input channels (K = kk*C_in).
    acc = jnp.dot(w_ref[...], cols_ref[...],
                  preferred_element_type=jnp.float32)           # (C_out, lb)
    o_ref[...] = (acc + b_ref[...]).astype(o_ref.dtype)


def upsample_conv(x, weight, bias, *, upsample_factor: int, kernel_size: int,
                  row_block: int | None = None):
    """Pallas equivalent of UpSampleConv.forward: bicubic upsample -> conv2d."""
    n, c_in, h, w = x.shape
    c_out = weight.shape[0]
    r = int(upsample_factor)
    k = int(kernel_size)
    p = k // 2
    kk = k * k

    ho, wo = h * r, w * r                    # upsampled size
    hp, wp = ho + 2 * p, wo + 2 * p          # with conv zero-padding ring
    out_h = hp - k + 1                       # conv output size (== ho for odd k)
    out_w = wp - k + 1

    if row_block is None:
        # >= 2 row blocks when possible (>= 2 grid steps per v7x core) while
        # keeping each block's flat lane length a multiple of 128.
        row_block = out_h
        for cand in range(out_h // 2, 0, -1):
            if out_h % cand == 0 and (cand * out_w) % 128 == 0:
                row_block = cand
                break
    assert out_h % row_block == 0
    n_rb = out_h // row_block
    lb = row_block * out_w                   # flat output length per block

    # ---- host-side constants (fused linear operator, bf16) -------------------
    wh = _bicubic_matrix(h, r)                                   # (ho, h)
    ww = _bicubic_matrix(w, r)                                   # (wo, w)
    wh_pad = np.zeros((hp, h), np.float32); wh_pad[p:p + ho] = wh
    ww_pad = np.zeros((wp, w), np.float32); ww_pad[p:p + wo] = ww
    # Per-tap shifted 1-D operators (zero-padding + tap shift baked in).
    a_op = np.stack([wh_pad[di:di + out_h] for di in range(k)])  # (k, out_h, h)
    b_op = np.stack([ww_pad[dj:dj + out_w] for dj in range(k)])  # (k, out_w, w)
    # g[(i,j), (di,dj), a, b] = wh_pad[a+di, i] * ww_pad[b+dj, j]
    g = np.einsum('uai,vbj->ijuvab', a_op, b_op).astype(np.float32)
    g = g.reshape(h * w, kk, n_rb, row_block, out_w)
    g = np.transpose(g, (2, 0, 1, 3, 4)).reshape(n_rb, h * w, kk * lb)
    g = jnp.asarray(g, dtype=jnp.bfloat16)

    x_flat = x.reshape(n, c_in, h * w).astype(jnp.bfloat16)      # free reshape
    # conv taps (tap, cin)-major to match the im2col stack order.
    w_taps = jnp.transpose(weight, (0, 2, 3, 1)).reshape(c_out, kk * c_in)
    w_taps = w_taps.astype(jnp.bfloat16)
    b_col = bias.reshape(c_out, 1).astype(jnp.float32)

    kernel = partial(_upsample_conv_kernel, kk=kk, lb=lb)

    flops = (2 * n * c_in * (h * w) * kk * out_h * out_w
             + 2 * n * c_out * kk * c_in * out_h * out_w)
    bytes_accessed = (2 * n * n_rb * c_in * h * w            # bf16 x (per block)
                      + 2 * n_rb * h * w * kk * lb           # bf16 operator
                      + 2 * c_out * kk * c_in + 4 * c_out
                      + 4 * n * c_out * out_h * out_w)       # f32 output

    out4 = pl.pallas_call(
        kernel,
        out_shape=jax.ShapeDtypeStruct((n_rb, n, c_out, lb), jnp.float32),
        grid=(n_rb, n),
        in_specs=[
            pl.BlockSpec((None, c_in, h * w), lambda j, i: (i, 0, 0)),
            pl.BlockSpec((None, h * w, kk * lb), lambda j, i: (j, 0, 0)),
            pl.BlockSpec((c_out, kk * c_in), lambda j, i: (0, 0),
                         pipeline_mode=pl.Buffered(1)),
            pl.BlockSpec((c_out, 1), lambda j, i: (0, 0),
                         pipeline_mode=pl.Buffered(1)),
        ],
        out_specs=pl.BlockSpec((None, None, c_out, lb),
                               lambda j, i: (j, i, 0, 0)),
        scratch_shapes=[pltpu.VMEM((kk * c_in, lb), jnp.bfloat16)],
        compiler_params=pltpu.CompilerParams(
            dimension_semantics=("parallel", "parallel"),
            # <= ~56 MiB keeps v7x (64 MiB/core) happy; v5e/v6e have headroom.
            vmem_limit_bytes=48 * 1024 * 1024,
        ),
        cost_estimate=pl.CostEstimate(
            flops=flops, transcendentals=0, bytes_accessed=bytes_accessed),
    )(x_flat, g, w_taps, b_col)

    # (n_rb, N, C_out, lb) -> (N, C_out, out_h, out_w): free row-major regroup
    # after a tiny wrapper transpose (layout plumbing only, no width padding).
    out = out4.transpose(1, 2, 0, 3).reshape(n, c_out, out_h, out_w)
    return out.astype(x.dtype)


def _ref_upsample_conv(x, weight, bias, upsample_factor, kernel_size):
    """Pure-JAX f32 reference: separable bicubic upsample + XLA conv."""
    n, c, h, w = x.shape
    r, k = int(upsample_factor), int(kernel_size)
    wh = jnp.asarray(_bicubic_matrix(h, r))
    ww = jnp.asarray(_bicubic_matrix(w, r))
    up = jnp.einsum('oh,nchw->ncow', wh, x, precision=lax.Precision.HIGHEST)
    up = jnp.einsum('pw,ncow->ncop', ww, up, precision=lax.Precision.HIGHEST)
    out = lax.conv_general_dilated(
        up, weight, window_strides=(1, 1),
        padding=[(k // 2, k // 2), (k // 2, k // 2)],
        dimension_numbers=('NCHW', 'OIHW', 'NCHW'),
        precision=lax.Precision.HIGHEST)
    return out + bias.reshape(1, -1, 1, 1)


if __name__ == "__main__":
    key = jax.random.PRNGKey(0)
    kx, kw, kb = jax.random.split(key, 3)

    N, C_IN, C_OUT, H, W = 2, 4, 4, 16, 16
    K, R = 3, 2

    x = jax.random.normal(kx, (N, C_IN, H, W), dtype=jnp.float32)
    weight = (jax.random.normal(kw, (C_OUT, C_IN, K, K), dtype=jnp.float32)
              / np.sqrt(C_IN * K * K))
    bias = 0.1 * jax.random.normal(kb, (C_OUT,), dtype=jnp.float32)

    out = upsample_conv(x, weight, bias, upsample_factor=R, kernel_size=K)
    out = jax.block_until_ready(out)

    ref = _ref_upsample_conv(x, weight, bias, R, K)
    assert out.shape == (N, C_OUT, H * R, W * R), out.shape
    max_err = float(jnp.max(jnp.abs(out - ref)))
    # bf16 operands with f32 accumulation: allow ~bf16-level error vs f32 ref.
    assert jnp.allclose(out, ref, atol=5e-2, rtol=5e-2), max_err

    print("KERNEL_OK")
</pallas_src>

<mosaic_0001>
module attributes {stable_mosaic.version = 11 : i64} {
  func.func @_upsample_conv_kernel(%arg0: i32, %arg1: i32, %arg2: memref<1x4x256xbf16, #tpu.memory_space<vmem>>, %arg3: memref<1x256x4608xbf16, #tpu.memory_space<vmem>>, %arg4: memref<4x36xbf16, #tpu.memory_space<vmem>>, %arg5: memref<4x1xf32, #tpu.memory_space<vmem>>, %arg6: memref<1x1x4x512xf32, #tpu.memory_space<vmem>>, %arg7: memref<36x512xbf16, #tpu.memory_space<vmem>>) attributes {dimension_semantics = [#tpu.dimension_semantics<parallel>, #tpu.dimension_semantics<parallel>], iteration_bounds = array<i64: 2, 2>, scalar_prefetch = 0 : i64, scratch_operands = 1 : i64, tpu.core_type = #tpu.core_type<tc>, window_params = [{transform_indices = @transform_0, window_bounds = array<i64: 1, 4, 256>}, {transform_indices = @transform_1, window_bounds = array<i64: 1, 256, 4608>}, {pipeline_mode = #tpu.pipeline_mode<synchronous>, transform_indices = @transform_2, window_bounds = array<i64: 4, 36>}, {pipeline_mode = #tpu.pipeline_mode<synchronous>, transform_indices = @transform_3, window_bounds = array<i64: 4, 1>}, {transform_indices = @transform_4, window_bounds = array<i64: 1, 1, 4, 512>}]} {
    %c0 = arith.constant 0 : index
    %c0_0 = arith.constant 0 : index
    %c0_1 = arith.constant 0 : index
    %0 = vector.load %arg2[%c0, %c0_0, %c0_1] : memref<1x4x256xbf16, #tpu.memory_space<vmem>>, vector<1x4x256xbf16>
    %1 = vector.shape_cast %0 : vector<1x4x256xbf16> to vector<4x256xbf16>
    %c0_2 = arith.constant 0 : index
    %c0_3 = arith.constant 0 : index
    %c0_4 = arith.constant 0 : index
    %2 = vector.load %arg3[%c0_2, %c0_3, %c0_4] : memref<1x256x4608xbf16, #tpu.memory_space<vmem>>, vector<1x256x4608xbf16>
    %3 = vector.shape_cast %2 : vector<1x256x4608xbf16> to vector<256x4608xbf16>
    %cst = arith.constant dense<0.000000e+00> : vector<4x4608xf32>
    %4 = tpu.matmul %1, %3, %cst {dimension_numbers = #tpu.dot_dimension_numbers<[1], [0], [0], [1], [0, 0, 1, 1], [], []>} : vector<4x256xbf16>, vector<256x4608xbf16>, vector<4x4608xf32> -> vector<4x4608xf32>
    %5 = arith.truncf %4 : vector<4x4608xf32> to vector<4x4608xbf16>
    %6 = vector.extract_strided_slice %5 {offsets = [0, 0], sizes = [4, 512], strides = [1, 1]} : vector<4x4608xbf16> to vector<4x512xbf16>
    %c0_5 = arith.constant 0 : index
    %c0_6 = arith.constant 0 : index
    %7 = vector.load %arg7[%c0_5, %c0_6] : memref<36x512xbf16, #tpu.memory_space<vmem>>, vector<4x512xbf16>
    tpu.vector_store %arg7[%c0_5, %c0_6], %6 {strides = array<i32>} : memref<36x512xbf16, #tpu.memory_space<vmem>>, vector<4x512xbf16>,
    %8 = vector.extract_strided_slice %5 {offsets = [0, 512], sizes = [4, 512], strides = [1, 1]} : vector<4x4608xbf16> to vector<4x512xbf16>
    %c4 = arith.constant 4 : index
    %c0_7 = arith.constant 0 : index
    %9 = vector.load %arg7[%c4, %c0_7] : memref<36x512xbf16, #tpu.memory_space<vmem>>, vector<4x512xbf16>
    tpu.vector_store %arg7[%c4, %c0_7], %8 {strides = array<i32>} : memref<36x512xbf16, #tpu.memory_space<vmem>>, vector<4x512xbf16>,
    %10 = vector.extract_strided_slice %5 {offsets = [0, 1024], sizes = [4, 512], strides = [1, 1]} : vector<4x4608xbf16> to vector<4x512xbf16>
    %c8 = arith.constant 8 : index
    %c0_8 = arith.constant 0 : index
    %11 = vector.load %arg7[%c8, %c0_8] : memref<36x512xbf16, #tpu.memory_space<vmem>>, vector<4x512xbf16>
    tpu.vector_store %arg7[%c8, %c0_8], %10 {strides = array<i32>} : memref<36x512xbf16, #tpu.memory_space<vmem>>, vector<4x512xbf16>,
    %12 = vector.extract_strided_slice %5 {offsets = [0, 1536], sizes = [4, 512], strides = [1, 1]} : vector<4x4608xbf16> to vector<4x512xbf16>
    %c12 = arith.constant 12 : index
    %c0_9 = arith.constant 0 : index
    %13 = vector.load %arg7[%c12, %c0_9] : memref<36x512xbf16, #tpu.memory_space<vmem>>, vector<4x512xbf16>
    tpu.vector_store %arg7[%c12, %c0_9], %12 {strides = array<i32>} : memref<36x512xbf16, #tpu.memory_space<vmem>>, vector<4x512xbf16>,
    %14 = vector.extract_strided_slice %5 {offsets = [0, 2048], sizes = [4, 512], strides = [1, 1]} : vector<4x4608xbf16> to vector<4x512xbf16>
    %c16 = arith.constant 16 : index
    %c0_10 = arith.constant 0 : index
    %15 = vector.load %arg7[%c16, %c0_10] : memref<36x512xbf16, #tpu.memory_space<vmem>>, vector<4x512xbf16>
    tpu.vector_store %arg7[%c16, %c0_10], %14 {strides = array<i32>} : memref<36x512xbf16, #tpu.memory_space<vmem>>, vector<4x512xbf16>,
    %16 = vector.extract_strided_slice %5 {offsets = [0, 2560], sizes = [4, 512], strides = [1, 1]} : vector<4x4608xbf16> to vector<4x512xbf16>
    %c20 = arith.constant 20 : index
    %c0_11 = arith.constant 0 : index
    %17 = vector.load %arg7[%c20, %c0_11] : memref<36x512xbf16, #tpu.memory_space<vmem>>, vector<4x512xbf16>
    tpu.vector_store %arg7[%c20, %c0_11], %16 {strides = array<i32>} : memref<36x512xbf16, #tpu.memory_space<vmem>>, vector<4x512xbf16>,
    %18 = vector.extract_strided_slice %5 {offsets = [0, 3072], sizes = [4, 512], strides = [1, 1]} : vector<4x4608xbf16> to vector<4x512xbf16>
    %c24 = arith.constant 24 : index
    %c0_12 = arith.constant 0 : index
    %19 = vector.load %arg7[%c24, %c0_12] : memref<36x512xbf16, #tpu.memory_space<vmem>>, vector<4x512xbf16>
    tpu.vector_store %arg7[%c24, %c0_12], %18 {strides = array<i32>} : memref<36x512xbf16, #tpu.memory_space<vmem>>, vector<4x512xbf16>,
    %20 = vector.extract_strided_slice %5 {offsets = [0, 3584], sizes = [4, 512], strides = [1, 1]} : vector<4x4608xbf16> to vector<4x512xbf16>
    %c28 = arith.constant 28 : index
    %c0_13 = arith.constant 0 : index
    %21 = vector.load %arg7[%c28, %c0_13] : memref<36x512xbf16, #tpu.memory_space<vmem>>, vector<4x512xbf16>
    tpu.vector_store %arg7[%c28, %c0_13], %20 {strides = array<i32>} : memref<36x512xbf16, #tpu.memory_space<vmem>>, vector<4x512xbf16>,
    %22 = vector.extract_strided_slice %5 {offsets = [0, 4096], sizes = [4, 512], strides = [1, 1]} : vector<4x4608xbf16> to vector<4x512xbf16>
    %c32 = arith.constant 32 : index
    %c0_14 = arith.constant 0 : index
    %23 = vector.load %arg7[%c32, %c0_14] : memref<36x512xbf16, #tpu.memory_space<vmem>>, vector<4x512xbf16>
    tpu.vector_store %arg7[%c32, %c0_14], %22 {strides = array<i32>} : memref<36x512xbf16, #tpu.memory_space<vmem>>, vector<4x512xbf16>,
    %c0_15 = arith.constant 0 : index
    %c0_16 = arith.constant 0 : index
    %24 = vector.load %arg4[%c0_15, %c0_16] : memref<4x36xbf16, #tpu.memory_space<vmem>>, vector<4x36xbf16>
    %c0_17 = arith.constant 0 : index
    %c0_18 = arith.constant 0 : index
    %25 = vector.load %arg7[%c0_17, %c0_18] : memref<36x512xbf16, #tpu.memory_space<vmem>>, vector<36x512xbf16>
    %cst_19 = arith.constant dense<0.000000e+00> : vector<4x512xf32>
    %26 = tpu.matmul %24, %25, %cst_19 {dimension_numbers = #tpu.dot_dimension_numbers<[1], [0], [0], [1], [0, 0, 1, 1], [], []>} : vector<4x36xbf16>, vector<36x512xbf16>, vector<4x512xf32> -> vector<4x512xf32>
    %c0_20 = arith.constant 0 : index
    %c0_21 = arith.constant 0 : index
    %27 = vector.load %arg5[%c0_20, %c0_21] : memref<4x1xf32, #tpu.memory_space<vmem>>, vector<4x1xf32>
    %28 = vector.broadcast %27 : vector<4x1xf32> to vector<4x512xf32>
    %29 = arith.addf %26, %28 : vector<4x512xf32>
    %c0_22 = arith.constant 0 : index
    %c0_23 = arith.constant 0 : index
    %c0_24 = arith.constant 0 : index
    %c0_25 = arith.constant 0 : index
    %30 = vector.load %arg6[%c0_22, %c0_23, %c0_24, %c0_25] : memref<1x1x4x512xf32, #tpu.memory_space<vmem>>, vector<1x1x4x512xf32>
    %31 = vector.shape_cast %30 : vector<1x1x4x512xf32> to vector<4x512xf32>
    %32 = vector.shape_cast %29 : vector<4x512xf32> to vector<1x1x4x512xf32>
    tpu.vector_store %arg6[%c0_22, %c0_23, %c0_24, %c0_25], %32 {strides = array<i32>} : memref<1x1x4x512xf32, #tpu.memory_space<vmem>>, vector<1x1x4x512xf32>,
    return
  }
  func.func @transform_0(%arg0: i32, %arg1: i32) -> (i32, i32, i32) {
    %c0_i32 = arith.constant 0 : i32
    %c0_i32_0 = arith.constant 0 : i32
    %c0_i32_1 = arith.constant 0 : i32
    return %arg1, %c0_i32, %c0_i32_0 : i32, i32, i32
  }
  func.func @transform_1(%arg0: i32, %arg1: i32) -> (i32, i32, i32) {
    %c0_i32 = arith.constant 0 : i32
    %c0_i32_0 = arith.constant 0 : i32
    %c0_i32_1 = arith.constant 0 : i32
    return %arg0, %c0_i32, %c0_i32_0 : i32, i32, i32
  }
  func.func @transform_2(%arg0: i32, %arg1: i32) -> (i32, i32) {
    %c0_i32 = arith.constant 0 : i32
    %c0_i32_0 = arith.constant 0 : i32
    %c0_i32_1 = arith.constant 0 : i32
    return %c0_i32, %c0_i32_0 : i32, i32
  }
  func.func @transform_3(%arg0: i32, %arg1: i32) -> (i32, i32) {
    %c0_i32 = arith.constant 0 : i32
    %c0_i32_0 = arith.constant 0 : i32
    %c0_i32_1 = arith.constant 0 : i32
    return %c0_i32, %c0_i32_0 : i32, i32
  }
  func.func @transform_4(%arg0: i32, %arg1: i32) -> (i32, i32, i32, i32) {
    %c0_i32 = arith.constant 0 : i32
    %c0_i32_0 = arith.constant 0 : i32
    %c0_i32_1 = arith.constant 0 : i32
    return %arg0, %arg1, %c0_i32, %c0_i32_0 : i32, i32, i32, i32
  }
}

</mosaic_0001>

<llo_original>
// kernel: tpu_custom_call.1
$region0: #{tpu_custom_call.1}
  #allocation0 [shape = 'u32[]', space=smem, size = 0x4, offset = 0x4, fixed_abs, tag = 'smem constant byte address 0x4 - core index']
  #allocation1 [shape = 'u32[144,128]{1,0:T(1,128)}', space=vmem, size = 0x12000, scoped, tag = 'internal scratch']
  #allocation2 [shape = 'bf16[36,512]{1,0:T(8,128)(2,1)}', space=vmem, size = 0xa000, scoped, tag = 'scratch operand']
  %s0 = inlined_call_operand.hbm [shape: bf16[2,4,256], index: 0, kind: input, shape index: {}]
  %s1 = inlined_call_operand.hbm [shape: bf16[2,256,4608], index: 1, kind: input, shape index: {}]
  %s2 = inlined_call_operand.hbm [shape: bf16[4,36], index: 2, kind: input, shape index: {}]
  %s3 = inlined_call_operand.vmem [shape: f32[4,1], index: 3, kind: input, shape index: {}]
  %s4 = inlined_call_operand.hbm [shape: f32[2,2,4,512], index: 4, kind: output, shape index: {}]
  %s5 = sld [smem:[#allocation0]]
  $region61: #{tpu_custom_call.1} parent=0
    _
  %s7 = ssub.s32 1, %s5
  %s8 = scalar_select 0, %s7, %s5
  $region1: #{tpu_custom_call.1} parent=0
    #allocation3 [shape = 'u8[4096]{0}', space=vmem, size = 0x1000, scoped, tag = 'input window, operand 0']
    #allocation4 [shape = 's32[2]{0}', space=sflag, size = 0x8, scoped, tag = 'scoped memory for tpu_custom_call.1']
    #allocation5 [shape = 's32[2]{0}', space=sflag, size = 0x8, scoped, tag = 'scoped memory for tpu_custom_call.1']
    #allocation6 [shape = 'u8[4718592]{0}', space=vmem, size = 0x480000, scoped, tag = 'input window, operand 1']
    #allocation7 [shape = 's32[2]{0}', space=sflag, size = 0x8, scoped, tag = 'scoped memory for tpu_custom_call.1']
    #allocation8 [shape = 'u8[1024]{0}', space=vmem, size = 0x400, scoped, tag = 'input window, operand 2, single buffered']
    #allocation9 [shape = 'u8[16384]{0}', space=vmem, size = 0x4000, scoped, tag = 'output window, operand 0']
    %9 = vsyncpa [#allocation4], 0
    %s10 = scalar_lea.sflag [#allocation4], 1
    %11 = vsyncpa %s10, 0
    %12 = vsyncpa [#allocation7], 0
    %s13 = scalar_lea.sflag [#allocation7], 1
    %14 = vsyncpa %s13, 0
    %15 = vsyncpa [#allocation5], 0
    %s16 = scalar_lea.sflag [#allocation5], 1
    %17 = vsyncpa %s16, 0
    loop: start=0, step=1, limit=6
    $region2: #{tpu_custom_call.1} parent=1 // loop_pre_header
      _
    $region3: #{tpu_custom_call.1} parent=1 // loop_header
      %s19 = sphi 0, %s23
      %p20 = scmp.ge.s32.totalorder %s19, 6
      %s26 = sphi 0, %s38
      %s27 = sphi 0, %s34
      %s28 = sphi 0, %s26
      %s29 = sphi 0, %s27
      %s30 = sphi 0, %s28
      %s31 = sphi 0, %s29
      %s41 = sphi 0, %s43
      %s44 = sphi 0, %s41
      %s45 = sphi 0, %s44
      %s61 = sphi 0, %s45
      %s67 = sphi 0, %s69
      %s70 = sphi 0, %s67
      %s71 = sphi 0, %s70
      %s87 = sphi 0, %s71
      %s91 = sphi 0, %s91
      %s93 = sphi 0, %s91
      %s94 = sphi 0, %s93
      %s108 = sphi 0, %s94
      %s112 = sphi 0, %s112
      %s114 = sphi 0, %s112
      %s115 = sphi 0, %s114
      %s129 = sphi 0, %s115
      %s137 = sphi 0, %s139
      %s140 = sphi 0, %s137
      %s141 = sphi 0, %s140
      %s157 = sphi 0, %s141
    $region4: #{tpu_custom_call.1} parent=1 // loop_header_branch
      %22 = sbr.rel (%p20) target = $region8
    $region5: #{tpu_custom_call.1} parent=1 // loop_body
      %s24 = ssub.s32 %s19, 1
      %s25 = ssub.s32 %s19, 2
      %s32 = sadd.s32 1, %s27
      %p33 = scmp.ge.s32.totalorder %s32, 2
      %s34 = scalar_select %p33, 0, %s32
      %s35 = sadd.s32 1, %s26
      %s36 = scalar_select %p33, %s35, %s26
      %p37 = scmp.ge.s32.totalorder %s36, 2
      %s38 = scalar_select %p37, 0, %s36
      %s39 = ssub.s32 %s27, %s34
      %p40 = scmp.eq.s32.totalorder %s39, 0
      %s42 = sadd.s32 %s41, 1
      %s43 = scalar_select %p40, %s41, %s42
      %p46 = pneg %p40
      %p47 = scmp.eq.s32.totalorder %s19, 3
      %p48 = por %p46, %p47
      %p49 = scmp.ne.s32.totalorder %s41, %s44
      %p50 = scmp.eq.s32.totalorder %s19, 0
      %p51 = por %p49, %p50
      %p52 = scmp.ne.s32.totalorder %s41, %s44
      %p53 = scmp.eq.s32.totalorder %s24, 3
      %p54 = por %p52, %p53
      %p55 = scmp.ne.s32.totalorder %s44, %s45
      %p56 = scmp.eq.s32.totalorder %s24, 0
      %p57 = por %p55, %p56
      %p58 = scmp.ne.s32.totalorder %s44, %s45
      %p59 = scmp.eq.s32.totalorder %s25, 3
      %p60 = por %p58, %p59
      %p62 = scmp.ne.s32.totalorder %s45, %s61
      %p63 = scmp.eq.s32.totalorder %s25, 0
      %p64 = por %p62, %p63
      %s65 = ssub.s32 %s26, %s38
      %p66 = scmp.eq.s32.totalorder %s65, 0
      %s68 = sadd.s32 %s67, 1
      %s69 = scalar_select %p66, %s67, %s68
      %p72 = pneg %p66
      %p73 = scmp.eq.s32.totalorder %s19, 3
      %p74 = por %p72, %p73
      %p75 = scmp.ne.s32.totalorder %s67, %s70
      %p76 = scmp.eq.s32.totalorder %s19, 0
      %p77 = por %p75, %p76
      %p78 = scmp.ne.s32.totalorder %s67, %s70
      %p79 = scmp.eq.s32.totalorder %s24, 3
      %p80 = por %p78, %p79
      %p81 = scmp.ne.s32.totalorder %s70, %s71
      %p82 = scmp.eq.s32.totalorder %s24, 0
      %p83 = por %p81, %p82
      %p84 = scmp.ne.s32.totalorder %s70, %s71
      %p85 = scmp.eq.s32.totalorder %s25, 3
      %p86 = por %p84, %p85
      %p88 = scmp.ne.s32.totalorder %s71, %s87
      %p89 = scmp.eq.s32.totalorder %s25, 0
      %p90 = por %p88, %p89
      %s92 = sadd.s32 %s91, 1
      %p95 = scmp.eq.s32.totalorder %s19, 3
      %p96 = scmp.ne.s32.totalorder %s91, %s93
      %p97 = scmp.eq.s32.totalorder %s19, 0
      %p98 = por %p96, %p97
      %p99 = scmp.ne.s32.totalorder %s91, %s93
      %p100 = scmp.eq.s32.totalorder %s24, 3
      %p101 = por %p99, %p100
      %p102 = scmp.ne.s32.totalorder %s93, %s94
      %p103 = scmp.eq.s32.totalorder %s24, 0
      %p104 = por %p102, %p103
      %p105 = scmp.ne.s32.totalorder %s93, %s94
      %p106 = scmp.eq.s32.totalorder %s25, 3
      %p107 = por %p105, %p106
      %p109 = scmp.ne.s32.totalorder %s94, %s108
      %p110 = scmp.eq.s32.totalorder %s25, 0
      %p111 = por %p109, %p110
      %s113 = sadd.s32 %s112, 1
      %p116 = scmp.eq.s32.totalorder %s19, 3
      %p117 = scmp.ne.s32.totalorder %s112, %s114
      %p118 = scmp.eq.s32.totalorder %s19, 0
      %p119 = por %p117, %p118
      %p120 = scmp.ne.s32.totalorder %s112, %s114
      %p121 = scmp.eq.s32.totalorder %s24, 3
      %p122 = por %p120, %p121
      %p123 = scmp.ne.s32.totalorder %s114, %s115
      %p124 = scmp.eq.s32.totalorder %s24, 0
      %p125 = por %p123, %p124
      %p126 = scmp.ne.s32.totalorder %s114, %s115
      %p127 = scmp.eq.s32.totalorder %s25, 3
      %p128 = por %p126, %p127
      %p130 = scmp.ne.s32.totalorder %s115, %s129
      %p131 = scmp.eq.s32.totalorder %s25, 0
      %p132 = por %p130, %p131
      %s133 = ssub.s32 %s26, %s38
      %s134 = ssub.s32 %s27, %s34
      %s135 = sor.u32 %s133, %s134
      %p136 = scmp.eq.s32.totalorder %s135, 0
      %s138 = sadd.s32 %s137, 1
      %s139 = scalar_select %p136, %s137, %s138
      %p142 = pneg %p136
      %p143 = scmp.eq.s32.totalorder %s19, 3
      %p144 = por %p142, %p143
      %p145 = scmp.ne.s32.totalorder %s137, %s140
      %p146 = scmp.eq.s32.totalorder %s19, 0
      %p147 = por %p145, %p146
      %p148 = scmp.ne.s32.totalorder %s137, %s140
      %p149 = scmp.eq.s32.totalorder %s24, 3
      %p150 = por %p148, %p149
      %p151 = scmp.ne.s32.totalorder %s140, %s141
      %p152 = scmp.eq.s32.totalorder %s24, 0
      %p153 = por %p151, %p152
      %p154 = scmp.ne.s32.totalorder %s140, %s141
      %p155 = scmp.eq.s32.totalorder %s25, 3
      %p156 = por %p154, %p155
      %p158 = scmp.ne.s32.totalorder %s141, %s157
      %p159 = scmp.eq.s32.totalorder %s25, 0
      %p160 = por %p158, %p159
      %p161 = scmp.le.s32.totalorder 1, %s19
      %p162 = scmp.lt.s32.totalorder %s19, 5
      %p163 = pnand %p161, %p162
      %p164 = pneg %p163
      // Predicated region
      $region9: #{tpu_custom_call.1} parent=5 // pred_check
        _
      $region10: #{tpu_custom_call.1} parent=5 // pred_check_branch
        %166 = sbr.rel (%p163) target = $region12
      $region11: #{tpu_custom_call.1} parent=5 // pred_region
        %s167 = ssub.s32 %s19, 1
        // Predicated region
        $region13: #{tpu_custom_call.1} parent=11 // pred_check
          %p168 = pneg %p104
        $region14: #{tpu_custom_call.1} parent=11 // pred_check_branch
          %170 = sbr.rel (%p168) target = $region16
        $region15: #{tpu_custom_call.1} parent=11 // pred_region
          %s172 = ssub.s32 32, 32
          %173 = vsyncadd [#allocation7], %s172
          %s175 = sshll.u32 [#allocation8], 4
          %s176 = int_to_ptr.vmem [resolvable:$true] %s175
          %178 = dma.hbm_to_vmem [thread:$0]  %s2, 32, %s176, [#allocation7]
        $region16: #{tpu_custom_call.1} parent=11 // pred_fallthru
          _
        // Predicated region
        $region17: #{tpu_custom_call.1} parent=11 // pred_check
          %p179 = pneg %p125
        $region18: #{tpu_custom_call.1} parent=11 // pred_check_branch
          %181 = sbr.rel (%p179) target = $region20
        $region19: #{tpu_custom_call.1} parent=11 // pred_region
          _
        $region20: #{tpu_custom_call.1} parent=11 // pred_fallthru
          _
      $region12: #{tpu_custom_call.1} parent=5 // pred_fallthru
        _
      %p182 = scmp.lt.s32.totalorder %s19, 4
      // Predicated region
      $region21: #{tpu_custom_call.1} parent=5 // pred_check
        %p183 = pneg %p182
      $region22: #{tpu_custom_call.1} parent=5 // pred_check_branch
        %185 = sbr.rel (%p183) target = $region24
      $region23: #{tpu_custom_call.1} parent=5 // pred_region
        // Predicated region
        $region25: #{tpu_custom_call.1} parent=23 // pred_check
          %p186 = pneg %p51
        $region26: #{tpu_custom_call.1} parent=23 // pred_check_branch
          %188 = sbr.rel (%p186) target = $region28
        $region27: #{tpu_custom_call.1} parent=23 // pred_region
          %s189 = sand.u32 %s41, 1
          %s190 = scalar_lea.sflag [#allocation4], %s189
          %s191 = sand.u32 %s41, 1
          %s192 = smul.addr %s191, 4
          %s193 = scalar_lea.vmem [#allocation3], %s192
          %s195 = ssub.s32 64, 64
          %196 = vsyncadd %s190, %s195
          %s197 = smul.addr %s27, 2
          %s198 = smul.addr %s197, 32
          %s199 = scalar_lea.hbm %s0, %s198
          %s201 = sshll.u32 %s193, 4
          %s202 = int_to_ptr.vmem [resolvable:$true] %s201
          %204 = dma.hbm_to_vmem [thread:$0]  %s199, 64, %s202, %s190
        $region28: #{tpu_custom_call.1} parent=23 // pred_fallthru
          _
        // Predicated region
        $region29: #{tpu_custom_call.1} parent=23 // pred_check
          %p205 = pneg %p77
        $region30: #{tpu_custom_call.1} parent=23 // pred_check_branch
          %207 = sbr.rel (%p205) target = $region32
        $region31: #{tpu_custom_call.1} parent=23 // pred_region
          %s208 = sand.u32 %s19, 1
          %s209 = scalar_lea.sflag [#allocation7], %s208
          %s210 = sand.u32 %s67, 1
          %s211 = smul.addr %s210, 4608
          %s212 = scalar_lea.vmem [#allocation6], %s211
          %s214 = ssub.s32 73728, 73728
          %215 = vsyncadd %s209, %s214
          %s216 = smul.addr %s26, 1152
          %s217 = smul.addr %s216, 64
          %s218 = scalar_lea.hbm %s1, %s217
          %s219 = sshll.u32 %s212, 4
          %s220 = int_to_ptr.vmem [resolvable:$true] %s219
          %225 = dma.hbm_to_vmem [thread:$0]  %s218, 73728, %s220, %s209, 2304, 2304, 144
        $region32: #{tpu_custom_call.1} parent=23 // pred_fallthru
          _
      $region24: #{tpu_custom_call.1} parent=5 // pred_fallthru
        _
      %p226 = scmp.le.s32.totalorder 1, %s19
      %p227 = scmp.lt.s32.totalorder %s19, 5
      %p228 = pnand %p226, %p227
      %p229 = pneg %p228
      // Predicated region
      $region33: #{tpu_custom_call.1} parent=5 // pred_check
        _
      $region34: #{tpu_custom_call.1} parent=5 // pred_check_branch
        %231 = sbr.rel (%p228) target = $region36
      $region35: #{tpu_custom_call.1} parent=5 // pred_region
        %s232 = ssub.s32 %s19, 1
        %s233 = sand.u32 %s44, 1
        %s234 = scalar_lea.sflag [#allocation4], %s233
        %s235 = sand.u32 %s44, 1
        %s236 = smul.addr %s235, 4
        %s237 = scalar_lea.vmem [#allocation3], %s236
        // Predicated region
        $region37: #{tpu_custom_call.1} parent=35 // pred_check
          %p238 = pneg %p57
        $region38: #{tpu_custom_call.1} parent=35 // pred_check_branch
          %240 = sbr.rel (%p238) target = $region40
        $region39: #{tpu_custom_call.1} parent=35 // pred_region
          %241 = dma.done %s234, 64
        $region40: #{tpu_custom_call.1} parent=35 // pred_fallthru
          _
        %s242 = sand.u32 %s24, 1
        %s243 = scalar_lea.sflag [#allocation7], %s242
        %s244 = sand.u32 %s70, 1
        %s245 = smul.addr %s244, 4608
        %s246 = scalar_lea.vmem [#allocation6], %s245
        // Predicated region
        $region41: #{tpu_custom_call.1} parent=35 // pred_check
          %p247 = pneg %p83
        $region42: #{tpu_custom_call.1} parent=35 // pred_check_branch
          %249 = sbr.rel (%p247) target = $region44
        $region43: #{tpu_custom_call.1} parent=35 // pred_region
          %250 = dma.done %s243, 73728
        $region44: #{tpu_custom_call.1} parent=35 // pred_fallthru
          _
        // Predicated region
        $region45: #{tpu_custom_call.1} parent=35 // pred_check
          %p251 = pneg %p104
        $region46: #{tpu_custom_call.1} parent=35 // pred_check_branch
          %253 = sbr.rel (%p251) target = $region48
        $region47: #{tpu_custom_call.1} parent=35 // pred_region
          %254 = dma.done [#allocation7], 32
        $region48: #{tpu_custom_call.1} parent=35 // pred_fallthru
          _
        %s255 = sand.u32 %s44, 1
        %s256 = scalar_lea.sflag [#allocation4], %s255
        %s257 = sand.u32 %s44, 1
        %s258 = smul.addr %s257, 4
        %s259 = scalar_lea.vmem [#allocation3], %s258
        %p260 = pneg %p57
        %p261 = pneg %p54
        %s262 = sand.u32 %s24, 1
        %s263 = scalar_lea.sflag [#allocation7], %s262
        %s264 = sand.u32 %s70, 1
        %s265 = smul.addr %s264, 4608
        %s266 = scalar_lea.vmem [#allocation6], %s265
        %p267 = pneg %p83
        %p268 = pneg %p80
        %p269 = pneg %p104
        %p270 = pneg %p101
        %p271 = pneg %p125
        %p272 = pneg %p122
        %p273 = pneg %p153
        %p274 = pneg %p150
        %s275 = sand.u32 %s140, 1
        %s276 = scalar_lea.sflag [#allocation5], %s275
        %s277 = sand.u32 %s140, 1
        %s278 = smul.addr %s277, 16
        %s279 = scalar_lea.vmem [#allocation9], %s278
        %v281 = vld [vmem:[%s237] sm:$0xf]
        %v282 = vld [vmem:[%s246] sm:$0xff]
        %v283 = vld [vmem:[%s246 + $0x8] sm:$0xff]
        %v284 = vld [vmem:[%s246 + $0x10] sm:$0xff]
        %v285 = vld [vmem:[%s246 + $0x18] sm:$0xff]
        %v286 = vld [vmem:[%s246 + $0x20] sm:$0xff]
        %v287 = vld [vmem:[%s246 + $0x28] sm:$0xff]
        %v288 = vld [vmem:[%s246 + $0x30] sm:$0xff]
        %v289 = vld [vmem:[%s246 + $0x38] sm:$0xff]
        %v290 = vld [vmem:[%s246 + $0x40] sm:$0xff]
        %v291 = vld [vmem:[%s246 + $0x48] sm:$0xff]
        %v292 = vld [vmem:[%s246 + $0x50] sm:$0xff]
        %v293 = vld [vmem:[%s246 + $0x58] sm:$0xff]
        %v294 = vld [vmem:[%s246 + $0x60] sm:$0xff]
        %v295 = vld [vmem:[%s246 + $0x68] sm:$0xff]
        %v296 = vld [vmem:[%s246 + $0x70] sm:$0xff]
        %v297 = vld [vmem:[%s246 + $0x78] sm:$0xff]
        %v298 = vld [vmem:[%s246 + $0x80] sm:$0xff]
        %v299 = vld [vmem:[%s246 + $0x88] sm:$0xff]
        %v300 = vld [vmem:[%s246 + $0x90] sm:$0xff]
        %v301 = vld [vmem:[%s246 + $0x98] sm:$0xff]
        %v302 = vld [vmem:[%s246 + $0xa0] sm:$0xff]
        %v303 = vld [vmem:[%s246 + $0xa8] sm:$0xff]
        %v304 = vld [vmem:[%s246 + $0xb0] sm:$0xff]
        %v305 = vld [vmem:[%s246 + $0xb8] sm:$0xff]
        %v306 = vld [vmem:[%s246 + $0xc0] sm:$0xff]
        %v307 = vld [vmem:[%s246 + $0xc8] sm:$0xff]
        %v308 = vld [vmem:[%s246 + $0xd0] sm:$0xff]
        %v309 = vld [vmem:[%s246 + $0xd8] sm:$0xff]
        %v310 = vld [vmem:[%s246 + $0xe0] sm:$0xff]
        %v311 = vld [vmem:[%s246 + $0xe8] sm:$0xff]
        %v312 = vld [vmem:[%s246 + $0xf0] sm:$0xff]
        %v313 = vld [vmem:[%s246 + $0xf8] sm:$0xff]
        %v314 = vld [vmem:[%s246 + $0x100] sm:$0xff]
        %v315 = vld [vmem:[%s246 + $0x108] sm:$0xff]
        %v316 = vld [vmem:[%s246 + $0x110] sm:$0xff]
        %v317 = vld [vmem:[%s246 + $0x118] sm:$0xff]
        %v318 = vld [vmem:[%s246 + $0x120] sm:$0xff]
        %v319 = vld [vmem:[%s246 + $0x128] sm:$0xff]
        %v320 = vld [vmem:[%s246 + $0x130] sm:$0xff]
        %v321 = vld [vmem:[%s246 + $0x138] sm:$0xff]
        %v322 = vld [vmem:[%s246 + $0x140] sm:$0xff]
        %v323 = vld [vmem:[%s246 + $0x148] sm:$0xff]
        %v324 = vld [vmem:[%s246 + $0x150] sm:$0xff]
        %v325 = vld [vmem:[%s246 + $0x158] sm:$0xff]
        %v326 = vld [vmem:[%s246 + $0x160] sm:$0xff]
        %v327 = vld [vmem:[%s246 + $0x168] sm:$0xff]
        %v328 = vld [vmem:[%s246 + $0x170] sm:$0xff]
        %v329 = vld [vmem:[%s246 + $0x178] sm:$0xff]
        %v330 = vld [vmem:[%s246 + $0x180] sm:$0xff]
        %v331 = vld [vmem:[%s246 + $0x188] sm:$0xff]
        %v332 = vld [vmem:[%s246 + $0x190] sm:$0xff]
        %v333 = vld [vmem:[%s246 + $0x198] sm:$0xff]
        %v334 = vld [vmem:[%s246 + $0x1a0] sm:$0xff]
        %v335 = vld [vmem:[%s246 + $0x1a8] sm:$0xff]
        %v336 = vld [vmem:[%s246 + $0x1b0] sm:$0xff]
        %v337 = vld [vmem:[%s246 + $0x1b8] sm:$0xff]
        %v338 = vld [vmem:[%s246 + $0x1c0] sm:$0xff]
        %v339 = vld [vmem:[%s246 + $0x1c8] sm:$0xff]
        %v340 = vld [vmem:[%s246 + $0x1d0] sm:$0xff]
        %v341 = vld [vmem:[%s246 + $0x1d8] sm:$0xff]
        %v342 = vld [vmem:[%s246 + $0x1e0] sm:$0xff]
        %v343 = vld [vmem:[%s246 + $0x1e8] sm:$0xff]
        %v344 = vld [vmem:[%s246 + $0x1f0] sm:$0xff]
        %v345 = vld [vmem:[%s246 + $0x1f8] sm:$0xff]
        %v346 = vld [vmem:[%s246 + $0x200] sm:$0xff]
        %v347 = vld [vmem:[%s246 + $0x208] sm:$0xff]
        %v348 = vld [vmem:[%s246 + $0x210] sm:$0xff]
        %v349 = vld [vmem:[%s246 + $0x218] sm:$0xff]
        %v350 = vld [vmem:[%s246 + $0x220] sm:$0xff]
        %v351 = vld [vmem:[%s246 + $0x228] sm:$0xff]
        %v352 = vld [vmem:[%s246 + $0x230] sm:$0xff]
        %v353 = vld [vmem:[%s246 + $0x238] sm:$0xff]
        %v354 = vld [vmem:[%s246 + $0x240] sm:$0xff]
        %v355 = vld [vmem:[%s246 + $0x248] sm:$0xff]
        %v356 = vld [vmem:[%s246 + $0x250] sm:$0xff]
        %v357 = vld [vmem:[%s246 + $0x258] sm:$0xff]
        %v358 = vld [vmem:[%s246 + $0x260] sm:$0xff]
        %v359 = vld [vmem:[%s246 + $0x268] sm:$0xff]
        %v360 = vld [vmem:[%s246 + $0x270] sm:$0xff]
        %v361 = vld [vmem:[%s246 + $0x278] sm:$0xff]
        %v362 = vld [vmem:[%s246 + $0x280] sm:$0xff]
        %v363 = vld [vmem:[%s246 + $0x288] sm:$0xff]
        %v364 = vld [vmem:[%s246 + $0x290] sm:$0xff]
        %v365 = vld [vmem:[%s246 + $0x298] sm:$0xff]
        %v366 = vld [vmem:[%s246 + $0x2a0] sm:$0xff]
        %v367 = vld [vmem:[%s246 + $0x2a8] sm:$0xff]
        %v368 = vld [vmem:[%s246 + $0x2b0] sm:$0xff]
        %v369 = vld [vmem:[%s246 + $0x2b8] sm:$0xff]
        %v370 = vld [vmem:[%s246 + $0x2c0] sm:$0xff]
        %v371 = vld [vmem:[%s246 + $0x2c8] sm:$0xff]
        %v372 = vld [vmem:[%s246 + $0x2d0] sm:$0xff]
        %v373 = vld [vmem:[%s246 + $0x2d8] sm:$0xff]
        %v374 = vld [vmem:[%s246 + $0x2e0] sm:$0xff]
        %v375 = vld [vmem:[%s246 + $0x2e8] sm:$0xff]
        %v376 = vld [vmem:[%s246 + $0x2f0] sm:$0xff]
        %v377 = vld [vmem:[%s246 + $0x2f8] sm:$0xff]
        %v378 = vld [vmem:[%s246 + $0x300] sm:$0xff]
        %v379 = vld [vmem:[%s246 + $0x308] sm:$0xff]
        %v380 = vld [vmem:[%s246 + $0x310] sm:$0xff]
        %v381 = vld [vmem:[%s246 + $0x318] sm:$0xff]
        %v382 = vld [vmem:[%s246 + $0x320] sm:$0xff]
        %v383 = vld [vmem:[%s246 + $0x328] sm:$0xff]
        %v384 = vld [vmem:[%s246 + $0x330] sm:$0xff]
        %v385 = vld [vmem:[%s246 + $0x338] sm:$0xff]
        %v386 = vld [vmem:[%s246 + $0x340] sm:$0xff]
        %v387 = vld [vmem:[%s246 + $0x348] sm:$0xff]
        %v388 = vld [vmem:[%s246 + $0x350] sm:$0xff]
        %v389 = vld [vmem:[%s246 + $0x358] sm:$0xff]
        %v390 = vld [vmem:[%s246 + $0x360] sm:$0xff]
        %v391 = vld [vmem:[%s246 + $0x368] sm:$0xff]
        %v392 = vld [vmem:[%s246 + $0x370] sm:$0xff]
        %v393 = vld [vmem:[%s246 + $0x378] sm:$0xff]
        %v394 = vld [vmem:[%s246 + $0x380] sm:$0xff]
        %v395 = vld [vmem:[%s246 + $0x388] sm:$0xff]
        %v396 = vld [vmem:[%s246 + $0x390] sm:$0xff]
        %v397 = vld [vmem:[%s246 + $0x398] sm:$0xff]
        %v398 = vld [vmem:[%s246 + $0x3a0] sm:$0xff]
        %v399 = vld [vmem:[%s246 + $0x3a8] sm:$0xff]
        %v400 = vld [vmem:[%s246 + $0x3b0] sm:$0xff]
        %v401 = vld [vmem:[%s246 + $0x3b8] sm:$0xff]
        %v402 = vld [vmem:[%s246 + $0x3c0] sm:$0xff]
        %v403 = vld [vmem:[%s246 + $0x3c8] sm:$0xff]
        %v404 = vld [vmem:[%s246 + $0x3d0] sm:$0xff]
        %v405 = vld [vmem:[%s246 + $0x3d8] sm:$0xff]
        %v406 = vld [vmem:[%s246 + $0x3e0] sm:$0xff]
        %v407 = vld [vmem:[%s246 + $0x3e8] sm:$0xff]
        %v408 = vld [vmem:[%s246 + $0x3f0] sm:$0xff]
        %v409 = vld [vmem:[%s246 + $0x3f8] sm:$0xff]
        %v410 = vld [vmem:[%s246 + $0x400] sm:$0xff]
        %v411 = vld [vmem:[%s246 + $0x408] sm:$0xff]
        %v412 = vld [vmem:[%s246 + $0x410] sm:$0xff]
        %v413 = vld [vmem:[%s246 + $0x418] sm:$0xff]
        %v414 = vld [vmem:[%s246 + $0x420] sm:$0xff]
        %v415 = vld [vmem:[%s246 + $0x428] sm:$0xff]
        %v416 = vld [vmem:[%s246 + $0x430] sm:$0xff]
        %v417 = vld [vmem:[%s246 + $0x438] sm:$0xff]
        %v418 = vld [vmem:[%s246 + $0x440] sm:$0xff]
        %v419 = vld [vmem:[%s246 + $0x448] sm:$0xff]
        %v420 = vld [vmem:[%s246 + $0x450] sm:$0xff]
        %v421 = vld [vmem:[%s246 + $0x458] sm:$0xff]
        %v422 = vld [vmem:[%s246 + $0x460] sm:$0xff]
        %v423 = vld [vmem:[%s246 + $0x468] sm:$0xff]
        %v424 = vld [vmem:[%s246 + $0x470] sm:$0xff]
        %v425 = vld [vmem:[%s246 + $0x478] sm:$0xff]
        %v426 = vld [vmem:[%s246 + $0x480] sm:$0xff]
        %v427 = vld [vmem:[%s246 + $0x488] sm:$0xff]
        %v428 = vld [vmem:[%s246 + $0x490] sm:$0xff]
        %v429 = vld [vmem:[%s246 + $0x498] sm:$0xff]
        %v430 = vld [vmem:[%s246 + $0x4a0] sm:$0xff]
        %v431 = vld [vmem:[%s246 + $0x4a8] sm:$0xff]
        %v432 = vld [vmem:[%s246 + $0x4b0] sm:$0xff]
        %v433 = vld [vmem:[%s246 + $0x4b8] sm:$0xff]
        %v434 = vld [vmem:[%s246 + $0x4c0] sm:$0xff]
        %v435 = vld [vmem:[%s246 + $0x4c8] sm:$0xff]
        %v436 = vld [vmem:[%s246 + $0x4d0] sm:$0xff]
        %v437 = vld [vmem:[%s246 + $0x4d8] sm:$0xff]
        %v438 = vld [vmem:[%s246 + $0x4e0] sm:$0xff]
        %v439 = vld [vmem:[%s246 + $0x4e8] sm:$0xff]
        %v440 = vld [vmem:[%s246 + $0x4f0] sm:$0xff]
        %v441 = vld [vmem:[%s246 + $0x4f8] sm:$0xff]
        %v442 = vld [vmem:[%s246 + $0x500] sm:$0xff]
        %v443 = vld [vmem:[%s246 + $0x508] sm:$0xff]
        %v444 = vld [vmem:[%s246 + $0x510] sm:$0xff]
        %v445 = vld [vmem:[%s246 + $0x518] sm:$0xff]
        %v446 = vld [vmem:[%s246 + $0x520] sm:$0xff]
        %v447 = vld [vmem:[%s246 + $0x528] sm:$0xff]
        %v448 = vld [vmem:[%s246 + $0x530] sm:$0xff]
        %v449 = vld [vmem:[%s246 + $0x538] sm:$0xff]
        %v450 = vld [vmem:[%s246 + $0x540] sm:$0xff]
        %v451 = vld [vmem:[%s246 + $0x548] sm:$0xff]
        %v452 = vld [vmem:[%s246 + $0x550] sm:$0xff]
        %v453 = vld [vmem:[%s246 + $0x558] sm:$0xff]
        %v454 = vld [vmem:[%s246 + $0x560] sm:$0xff]
        %v455 = vld [vmem:[%s246 + $0x568] sm:$0xff]
        %v456 = vld [vmem:[%s246 + $0x570] sm:$0xff]
        %v457 = vld [vmem:[%s246 + $0x578] sm:$0xff]
        %v458 = vld [vmem:[%s246 + $0x580] sm:$0xff]
        %v459 = vld [vmem:[%s246 + $0x588] sm:$0xff]
        %v460 = vld [vmem:[%s246 + $0x590] sm:$0xff]
        %v461 = vld [vmem:[%s246 + $0x598] sm:$0xff]
        %v462 = vld [vmem:[%s246 + $0x5a0] sm:$0xff]
        %v463 = vld [vmem:[%s246 + $0x5a8] sm:$0xff]
        %v464 = vld [vmem:[%s246 + $0x5b0] sm:$0xff]
        %v465 = vld [vmem:[%s246 + $0x5b8] sm:$0xff]
        %v466 = vld [vmem:[%s246 + $0x5c0] sm:$0xff]
        %v467 = vld [vmem:[%s246 + $0x5c8] sm:$0xff]
        %v468 = vld [vmem:[%s246 + $0x5d0] sm:$0xff]
        %v469 = vld [vmem:[%s246 + $0x5d8] sm:$0xff]
        %v470 = vld [vmem:[%s246 + $0x5e0] sm:$0xff]
        %v471 = vld [vmem:[%s246 + $0x5e8] sm:$0xff]
        %v472 = vld [vmem:[%s246 + $0x5f0] sm:$0xff]
        %v473 = vld [vmem:[%s246 + $0x5f8] sm:$0xff]
        %v474 = vld [vmem:[%s246 + $0x600] sm:$0xff]
        %v475 = vld [vmem:[%s246 + $0x608] sm:$0xff]
        %v476 = vld [vmem:[%s246 + $0x610] sm:$0xff]
        %v477 = vld [vmem:[%s246 + $0x618] sm:$0xff]
        %v478 = vld [vmem:[%s246 + $0x620] sm:$0xff]
        %v479 = vld [vmem:[%s246 + $0x628] sm:$0xff]
        %v480 = vld [vmem:[%s246 + $0x630] sm:$0xff]
        %v481 = vld [vmem:[%s246 + $0x638] sm:$0xff]
        %v482 = vld [vmem:[%s246 + $0x640] sm:$0xff]
        %v483 = vld [vmem:[%s246 + $0x648] sm:$0xff]
        %v484 = vld [vmem:[%s246 + $0x650] sm:$0xff]
        %v485 = vld [vmem:[%s246 + $0x658] sm:$0xff]
        %v486 = vld [vmem:[%s246 + $0x660] sm:$0xff]
        %v487 = vld [vmem:[%s246 + $0x668] sm:$0xff]
        %v488 = vld [vmem:[%s246 + $0x670] sm:$0xff]
        %v489 = vld [vmem:[%s246 + $0x678] sm:$0xff]
        %v490 = vld [vmem:[%s246 + $0x680] sm:$0xff]
        %v491 = vld [vmem:[%s246 + $0x688] sm:$0xff]
        %v492 = vld [vmem:[%s246 + $0x690] sm:$0xff]
        %v493 = vld [vmem:[%s246 + $0x698] sm:$0xff]
        %v494 = vld [vmem:[%s246 + $0x6a0] sm:$0xff]
        %v495 = vld [vmem:[%s246 + $0x6a8] sm:$0xff]
        %v496 = vld [vmem:[%s246 + $0x6b0] sm:$0xff]
        %v497 = vld [vmem:[%s246 + $0x6b8] sm:$0xff]
        %v498 = vld [vmem:[%s246 + $0x6c0] sm:$0xff]
        %v499 = vld [vmem:[%s246 + $0x6c8] sm:$0xff]
        %v500 = vld [vmem:[%s246 + $0x6d0] sm:$0xff]
        %v501 = vld [vmem:[%s246 + $0x6d8] sm:$0xff]
        %v502 = vld [vmem:[%s246 + $0x6e0] sm:$0xff]
        %v503 = vld [vmem:[%s246 + $0x6e8] sm:$0xff]
        %v504 = vld [vmem:[%s246 + $0x6f0] sm:$0xff]
        %v505 = vld [vmem:[%s246 + $0x6f8] sm:$0xff]
        %v506 = vld [vmem:[%s246 + $0x700] sm:$0xff]
        %v507 = vld [vmem:[%s246 + $0x708] sm:$0xff]
        %v508 = vld [vmem:[%s246 + $0x710] sm:$0xff]
        %v509 = vld [vmem:[%s246 + $0x718] sm:$0xff]
        %v510 = vld [vmem:[%s246 + $0x720] sm:$0xff]
        %v511 = vld [vmem:[%s246 + $0x728] sm:$0xff]
        %v512 = vld [vmem:[%s246 + $0x730] sm:$0xff]
        %v513 = vld [vmem:[%s246 + $0x738] sm:$0xff]
        %v514 = vld [vmem:[%s246 + $0x740] sm:$0xff]
        %v515 = vld [vmem:[%s246 + $0x748] sm:$0xff]
        %v516 = vld [vmem:[%s246 + $0x750] sm:$0xff]
        %v517 = vld [vmem:[%s246 + $0x758] sm:$0xff]
        %v518 = vld [vmem:[%s246 + $0x760] sm:$0xff]
        %v519 = vld [vmem:[%s246 + $0x768] sm:$0xff]
        %v520 = vld [vmem:[%s246 + $0x770] sm:$0xff]
        %v521 = vld [vmem:[%s246 + $0x778] sm:$0xff]
        %v522 = vld [vmem:[%s246 + $0x780] sm:$0xff]
        %v523 = vld [vmem:[%s246 + $0x788] sm:$0xff]
        %v524 = vld [vmem:[%s246 + $0x790] sm:$0xff]
        %v525 = vld [vmem:[%s246 + $0x798] sm:$0xff]
        %v526 = vld [vmem:[%s246 + $0x7a0] sm:$0xff]
        %v527 = vld [vmem:[%s246 + $0x7a8] sm:$0xff]
        %v528 = vld [vmem:[%s246 + $0x7b0] sm:$0xff]
        %v529 = vld [vmem:[%s246 + $0x7b8] sm:$0xff]
        %v530 = vld [vmem:[%s246 + $0x7c0] sm:$0xff]
        %v531 = vld [vmem:[%s246 + $0x7c8] sm:$0xff]
        %v532 = vld [vmem:[%s246 + $0x7d0] sm:$0xff]
        %v533 = vld [vmem:[%s246 + $0x7d8] sm:$0xff]
        %v534 = vld [vmem:[%s246 + $0x7e0] sm:$0xff]
        %v535 = vld [vmem:[%s246 + $0x7e8] sm:$0xff]
        %v536 = vld [vmem:[%s246 + $0x7f0] sm:$0xff]
        %v537 = vld [vmem:[%s246 + $0x7f8] sm:$0xff]
        %v538 = vld [vmem:[%s246 + $0x800] sm:$0xff]
        %v539 = vld [vmem:[%s246 + $0x808] sm:$0xff]
        %v540 = vld [vmem:[%s246 + $0x810] sm:$0xff]
        %v541 = vld [vmem:[%s246 + $0x818] sm:$0xff]
        %v542 = vld [vmem:[%s246 + $0x820] sm:$0xff]
        %v543 = vld [vmem:[%s246 + $0x828] sm:$0xff]
        %v544 = vld [vmem:[%s246 + $0x830] sm:$0xff]
        %v545 = vld [vmem:[%s246 + $0x838] sm:$0xff]
        %v546 = vld [vmem:[%s246 + $0x840] sm:$0xff]
        %v547 = vld [vmem:[%s246 + $0x848] sm:$0xff]
        %v548 = vld [vmem:[%s246 + $0x850] sm:$0xff]
        %v549 = vld [vmem:[%s246 + $0x858] sm:$0xff]
        %v550 = vld [vmem:[%s246 + $0x860] sm:$0xff]
        %v551 = vld [vmem:[%s246 + $0x868] sm:$0xff]
        %v552 = vld [vmem:[%s246 + $0x870] sm:$0xff]
        %v553 = vld [vmem:[%s246 + $0x878] sm:$0xff]
        %v554 = vld [vmem:[%s246 + $0x880] sm:$0xff]
        %v555 = vld [vmem:[%s246 + $0x888] sm:$0xff]
        %v556 = vld [vmem:[%s246 + $0x890] sm:$0xff]
        %v557 = vld [vmem:[%s246 + $0x898] sm:$0xff]
        %v558 = vld [vmem:[%s246 + $0x8a0] sm:$0xff]
        %v559 = vld [vmem:[%s246 + $0x8a8] sm:$0xff]
        %v560 = vld [vmem:[%s246 + $0x8b0] sm:$0xff]
        %v561 = vld [vmem:[%s246 + $0x8b8] sm:$0xff]
        %v562 = vld [vmem:[%s246 + $0x8c0] sm:$0xff]
        %v563 = vld [vmem:[%s246 + $0x8c8] sm:$0xff]
        %v564 = vld [vmem:[%s246 + $0x8d0] sm:$0xff]
        %v565 = vld [vmem:[%s246 + $0x8d8] sm:$0xff]
        %v566 = vld [vmem:[%s246 + $0x8e0] sm:$0xff]
        %v567 = vld [vmem:[%s246 + $0x8e8] sm:$0xff]
        %v568 = vld [vmem:[%s246 + $0x8f0] sm:$0xff]
        %v569 = vld [vmem:[%s246 + $0x8f8] sm:$0xff]
        %v570 = vld [vmem:[%s246 + $0x900] sm:$0xff]
        %v571 = vld [vmem:[%s246 + $0x908] sm:$0xff]
        %v572 = vld [vmem:[%s246 + $0x910] sm:$0xff]
        %v573 = vld [vmem:[%s246 + $0x918] sm:$0xff]
        %v574 = vld [vmem:[%s246 + $0x920] sm:$0xff]
        %v575 = vld [vmem:[%s246 + $0x928] sm:$0xff]
        %v576 = vld [vmem:[%s246 + $0x930] sm:$0xff]
        %v577 = vld [vmem:[%s246 + $0x938] sm:$0xff]
        %v578 = vld [vmem:[%s246 + $0x940] sm:$0xff]
        %v579 = vld [vmem:[%s246 + $0x948] sm:$0xff]
        %v580 = vld [vmem:[%s246 + $0x950] sm:$0xff]
        %v581 = vld [vmem:[%s246 + $0x958] sm:$0xff]
        %v582 = vld [vmem:[%s246 + $0x960] sm:$0xff]
        %v583 = vld [vmem:[%s246 + $0x968] sm:$0xff]
        %v584 = vld [vmem:[%s246 + $0x970] sm:$0xff]
        %v585 = vld [vmem:[%s246 + $0x978] sm:$0xff]
        %v586 = vld [vmem:[%s246 + $0x980] sm:$0xff]
        %v587 = vld [vmem:[%s246 + $0x988] sm:$0xff]
        %v588 = vld [vmem:[%s246 + $0x990] sm:$0xff]
        %v589 = vld [vmem:[%s246 + $0x998] sm:$0xff]
        %v590 = vld [vmem:[%s246 + $0x9a0] sm:$0xff]
        %v591 = vld [vmem:[%s246 + $0x9a8] sm:$0xff]
        %v592 = vld [vmem:[%s246 + $0x9b0] sm:$0xff]
        %v593 = vld [vmem:[%s246 + $0x9b8] sm:$0xff]
        %v594 = vld [vmem:[%s246 + $0x9c0] sm:$0xff]
        %v595 = vld [vmem:[%s246 + $0x9c8] sm:$0xff]
        %v596 = vld [vmem:[%s246 + $0x9d0] sm:$0xff]
        %v597 = vld [vmem:[%s246 + $0x9d8] sm:$0xff]
        %v598 = vld [vmem:[%s246 + $0x9e0] sm:$0xff]
        %v599 = vld [vmem:[%s246 + $0x9e8] sm:$0xff]
        %v600 = vld [vmem:[%s246 + $0x9f0] sm:$0xff]
        %v601 = vld [vmem:[%s246 + $0x9f8] sm:$0xff]
        %v602 = vld [vmem:[%s246 + $0xa00] sm:$0xff]
        %v603 = vld [vmem:[%s246 + $0xa08] sm:$0xff]
        %v604 = vld [vmem:[%s246 + $0xa10] sm:$0xff]
        %v605 = vld [vmem:[%s246 + $0xa18] sm:$0xff]
        %v606 = vld [vmem:[%s246 + $0xa20] sm:$0xff]
        %v607 = vld [vmem:[%s246 + $0xa28] sm:$0xff]
        %v608 = vld [vmem:[%s246 + $0xa30] sm:$0xff]
        %v609 = vld [vmem:[%s246 + $0xa38] sm:$0xff]
        %v610 = vld [vmem:[%s246 + $0xa40] sm:$0xff]
        %v611 = vld [vmem:[%s246 + $0xa48] sm:$0xff]
        %v612 = vld [vmem:[%s246 + $0xa50] sm:$0xff]
        %v613 = vld [vmem:[%s246 + $0xa58] sm:$0xff]
        %v614 = vld [vmem:[%s246 + $0xa60] sm:$0xff]
        %v615 = vld [vmem:[%s246 + $0xa68] sm:$0xff]
        %v616 = vld [vmem:[%s246 + $0xa70] sm:$0xff]
        %v617 = vld [vmem:[%s246 + $0xa78] sm:$0xff]
        %v618 = vld [vmem:[%s246 + $0xa80] sm:$0xff]
        %v619 = vld [vmem:[%s246 + $0xa88] sm:$0xff]
        %v620 = vld [vmem:[%s246 + $0xa90] sm:$0xff]
        %v621 = vld [vmem:[%s246 + $0xa98] sm:$0xff]
        %v622 = vld [vmem:[%s246 + $0xaa0] sm:$0xff]
        %v623 = vld [vmem:[%s246 + $0xaa8] sm:$0xff]
        %v624 = vld [vmem:[%s246 + $0xab0] sm:$0xff]
        %v625 = vld [vmem:[%s246 + $0xab8] sm:$0xff]
        %v626 = vld [vmem:[%s246 + $0xac0] sm:$0xff]
        %v627 = vld [vmem:[%s246 + $0xac8] sm:$0xff]
        %v628 = vld [vmem:[%s246 + $0xad0] sm:$0xff]
        %v629 = vld [vmem:[%s246 + $0xad8] sm:$0xff]
        %v630 = vld [vmem:[%s246 + $0xae0] sm:$0xff]
        %v631 = vld [vmem:[%s246 + $0xae8] sm:$0xff]
        %v632 = vld [vmem:[%s246 + $0xaf0] sm:$0xff]
        %v633 = vld [vmem:[%s246 + $0xaf8] sm:$0xff]
        %v634 = vld [vmem:[%s246 + $0xb00] sm:$0xff]
        %v635 = vld [vmem:[%s246 + $0xb08] sm:$0xff]
        %v636 = vld [vmem:[%s246 + $0xb10] sm:$0xff]
        %v637 = vld [vmem:[%s246 + $0xb18] sm:$0xff]
        %v638 = vld [vmem:[%s246 + $0xb20] sm:$0xff]
        %v639 = vld [vmem:[%s246 + $0xb28] sm:$0xff]
        %v640 = vld [vmem:[%s246 + $0xb30] sm:$0xff]
        %v641 = vld [vmem:[%s246 + $0xb38] sm:$0xff]
        %v642 = vld [vmem:[%s246 + $0xb40] sm:$0xff]
        %v643 = vld [vmem:[%s246 + $0xb48] sm:$0xff]
        %v644 = vld [vmem:[%s246 + $0xb50] sm:$0xff]
        %v645 = vld [vmem:[%s246 + $0xb58] sm:$0xff]
        %v646 = vld [vmem:[%s246 + $0xb60] sm:$0xff]
        %v647 = vld [vmem:[%s246 + $0xb68] sm:$0xff]
        %v648 = vld [vmem:[%s246 + $0xb70] sm:$0xff]
        %v649 = vld [vmem:[%s246 + $0xb78] sm:$0xff]
        %v650 = vld [vmem:[%s246 + $0xb80] sm:$0xff]
        %v651 = vld [vmem:[%s246 + $0xb88] sm:$0xff]
        %v652 = vld [vmem:[%s246 + $0xb90] sm:$0xff]
        %v653 = vld [vmem:[%s246 + $0xb98] sm:$0xff]
        %v654 = vld [vmem:[%s246 + $0xba0] sm:$0xff]
        %v655 = vld [vmem:[%s246 + $0xba8] sm:$0xff]
        %v656 = vld [vmem:[%s246 + $0xbb0] sm:$0xff]
        %v657 = vld [vmem:[%s246 + $0xbb8] sm:$0xff]
        %v658 = vld [vmem:[%s246 + $0xbc0] sm:$0xff]
        %v659 = vld [vmem:[%s246 + $0xbc8] sm:$0xff]
        %v660 = vld [vmem:[%s246 + $0xbd0] sm:$0xff]
        %v661 = vld [vmem:[%s246 + $0xbd8] sm:$0xff]
        %v662 = vld [vmem:[%s246 + $0xbe0] sm:$0xff]
        %v663 = vld [vmem:[%s246 + $0xbe8] sm:$0xff]
        %v664 = vld [vmem:[%s246 + $0xbf0] sm:$0xff]
        %v665 = vld [vmem:[%s246 + $0xbf8] sm:$0xff]
        %v666 = vld [vmem:[%s246 + $0xc00] sm:$0xff]
        %v667 = vld [vmem:[%s246 + $0xc08] sm:$0xff]
        %v668 = vld [vmem:[%s246 + $0xc10] sm:$0xff]
        %v669 = vld [vmem:[%s246 + $0xc18] sm:$0xff]
        %v670 = vld [vmem:[%s246 + $0xc20] sm:$0xff]
        %v671 = vld [vmem:[%s246 + $0xc28] sm:$0xff]
        %v672 = vld [vmem:[%s246 + $0xc30] sm:$0xff]
        %v673 = vld [vmem:[%s246 + $0xc38] sm:$0xff]
        %v674 = vld [vmem:[%s246 + $0xc40] sm:$0xff]
        %v675 = vld [vmem:[%s246 + $0xc48] sm:$0xff]
        %v676 = vld [vmem:[%s246 + $0xc50] sm:$0xff]
        %v677 = vld [vmem:[%s246 + $0xc58] sm:$0xff]
        %v678 = vld [vmem:[%s246 + $0xc60] sm:$0xff]
        %v679 = vld [vmem:[%s246 + $0xc68] sm:$0xff]
        %v680 = vld [vmem:[%s246 + $0xc70] sm:$0xff]
        %v681 = vld [vmem:[%s246 + $0xc78] sm:$0xff]
        %v682 = vld [vmem:[%s246 + $0xc80] sm:$0xff]
        %v683 = vld [vmem:[%s246 + $0xc88] sm:$0xff]
        %v684 = vld [vmem:[%s246 + $0xc90] sm:$0xff]
        %v685 = vld [vmem:[%s246 + $0xc98] sm:$0xff]
        %v686 = vld [vmem:[%s246 + $0xca0] sm:$0xff]
        %v687 = vld [vmem:[%s246 + $0xca8] sm:$0xff]
        %v688 = vld [vmem:[%s246 + $0xcb0] sm:$0xff]
        %v689 = vld [vmem:[%s246 + $0xcb8] sm:$0xff]
        %v690 = vld [vmem:[%s246 + $0xcc0] sm:$0xff]
        %v691 = vld [vmem:[%s246 + $0xcc8] sm:$0xff]
        %v692 = vld [vmem:[%s246 + $0xcd0] sm:$0xff]
        %v693 = vld [vmem:[%s246 + $0xcd8] sm:$0xff]
        %v694 = vld [vmem:[%s246 + $0xce0] sm:$0xff]
        %v695 = vld [vmem:[%s246 + $0xce8] sm:$0xff]
        %v696 = vld [vmem:[%s246 + $0xcf0] sm:$0xff]
        %v697 = vld [vmem:[%s246 + $0xcf8] sm:$0xff]
        %v698 = vld [vmem:[%s246 + $0xd00] sm:$0xff]
        %v699 = vld [vmem:[%s246 + $0xd08] sm:$0xff]
        %v700 = vld [vmem:[%s246 + $0xd10] sm:$0xff]
        %v701 = vld [vmem:[%s246 + $0xd18] sm:$0xff]
        %v702 = vld [vmem:[%s246 + $0xd20] sm:$0xff]
        %v703 = vld [vmem:[%s246 + $0xd28] sm:$0xff]
        %v704 = vld [vmem:[%s246 + $0xd30] sm:$0xff]
        %v705 = vld [vmem:[%s246 + $0xd38] sm:$0xff]
        %v706 = vld [vmem:[%s246 + $0xd40] sm:$0xff]
        %v707 = vld [vmem:[%s246 + $0xd48] sm:$0xff]
        %v708 = vld [vmem:[%s246 + $0xd50] sm:$0xff]
        %v709 = vld [vmem:[%s246 + $0xd58] sm:$0xff]
        %v710 = vld [vmem:[%s246 + $0xd60] sm:$0xff]
        %v711 = vld [vmem:[%s246 + $0xd68] sm:$0xff]
        %v712 = vld [vmem:[%s246 + $0xd70] sm:$0xff]
        %v713 = vld [vmem:[%s246 + $0xd78] sm:$0xff]
        %v714 = vld [vmem:[%s246 + $0xd80] sm:$0xff]
        %v715 = vld [vmem:[%s246 + $0xd88] sm:$0xff]
        %v716 = vld [vmem:[%s246 + $0xd90] sm:$0xff]
        %v717 = vld [vmem:[%s246 + $0xd98] sm:$0xff]
        %v718 = vld [vmem:[%s246 + $0xda0] sm:$0xff]
        %v719 = vld [vmem:[%s246 + $0xda8] sm:$0xff]
        %v720 = vld [vmem:[%s246 + $0xdb0] sm:$0xff]
        %v721 = vld [vmem:[%s246 + $0xdb8] sm:$0xff]
        %v722 = vld [vmem:[%s246 + $0xdc0] sm:$0xff]
        %v723 = vld [vmem:[%s246 + $0xdc8] sm:$0xff]
        %v724 = vld [vmem:[%s246 + $0xdd0] sm:$0xff]
        %v725 = vld [vmem:[%s246 + $0xdd8] sm:$0xff]
        %v726 = vld [vmem:[%s246 + $0xde0] sm:$0xff]
        %v727 = vld [vmem:[%s246 + $0xde8] sm:$0xff]
        %v728 = vld [vmem:[%s246 + $0xdf0] sm:$0xff]
        %v729 = vld [vmem:[%s246 + $0xdf8] sm:$0xff]
        %v730 = vld [vmem:[%s246 + $0xe00] sm:$0xff]
        %v731 = vld [vmem:[%s246 + $0xe08] sm:$0xff]
        %v732 = vld [vmem:[%s246 + $0xe10] sm:$0xff]
        %v733 = vld [vmem:[%s246 + $0xe18] sm:$0xff]
        %v734 = vld [vmem:[%s246 + $0xe20] sm:$0xff]
        %v735 = vld [vmem:[%s246 + $0xe28] sm:$0xff]
        %v736 = vld [vmem:[%s246 + $0xe30] sm:$0xff]
        %v737 = vld [vmem:[%s246 + $0xe38] sm:$0xff]
        %v738 = vld [vmem:[%s246 + $0xe40] sm:$0xff]
        %v739 = vld [vmem:[%s246 + $0xe48] sm:$0xff]
        %v740 = vld [vmem:[%s246 + $0xe50] sm:$0xff]
        %v741 = vld [vmem:[%s246 + $0xe58] sm:$0xff]
        %v742 = vld [vmem:[%s246 + $0xe60] sm:$0xff]
        %v743 = vld [vmem:[%s246 + $0xe68] sm:$0xff]
        %v744 = vld [vmem:[%s246 + $0xe70] sm:$0xff]
        %v745 = vld [vmem:[%s246 + $0xe78] sm:$0xff]
        %v746 = vld [vmem:[%s246 + $0xe80] sm:$0xff]
        %v747 = vld [vmem:[%s246 + $0xe88] sm:$0xff]
        %v748 = vld [vmem:[%s246 + $0xe90] sm:$0xff]
        %v749 = vld [vmem:[%s246 + $0xe98] sm:$0xff]
        %v750 = vld [vmem:[%s246 + $0xea0] sm:$0xff]
        %v751 = vld [vmem:[%s246 + $0xea8] sm:$0xff]
        %v752 = vld [vmem:[%s246 + $0xeb0] sm:$0xff]
        %v753 = vld [vmem:[%s246 + $0xeb8] sm:$0xff]
        %v754 = vld [vmem:[%s246 + $0xec0] sm:$0xff]
        %v755 = vld [vmem:[%s246 + $0xec8] sm:$0xff]
        %v756 = vld [vmem:[%s246 + $0xed0] sm:$0xff]
        %v757 = vld [vmem:[%s246 + $0xed8] sm:$0xff]
        %v758 = vld [vmem:[%s246 + $0xee0] sm:$0xff]
        %v759 = vld [vmem:[%s246 + $0xee8] sm:$0xff]
        %v760 = vld [vmem:[%s246 + $0xef0] sm:$0xff]
        %v761 = vld [vmem:[%s246 + $0xef8] sm:$0xff]
        %v762 = vld [vmem:[%s246 + $0xf00] sm:$0xff]
        %v763 = vld [vmem:[%s246 + $0xf08] sm:$0xff]
        %v764 = vld [vmem:[%s246 + $0xf10] sm:$0xff]
        %v765 = vld [vmem:[%s246 + $0xf18] sm:$0xff]
        %v766 = vld [vmem:[%s246 + $0xf20] sm:$0xff]
        %v767 = vld [vmem:[%s246 + $0xf28] sm:$0xff]
        %v768 = vld [vmem:[%s246 + $0xf30] sm:$0xff]
        %v769 = vld [vmem:[%s246 + $0xf38] sm:$0xff]
        %v770 = vld [vmem:[%s246 + $0xf40] sm:$0xff]
        %v771 = vld [vmem:[%s246 + $0xf48] sm:$0xff]
        %v772 = vld [vmem:[%s246 + $0xf50] sm:$0xff]
        %v773 = vld [vmem:[%s246 + $0xf58] sm:$0xff]
        %v774 = vld [vmem:[%s246 + $0xf60] sm:$0xff]
        %v775 = vld [vmem:[%s246 + $0xf68] sm:$0xff]
        %v776 = vld [vmem:[%s246 + $0xf70] sm:$0xff]
        %v777 = vld [vmem:[%s246 + $0xf78] sm:$0xff]
        %v778 = vld [vmem:[%s246 + $0xf80] sm:$0xff]
        %v779 = vld [vmem:[%s246 + $0xf88] sm:$0xff]
        %v780 = vld [vmem:[%s246 + $0xf90] sm:$0xff]
        %v781 = vld [vmem:[%s246 + $0xf98] sm:$0xff]
        %v782 = vld [vmem:[%s246 + $0xfa0] sm:$0xff]
        %v783 = vld [vmem:[%s246 + $0xfa8] sm:$0xff]
        %v784 = vld [vmem:[%s246 + $0xfb0] sm:$0xff]
        %v785 = vld [vmem:[%s246 + $0xfb8] sm:$0xff]
        %v786 = vld [vmem:[%s246 + $0xfc0] sm:$0xff]
        %v787 = vld [vmem:[%s246 + $0xfc8] sm:$0xff]
        %v788 = vld [vmem:[%s246 + $0xfd0] sm:$0xff]
        %v789 = vld [vmem:[%s246 + $0xfd8] sm:$0xff]
        %v790 = vld [vmem:[%s246 + $0xfe0] sm:$0xff]
        %v791 = vld [vmem:[%s246 + $0xfe8] sm:$0xff]
        %v792 = vld [vmem:[%s246 + $0xff0] sm:$0xff]
        %v793 = vld [vmem:[%s246 + $0xff8] sm:$0xff]
        %v794 = vld [vmem:[%s246 + $0x1000] sm:$0xff]
        %v795 = vld [vmem:[%s246 + $0x1008] sm:$0xff]
        %v796 = vld [vmem:[%s246 + $0x1010] sm:$0xff]
        %v797 = vld [vmem:[%s246 + $0x1018] sm:$0xff]
        %v798 = vld [vmem:[%s246 + $0x1020] sm:$0xff]
        %v799 = vld [vmem:[%s246 + $0x1028] sm:$0xff]
        %v800 = vld [vmem:[%s246 + $0x1030] sm:$0xff]
        %v801 = vld [vmem:[%s246 + $0x1038] sm:$0xff]
        %v802 = vld [vmem:[%s246 + $0x1040] sm:$0xff]
        %v803 = vld [vmem:[%s246 + $0x1048] sm:$0xff]
        %v804 = vld [vmem:[%s246 + $0x1050] sm:$0xff]
        %v805 = vld [vmem:[%s246 + $0x1058] sm:$0xff]
        %v806 = vld [vmem:[%s246 + $0x1060] sm:$0xff]
        %v807 = vld [vmem:[%s246 + $0x1068] sm:$0xff]
        %v808 = vld [vmem:[%s246 + $0x1070] sm:$0xff]
        %v809 = vld [vmem:[%s246 + $0x1078] sm:$0xff]
        %v810 = vld [vmem:[%s246 + $0x1080] sm:$0xff]
        %v811 = vld [vmem:[%s246 + $0x1088] sm:$0xff]
        %v812 = vld [vmem:[%s246 + $0x1090] sm:$0xff]
        %v813 = vld [vmem:[%s246 + $0x1098] sm:$0xff]
        %v814 = vld [vmem:[%s246 + $0x10a0] sm:$0xff]
        %v815 = vld [vmem:[%s246 + $0x10a8] sm:$0xff]
        %v816 = vld [vmem:[%s246 + $0x10b0] sm:$0xff]
        %v817 = vld [vmem:[%s246 + $0x10b8] sm:$0xff]
        %v818 = vld [vmem:[%s246 + $0x10c0] sm:$0xff]
        %v819 = vld [vmem:[%s246 + $0x10c8] sm:$0xff]
        %v820 = vld [vmem:[%s246 + $0x10d0] sm:$0xff]
        %v821 = vld [vmem:[%s246 + $0x10d8] sm:$0xff]
        %v822 = vld [vmem:[%s246 + $0x10e0] sm:$0xff]
        %v823 = vld [vmem:[%s246 + $0x10e8] sm:$0xff]
        %v824 = vld [vmem:[%s246 + $0x10f0] sm:$0xff]
        %v825 = vld [vmem:[%s246 + $0x10f8] sm:$0xff]
        %v826 = vld [vmem:[%s246 + $0x1100] sm:$0xff]
        %v827 = vld [vmem:[%s246 + $0x1108] sm:$0xff]
        %v828 = vld [vmem:[%s246 + $0x1110] sm:$0xff]
        %v829 = vld [vmem:[%s246 + $0x1118] sm:$0xff]
        %v830 = vld [vmem:[%s246 + $0x1120] sm:$0xff]
        %v831 = vld [vmem:[%s246 + $0x1128] sm:$0xff]
        %v832 = vld [vmem:[%s246 + $0x1130] sm:$0xff]
        %v833 = vld [vmem:[%s246 + $0x1138] sm:$0xff]
        %v834 = vld [vmem:[%s246 + $0x1140] sm:$0xff]
        %v835 = vld [vmem:[%s246 + $0x1148] sm:$0xff]
        %v836 = vld [vmem:[%s246 + $0x1150] sm:$0xff]
        %v837 = vld [vmem:[%s246 + $0x1158] sm:$0xff]
        %v838 = vld [vmem:[%s246 + $0x1160] sm:$0xff]
        %v839 = vld [vmem:[%s246 + $0x1168] sm:$0xff]
        %v840 = vld [vmem:[%s246 + $0x1170] sm:$0xff]
        %v841 = vld [vmem:[%s246 + $0x1178] sm:$0xff]
        %v842 = vld [vmem:[%s246 + $0x1180] sm:$0xff]
        %v843 = vld [vmem:[%s246 + $0x1188] sm:$0xff]
        %v844 = vld [vmem:[%s246 + $0x1190] sm:$0xff]
        %v845 = vld [vmem:[%s246 + $0x1198] sm:$0xff]
        %v846 = vld [vmem:[%s246 + $0x11a0] sm:$0xff]
        %v847 = vld [vmem:[%s246 + $0x11a8] sm:$0xff]
        %v848 = vld [vmem:[%s246 + $0x11b0] sm:$0xff]
        %v849 = vld [vmem:[%s246 + $0x11b8] sm:$0xff]
        %v850 = vld [vmem:[%s246 + $0x11c0] sm:$0xff]
        %v851 = vld [vmem:[%s246 + $0x11c8] sm:$0xff]
        %v852 = vld [vmem:[%s246 + $0x11d0] sm:$0xff]
        %v853 = vld [vmem:[%s246 + $0x11d8] sm:$0xff]
        %v854 = vld [vmem:[%s246 + $0x11e0] sm:$0xff]
        %v855 = vld [vmem:[%s246 + $0x11e8] sm:$0xff]
        %v856 = vld [vmem:[%s246 + $0x11f0] sm:$0xff]
        %v857 = vld [vmem:[%s246 + $0x11f8] sm:$0xff]
        %v860 = vunpack.c.l.s4 1983009808
        %v861 = vunpack.c.0.s8 %v860
        %v862 = vlaneseq
        %v863 = vshrl.u32 %v862, 7
        %v864 = vsub.s32 %v861, %v863
        %v865 = vrot.slane %v281, %v864
        %v866 = vcombine.high %v865, %v865
        %v1445 = vunpack.c.l.b16 %v282
        %v1446 = vunpack.c.h.b16 %v282
        %v1447 = vunpack.c.l.b16 %v283
        %v1448 = vunpack.c.h.b16 %v283
        %v1449 = vunpack.c.l.b16 %v284
        %v1450 = vunpack.c.h.b16 %v284
        %v1451 = vunpack.c.l.b16 %v285
        %v1452 = vunpack.c.h.b16 %v285
        %v1453 = vunpack.c.l.b16 %v286
        %v1454 = vunpack.c.h.b16 %v286
        %v1455 = vunpack.c.l.b16 %v287
        %v1456 = vunpack.c.h.b16 %v287
        %v1457 = vunpack.c.l.b16 %v288
        %v1458 = vunpack.c.h.b16 %v288
        %v1459 = vunpack.c.l.b16 %v289
        %v1460 = vunpack.c.h.b16 %v289
        %v1461 = vunpack.c.l.b16 %v290
        %v1462 = vunpack.c.h.b16 %v290
        %v1463 = vunpack.c.l.b16 %v291
        %v1464 = vunpack.c.h.b16 %v291
        %v1465 = vunpack.c.l.b16 %v292
        %v1466 = vunpack.c.h.b16 %v292
        %v1467 = vunpack.c.l.b16 %v293
        %v1468 = vunpack.c.h.b16 %v293
        %v1469 = vunpack.c.l.b16 %v294
        %v1470 = vunpack.c.h.b16 %v294
        %v1471 = vunpack.c.l.b16 %v295
        %v1472 = vunpack.c.h.b16 %v295
        %v1473 = vunpack.c.l.b16 %v296
        %v1474 = vunpack.c.h.b16 %v296
        %v1475 = vunpack.c.l.b16 %v297
        %v1476 = vunpack.c.h.b16 %v297
        %v1477 = vunpack.c.l.b16 %v298
        %v1478 = vunpack.c.h.b16 %v298
        %v1479 = vunpack.c.l.b16 %v299
        %v1480 = vunpack.c.h.b16 %v299
        %v1481 = vunpack.c.l.b16 %v300
        %v1482 = vunpack.c.h.b16 %v300
        %v1483 = vunpack.c.l.b16 %v301
        %v1484 = vunpack.c.h.b16 %v301
        %v1485 = vunpack.c.l.b16 %v302
        %v1486 = vunpack.c.h.b16 %v302
        %v1487 = vunpack.c.l.b16 %v303
        %v1488 = vunpack.c.h.b16 %v303
        %v1489 = vunpack.c.l.b16 %v304
        %v1490 = vunpack.c.h.b16 %v304
        %v1491 = vunpack.c.l.b16 %v305
        %v1492 = vunpack.c.h.b16 %v305
        %v1493 = vunpack.c.l.b16 %v306
        %v1494 = vunpack.c.h.b16 %v306
        %v1495 = vunpack.c.l.b16 %v307
        %v1496 = vunpack.c.h.b16 %v307
        %v1497 = vunpack.c.l.b16 %v308
        %v1498 = vunpack.c.h.b16 %v308
        %v1499 = vunpack.c.l.b16 %v309
        %v1500 = vunpack.c.h.b16 %v309
        %v1501 = vunpack.c.l.b16 %v310
        %v1502 = vunpack.c.h.b16 %v310
        %v1503 = vunpack.c.l.b16 %v311
        %v1504 = vunpack.c.h.b16 %v311
        %v1505 = vunpack.c.l.b16 %v312
        %v1506 = vunpack.c.h.b16 %v312
        %v1507 = vunpack.c.l.b16 %v313
        %v1508 = vunpack.c.h.b16 %v313
        %v1509 = vunpack.c.l.b16 %v314
        %v1510 = vunpack.c.h.b16 %v314
        %v1511 = vunpack.c.l.b16 %v315
        %v1512 = vunpack.c.h.b16 %v315
        %v1513 = vunpack.c.l.b16 %v316
        %v1514 = vunpack.c.h.b16 %v316
        %v1515 = vunpack.c.l.b16 %v317
        %v1516 = vunpack.c.h.b16 %v317
        %v1517 = vunpack.c.l.b16 %v318
        %v1518 = vunpack.c.h.b16 %v318
        %v1519 = vunpack.c.l.b16 %v319
        %v1520 = vunpack.c.h.b16 %v319
        %v1521 = vunpack.c.l.b16 %v320
        %v1522 = vunpack.c.h.b16 %v320
        %v1523 = vunpack.c.l.b16 %v321
        %v1524 = vunpack.c.h.b16 %v321
        %v1525 = vunpack.c.l.b16 %v322
        %v1526 = vunpack.c.h.b16 %v322
        %v1527 = vunpack.c.l.b16 %v323
        %v1528 = vunpack.c.h.b16 %v323
        %v1529 = vunpack.c.l.b16 %v324
        %v1530 = vunpack.c.h.b16 %v324
        %v1531 = vunpack.c.l.b16 %v325
        %v1532 = vunpack.c.h.b16 %v325
        %v1533 = vunpack.c.l.b16 %v326
        %v1534 = vunpack.c.h.b16 %v326
        %v1535 = vunpack.c.l.b16 %v327
        %v1536 = vunpack.c.h.b16 %v327
        %v1537 = vunpack.c.l.b16 %v328
        %v1538 = vunpack.c.h.b16 %v328
        %v1539 = vunpack.c.l.b16 %v329
        %v1540 = vunpack.c.h.b16 %v329
        %v1541 = vunpack.c.l.b16 %v330
        %v1542 = vunpack.c.h.b16 %v330
        %v1543 = vunpack.c.l.b16 %v331
        %v1544 = vunpack.c.h.b16 %v331
        %v1545 = vunpack.c.l.b16 %v332
        %v1546 = vunpack.c.h.b16 %v332
        %v1547 = vunpack.c.l.b16 %v333
        %v1548 = vunpack.c.h.b16 %v333
        %v1549 = vunpack.c.l.b16 %v334
        %v1550 = vunpack.c.h.b16 %v334
        %v1551 = vunpack.c.l.b16 %v335
        %v1552 = vunpack.c.h.b16 %v335
        %v1553 = vunpack.c.l.b16 %v336
        %v1554 = vunpack.c.h.b16 %v336
        %v1555 = vunpack.c.l.b16 %v337
        %v1556 = vunpack.c.h.b16 %v337
        %v1557 = vunpack.c.l.b16 %v338
        %v1558 = vunpack.c.h.b16 %v338
        %v1559 = vunpack.c.l.b16 %v339
        %v1560 = vunpack.c.h.b16 %v339
        %v1561 = vunpack.c.l.b16 %v340
        %v1562 = vunpack.c.h.b16 %v340
        %v1563 = vunpack.c.l.b16 %v341
        %v1564 = vunpack.c.h.b16 %v341
        %v1565 = vunpack.c.l.b16 %v342
        %v1566 = vunpack.c.h.b16 %v342
        %v1567 = vunpack.c.l.b16 %v343
        %v1568 = vunpack.c.h.b16 %v343
        %v1569 = vunpack.c.l.b16 %v344
        %v1570 = vunpack.c.h.b16 %v344
        %v1571 = vunpack.c.l.b16 %v345
        %v1572 = vunpack.c.h.b16 %v345
        %v1573 = vunpack.c.l.b16 %v346
        %v1574 = vunpack.c.h.b16 %v346
        %v1575 = vunpack.c.l.b16 %v347
        %v1576 = vunpack.c.h.b16 %v347
        %v1577 = vunpack.c.l.b16 %v348
        %v1578 = vunpack.c.h.b16 %v348
        %v1579 = vunpack.c.l.b16 %v349
        %v1580 = vunpack.c.h.b16 %v349
        %v1581 = vunpack.c.l.b16 %v350
        %v1582 = vunpack.c.h.b16 %v350
        %v1583 = vunpack.c.l.b16 %v351
        %v1584 = vunpack.c.h.b16 %v351
        %v1585 = vunpack.c.l.b16 %v352
        %v1586 = vunpack.c.h.b16 %v352
        %v1587 = vunpack.c.l.b16 %v353
        %v1588 = vunpack.c.h.b16 %v353
        %v1589 = vunpack.c.l.b16 %v354
        %v1590 = vunpack.c.h.b16 %v354
        %v1591 = vunpack.c.l.b16 %v355
        %v1592 = vunpack.c.h.b16 %v355
        %v1593 = vunpack.c.l.b16 %v356
        %v1594 = vunpack.c.h.b16 %v356
        %v1595 = vunpack.c.l.b16 %v357
        %v1596 = vunpack.c.h.b16 %v357
        %v1597 = vunpack.c.l.b16 %v358
        %v1598 = vunpack.c.h.b16 %v358
        %v1599 = vunpack.c.l.b16 %v359
        %v1600 = vunpack.c.h.b16 %v359
        %v1601 = vunpack.c.l.b16 %v360
        %v1602 = vunpack.c.h.b16 %v360
        %v1603 = vunpack.c.l.b16 %v361
        %v1604 = vunpack.c.h.b16 %v361
        %v1605 = vunpack.c.l.b16 %v362
        %v1606 = vunpack.c.h.b16 %v362
        %v1607 = vunpack.c.l.b16 %v363
        %v1608 = vunpack.c.h.b16 %v363
        %v1609 = vunpack.c.l.b16 %v364
        %v1610 = vunpack.c.h.b16 %v364
        %v1611 = vunpack.c.l.b16 %v365
        %v1612 = vunpack.c.h.b16 %v365
        %v1613 = vunpack.c.l.b16 %v366
        %v1614 = vunpack.c.h.b16 %v366
        %v1615 = vunpack.c.l.b16 %v367
        %v1616 = vunpack.c.h.b16 %v367
        %v1617 = vunpack.c.l.b16 %v368
        %v1618 = vunpack.c.h.b16 %v368
        %v1619 = vunpack.c.l.b16 %v369
        %v1620 = vunpack.c.h.b16 %v369
        %v1621 = vunpack.c.l.b16 %v370
        %v1622 = vunpack.c.h.b16 %v370
        %v1623 = vunpack.c.l.b16 %v371
        %v1624 = vunpack.c.h.b16 %v371
        %v1625 = vunpack.c.l.b16 %v372
        %v1626 = vunpack.c.h.b16 %v372
        %v1627 = vunpack.c.l.b16 %v373
        %v1628 = vunpack.c.h.b16 %v373
        %v1629 = vunpack.c.l.b16 %v374
        %v1630 = vunpack.c.h.b16 %v374
        %v1631 = vunpack.c.l.b16 %v375
        %v1632 = vunpack.c.h.b16 %v375
        %v1633 = vunpack.c.l.b16 %v376
        %v1634 = vunpack.c.h.b16 %v376
        %v1635 = vunpack.c.l.b16 %v377
        %v1636 = vunpack.c.h.b16 %v377
        %v1637 = vunpack.c.l.b16 %v378
        %v1638 = vunpack.c.h.b16 %v378
        %v1639 = vunpack.c.l.b16 %v379
        %v1640 = vunpack.c.h.b16 %v379
        %v1641 = vunpack.c.l.b16 %v380
        %v1642 = vunpack.c.h.b16 %v380
        %v1643 = vunpack.c.l.b16 %v381
        %v1644 = vunpack.c.h.b16 %v381
        %v1645 = vunpack.c.l.b16 %v382
        %v1646 = vunpack.c.h.b16 %v382
        %v1647 = vunpack.c.l.b16 %v383
        %v1648 = vunpack.c.h.b16 %v383
        %v1649 = vunpack.c.l.b16 %v384
        %v1650 = vunpack.c.h.b16 %v384
        %v1651 = vunpack.c.l.b16 %v385
        %v1652 = vunpack.c.h.b16 %v385
        %v1653 = vunpack.c.l.b16 %v386
        %v1654 = vunpack.c.h.b16 %v386
        %v1655 = vunpack.c.l.b16 %v387
        %v1656 = vunpack.c.h.b16 %v387
        %v1657 = vunpack.c.l.b16 %v388
        %v1658 = vunpack.c.h.b16 %v388
        %v1659 = vunpack.c.l.b16 %v389
        %v1660 = vunpack.c.h.b16 %v389
        %v1661 = vunpack.c.l.b16 %v390
        %v1662 = vunpack.c.h.b16 %v390
        %v1663 = vunpack.c.l.b16 %v391
        %v1664 = vunpack.c.h.b16 %v391
        %v1665 = vunpack.c.l.b16 %v392
        %v1666 = vunpack.c.h.b16 %v392
        %v1667 = vunpack.c.l.b16 %v393
        %v1668 = vunpack.c.h.b16 %v393
        %v1669 = vunpack.c.l.b16 %v394
        %v1670 = vunpack.c.h.b16 %v394
        %v1671 = vunpack.c.l.b16 %v395
        %v1672 = vunpack.c.h.b16 %v395
        %v1673 = vunpack.c.l.b16 %v396
        %v1674 = vunpack.c.h.b16 %v396
        %v1675 = vunpack.c.l.b16 %v397
        %v1676 = vunpack.c.h.b16 %v397
        %v1677 = vunpack.c.l.b16 %v398
        %v1678 = vunpack.c.h.b16 %v398
        %v1679 = vunpack.c.l.b16 %v399
        %v1680 = vunpack.c.h.b16 %v399
        %v1681 = vunpack.c.l.b16 %v400
        %v1682 = vunpack.c.h.b16 %v400
        %v1683 = vunpack.c.l.b16 %v401
        %v1684 = vunpack.c.h.b16 %v401
        %v1685 = vunpack.c.l.b16 %v402
        %v1686 = vunpack.c.h.b16 %v402
        %v1687 = vunpack.c.l.b16 %v403
        %v1688 = vunpack.c.h.b16 %v403
        %v1689 = vunpack.c.l.b16 %v404
        %v1690 = vunpack.c.h.b16 %v404
        %v1691 = vunpack.c.l.b16 %v405
        %v1692 = vunpack.c.h.b16 %v405
        %v1693 = vunpack.c.l.b16 %v406
        %v1694 = vunpack.c.h.b16 %v406
        %v1695 = vunpack.c.l.b16 %v407
        %v1696 = vunpack.c.h.b16 %v407
        %v1697 = vunpack.c.l.b16 %v408
        %v1698 = vunpack.c.h.b16 %v408
        %v1699 = vunpack.c.l.b16 %v409
        %v1700 = vunpack.c.h.b16 %v409
        %v1701 = vunpack.c.l.b16 %v410
        %v1702 = vunpack.c.h.b16 %v410
        %v1703 = vunpack.c.l.b16 %v411
        %v1704 = vunpack.c.h.b16 %v411
        %v1705 = vunpack.c.l.b16 %v412
        %v1706 = vunpack.c.h.b16 %v412
        %v1707 = vunpack.c.l.b16 %v413
        %v1708 = vunpack.c.h.b16 %v413
        %v1709 = vunpack.c.l.b16 %v414
        %v1710 = vunpack.c.h.b16 %v414
        %v1711 = vunpack.c.l.b16 %v415
        %v1712 = vunpack.c.h.b16 %v415
        %v1713 = vunpack.c.l.b16 %v416
        %v1714 = vunpack.c.h.b16 %v416
        %v1715 = vunpack.c.l.b16 %v417
        %v1716 = vunpack.c.h.b16 %v417
        %v1717 = vunpack.c.l.b16 %v418
        %v1718 = vunpack.c.h.b16 %v418
        %v1719 = vunpack.c.l.b16 %v419
        %v1720 = vunpack.c.h.b16 %v419
        %v1721 = vunpack.c.l.b16 %v420
        %v1722 = vunpack.c.h.b16 %v420
        %v1723 = vunpack.c.l.b16 %v421
        %v1724 = vunpack.c.h.b16 %v421
        %v1725 = vunpack.c.l.b16 %v422
        %v1726 = vunpack.c.h.b16 %v422
        %v1727 = vunpack.c.l.b16 %v423
        %v1728 = vunpack.c.h.b16 %v423
        %v1729 = vunpack.c.l.b16 %v424
        %v1730 = vunpack.c.h.b16 %v424
        %v1731 = vunpack.c.l.b16 %v425
        %v1732 = vunpack.c.h.b16 %v425
        %v1733 = vunpack.c.l.b16 %v426
        %v1734 = vunpack.c.h.b16 %v426
        %v1735 = vunpack.c.l.b16 %v427
        %v1736 = vunpack.c.h.b16 %v427
        %v1737 = vunpack.c.l.b16 %v428
        %v1738 = vunpack.c.h.b16 %v428
        %v1739 = vunpack.c.l.b16 %v429
        %v1740 = vunpack.c.h.b16 %v429
        %v1741 = vunpack.c.l.b16 %v430
        %v1742 = vunpack.c.h.b16 %v430
        %v1743 = vunpack.c.l.b16 %v431
        %v1744 = vunpack.c.h.b16 %v431
        %v1745 = vunpack.c.l.b16 %v432
        %v1746 = vunpack.c.h.b16 %v432
        %v1747 = vunpack.c.l.b16 %v433
        %v1748 = vunpack.c.h.b16 %v433
        %v1749 = vunpack.c.l.b16 %v434
        %v1750 = vunpack.c.h.b16 %v434
        %v1751 = vunpack.c.l.b16 %v435
        %v1752 = vunpack.c.h.b16 %v435
        %v1753 = vunpack.c.l.b16 %v436
        %v1754 = vunpack.c.h.b16 %v436
        %v1755 = vunpack.c.l.b16 %v437
        %v1756 = vunpack.c.h.b16 %v437
        %v1757 = vunpack.c.l.b16 %v438
        %v1758 = vunpack.c.h.b16 %v438
        %v1759 = vunpack.c.l.b16 %v439
        %v1760 = vunpack.c.h.b16 %v439
        %v1761 = vunpack.c.l.b16 %v440
        %v1762 = vunpack.c.h.b16 %v440
        %v1763 = vunpack.c.l.b16 %v441
        %v1764 = vunpack.c.h.b16 %v441
        %v1765 = vunpack.c.l.b16 %v442
        %v1766 = vunpack.c.h.b16 %v442
        %v1767 = vunpack.c.l.b16 %v443
        %v1768 = vunpack.c.h.b16 %v443
        %v1769 = vunpack.c.l.b16 %v444
        %v1770 = vunpack.c.h.b16 %v444
        %v1771 = vunpack.c.l.b16 %v445
        %v1772 = vunpack.c.h.b16 %v445
        %v1773 = vunpack.c.l.b16 %v446
        %v1774 = vunpack.c.h.b16 %v446
        %v1775 = vunpack.c.l.b16 %v447
        %v1776 = vunpack.c.h.b16 %v447
        %v1777 = vunpack.c.l.b16 %v448
        %v1778 = vunpack.c.h.b16 %v448
        %v1779 = vunpack.c.l.b16 %v449
        %v1780 = vunpack.c.h.b16 %v449
        %v1781 = vunpack.c.l.b16 %v450
        %v1782 = vunpack.c.h.b16 %v450
        %v1783 = vunpack.c.l.b16 %v451
        %v1784 = vunpack.c.h.b16 %v451
        %v1785 = vunpack.c.l.b16 %v452
        %v1786 = vunpack.c.h.b16 %v452
        %v1787 = vunpack.c.l.b16 %v453
        %v1788 = vunpack.c.h.b16 %v453
        %v1789 = vunpack.c.l.b16 %v454
        %v1790 = vunpack.c.h.b16 %v454
        %v1791 = vunpack.c.l.b16 %v455
        %v1792 = vunpack.c.h.b16 %v455
        %v1793 = vunpack.c.l.b16 %v456
        %v1794 = vunpack.c.h.b16 %v456
        %v1795 = vunpack.c.l.b16 %v457
        %v1796 = vunpack.c.h.b16 %v457
        %v1797 = vunpack.c.l.b16 %v458
        %v1798 = vunpack.c.h.b16 %v458
        %v1799 = vunpack.c.l.b16 %v459
        %v1800 = vunpack.c.h.b16 %v459
        %v1801 = vunpack.c.l.b16 %v460
        %v1802 = vunpack.c.h.b16 %v460
        %v1803 = vunpack.c.l.b16 %v461
        %v1804 = vunpack.c.h.b16 %v461
        %v1805 = vunpack.c.l.b16 %v462
        %v1806 = vunpack.c.h.b16 %v462
        %v1807 = vunpack.c.l.b16 %v463
        %v1808 = vunpack.c.h.b16 %v463
        %v1809 = vunpack.c.l.b16 %v464
        %v1810 = vunpack.c.h.b16 %v464
        %v1811 = vunpack.c.l.b16 %v465
        %v1812 = vunpack.c.h.b16 %v465
        %v1813 = vunpack.c.l.b16 %v466
        %v1814 = vunpack.c.h.b16 %v466
        %v1815 = vunpack.c.l.b16 %v467
        %v1816 = vunpack.c.h.b16 %v467
        %v1817 = vunpack.c.l.b16 %v468
        %v1818 = vunpack.c.h.b16 %v468
        %v1819 = vunpack.c.l.b16 %v469
        %v1820 = vunpack.c.h.b16 %v469
        %v1821 = vunpack.c.l.b16 %v470
        %v1822 = vunpack.c.h.b16 %v470
        %v1823 = vunpack.c.l.b16 %v471
        %v1824 = vunpack.c.h.b16 %v471
        %v1825 = vunpack.c.l.b16 %v472
        %v1826 = vunpack.c.h.b16 %v472
        %v1827 = vunpack.c.l.b16 %v473
        %v1828 = vunpack.c.h.b16 %v473
        %v1829 = vunpack.c.l.b16 %v474
        %v1830 = vunpack.c.h.b16 %v474
        %v1831 = vunpack.c.l.b16 %v475
        %v1832 = vunpack.c.h.b16 %v475
        %v1833 = vunpack.c.l.b16 %v476
        %v1834 = vunpack.c.h.b16 %v476
        %v1835 = vunpack.c.l.b16 %v477
        %v1836 = vunpack.c.h.b16 %v477
        %v1837 = vunpack.c.l.b16 %v478
        %v1838 = vunpack.c.h.b16 %v478
        %v1839 = vunpack.c.l.b16 %v479
        %v1840 = vunpack.c.h.b16 %v479
        %v1841 = vunpack.c.l.b16 %v480
        %v1842 = vunpack.c.h.b16 %v480
        %v1843 = vunpack.c.l.b16 %v481
        %v1844 = vunpack.c.h.b16 %v481
        %v1845 = vunpack.c.l.b16 %v482
        %v1846 = vunpack.c.h.b16 %v482
        %v1847 = vunpack.c.l.b16 %v483
        %v1848 = vunpack.c.h.b16 %v483
        %v1849 = vunpack.c.l.b16 %v484
        %v1850 = vunpack.c.h.b16 %v484
        %v1851 = vunpack.c.l.b16 %v485
        %v1852 = vunpack.c.h.b16 %v485
        %v1853 = vunpack.c.l.b16 %v486
        %v1854 = vunpack.c.h.b16 %v486
        %v1855 = vunpack.c.l.b16 %v487
        %v1856 = vunpack.c.h.b16 %v487
        %v1857 = vunpack.c.l.b16 %v488
        %v1858 = vunpack.c.h.b16 %v488
        %v1859 = vunpack.c.l.b16 %v489
        %v1860 = vunpack.c.h.b16 %v489
        %v1861 = vunpack.c.l.b16 %v490
        %v1862 = vunpack.c.h.b16 %v490
        %v1863 = vunpack.c.l.b16 %v491
        %v1864 = vunpack.c.h.b16 %v491
        %v1865 = vunpack.c.l.b16 %v492
        %v1866 = vunpack.c.h.b16 %v492
        %v1867 = vunpack.c.l.b16 %v493
        %v1868 = vunpack.c.h.b16 %v493
        %v1869 = vunpack.c.l.b16 %v494
        %v1870 = vunpack.c.h.b16 %v494
        %v1871 = vunpack.c.l.b16 %v495
        %v1872 = vunpack.c.h.b16 %v495
        %v1873 = vunpack.c.l.b16 %v496
        %v1874 = vunpack.c.h.b16 %v496
        %v1875 = vunpack.c.l.b16 %v497
        %v1876 = vunpack.c.h.b16 %v497
        %v1877 = vunpack.c.l.b16 %v498
        %v1878 = vunpack.c.h.b16 %v498
        %v1879 = vunpack.c.l.b16 %v499
        %v1880 = vunpack.c.h.b16 %v499
        %v1881 = vunpack.c.l.b16 %v500
        %v1882 = vunpack.c.h.b16 %v500
        %v1883 = vunpack.c.l.b16 %v501
        %v1884 = vunpack.c.h.b16 %v501
        %v1885 = vunpack.c.l.b16 %v502
        %v1886 = vunpack.c.h.b16 %v502
        %v1887 = vunpack.c.l.b16 %v503
        %v1888 = vunpack.c.h.b16 %v503
        %v1889 = vunpack.c.l.b16 %v504
        %v1890 = vunpack.c.h.b16 %v504
        %v1891 = vunpack.c.l.b16 %v505
        %v1892 = vunpack.c.h.b16 %v505
        %v1893 = vunpack.c.l.b16 %v506
        %v1894 = vunpack.c.h.b16 %v506
        %v1895 = vunpack.c.l.b16 %v507
        %v1896 = vunpack.c.h.b16 %v507
        %v1897 = vunpack.c.l.b16 %v508
        %v1898 = vunpack.c.h.b16 %v508
        %v1899 = vunpack.c.l.b16 %v509
        %v1900 = vunpack.c.h.b16 %v509
        %v1901 = vunpack.c.l.b16 %v510
        %v1902 = vunpack.c.h.b16 %v510
        %v1903 = vunpack.c.l.b16 %v511
        %v1904 = vunpack.c.h.b16 %v511
        %v1905 = vunpack.c.l.b16 %v512
        %v1906 = vunpack.c.h.b16 %v512
        %v1907 = vunpack.c.l.b16 %v513
        %v1908 = vunpack.c.h.b16 %v513
        %v1909 = vunpack.c.l.b16 %v514
        %v1910 = vunpack.c.h.b16 %v514
        %v1911 = vunpack.c.l.b16 %v515
        %v1912 = vunpack.c.h.b16 %v515
        %v1913 = vunpack.c.l.b16 %v516
        %v1914 = vunpack.c.h.b16 %v516
        %v1915 = vunpack.c.l.b16 %v517
        %v1916 = vunpack.c.h.b16 %v517
        %v1917 = vunpack.c.l.b16 %v518
        %v1918 = vunpack.c.h.b16 %v518
        %v1919 = vunpack.c.l.b16 %v519
        %v1920 = vunpack.c.h.b16 %v519
        %v1921 = vunpack.c.l.b16 %v520
        %v1922 = vunpack.c.h.b16 %v520
        %v1923 = vunpack.c.l.b16 %v521
        %v1924 = vunpack.c.h.b16 %v521
        %v1925 = vunpack.c.l.b16 %v522
        %v1926 = vunpack.c.h.b16 %v522
        %v1927 = vunpack.c.l.b16 %v523
        %v1928 = vunpack.c.h.b16 %v523
        %v1929 = vunpack.c.l.b16 %v524
        %v1930 = vunpack.c.h.b16 %v524
        %v1931 = vunpack.c.l.b16 %v525
        %v1932 = vunpack.c.h.b16 %v525
        %v1933 = vunpack.c.l.b16 %v526
        %v1934 = vunpack.c.h.b16 %v526
        %v1935 = vunpack.c.l.b16 %v527
        %v1936 = vunpack.c.h.b16 %v527
        %v1937 = vunpack.c.l.b16 %v528
        %v1938 = vunpack.c.h.b16 %v528
        %v1939 = vunpack.c.l.b16 %v529
        %v1940 = vunpack.c.h.b16 %v529
        %v1941 = vunpack.c.l.b16 %v530
        %v1942 = vunpack.c.h.b16 %v530
        %v1943 = vunpack.c.l.b16 %v531
        %v1944 = vunpack.c.h.b16 %v531
        %v1945 = vunpack.c.l.b16 %v532
        %v1946 = vunpack.c.h.b16 %v532
        %v1947 = vunpack.c.l.b16 %v533
        %v1948 = vunpack.c.h.b16 %v533
        %v1949 = vunpack.c.l.b16 %v534
        %v1950 = vunpack.c.h.b16 %v534
        %v1951 = vunpack.c.l.b16 %v535
        %v1952 = vunpack.c.h.b16 %v535
        %v1953 = vunpack.c.l.b16 %v536
        %v1954 = vunpack.c.h.b16 %v536
        %v1955 = vunpack.c.l.b16 %v537
        %v1956 = vunpack.c.h.b16 %v537
        %v1957 = vunpack.c.l.b16 %v538
        %v1958 = vunpack.c.h.b16 %v538
        %v1959 = vunpack.c.l.b16 %v539
        %v1960 = vunpack.c.h.b16 %v539
        %v1961 = vunpack.c.l.b16 %v540
        %v1962 = vunpack.c.h.b16 %v540
        %v1963 = vunpack.c.l.b16 %v541
        %v1964 = vunpack.c.h.b16 %v541
        %v1965 = vunpack.c.l.b16 %v542
        %v1966 = vunpack.c.h.b16 %v542
        %v1967 = vunpack.c.l.b16 %v543
        %v1968 = vunpack.c.h.b16 %v543
        %v1969 = vunpack.c.l.b16 %v544
        %v1970 = vunpack.c.h.b16 %v544
        %v1971 = vunpack.c.l.b16 %v545
        %v1972 = vunpack.c.h.b16 %v545
        %v1973 = vunpack.c.l.b16 %v546
        %v1974 = vunpack.c.h.b16 %v546
        %v1975 = vunpack.c.l.b16 %v547
        %v1976 = vunpack.c.h.b16 %v547
        %v1977 = vunpack.c.l.b16 %v548
        %v1978 = vunpack.c.h.b16 %v548
        %v1979 = vunpack.c.l.b16 %v549
        %v1980 = vunpack.c.h.b16 %v549
        %v1981 = vunpack.c.l.b16 %v550
        %v1982 = vunpack.c.h.b16 %v550
        %v1983 = vunpack.c.l.b16 %v551
        %v1984 = vunpack.c.h.b16 %v551
        %v1985 = vunpack.c.l.b16 %v552
        %v1986 = vunpack.c.h.b16 %v552
        %v1987 = vunpack.c.l.b16 %v553
        %v1988 = vunpack.c.h.b16 %v553
        %v1989 = vunpack.c.l.b16 %v554
        %v1990 = vunpack.c.h.b16 %v554
        %v1991 = vunpack.c.l.b16 %v555
        %v1992 = vunpack.c.h.b16 %v555
        %v1993 = vunpack.c.l.b16 %v556
        %v1994 = vunpack.c.h.b16 %v556
        %v1995 = vunpack.c.l.b16 %v557
        %v1996 = vunpack.c.h.b16 %v557
        %v1997 = vunpack.c.l.b16 %v558
        %v1998 = vunpack.c.h.b16 %v558
        %v1999 = vunpack.c.l.b16 %v559
        %v2000 = vunpack.c.h.b16 %v559
        %v2001 = vunpack.c.l.b16 %v560
        %v2002 = vunpack.c.h.b16 %v560
        %v2003 = vunpack.c.l.b16 %v561
        %v2004 = vunpack.c.h.b16 %v561
        %v2005 = vunpack.c.l.b16 %v562
        %v2006 = vunpack.c.h.b16 %v562
        %v2007 = vunpack.c.l.b16 %v563
        %v2008 = vunpack.c.h.b16 %v563
        %v2009 = vunpack.c.l.b16 %v564
        %v2010 = vunpack.c.h.b16 %v564
        %v2011 = vunpack.c.l.b16 %v565
        %v2012 = vunpack.c.h.b16 %v565
        %v2013 = vunpack.c.l.b16 %v566
        %v2014 = vunpack.c.h.b16 %v566
        %v2015 = vunpack.c.l.b16 %v567
        %v2016 = vunpack.c.h.b16 %v567
        %v2017 = vunpack.c.l.b16 %v568
        %v2018 = vunpack.c.h.b16 %v568
        %v2019 = vunpack.c.l.b16 %v569
        %v2020 = vunpack.c.h.b16 %v569
        %v2021 = vunpack.c.l.b16 %v570
        %v2022 = vunpack.c.h.b16 %v570
        %v2023 = vunpack.c.l.b16 %v571
        %v2024 = vunpack.c.h.b16 %v571
        %v2025 = vunpack.c.l.b16 %v572
        %v2026 = vunpack.c.h.b16 %v572
        %v2027 = vunpack.c.l.b16 %v573
        %v2028 = vunpack.c.h.b16 %v573
        %v2029 = vunpack.c.l.b16 %v574
        %v2030 = vunpack.c.h.b16 %v574
        %v2031 = vunpack.c.l.b16 %v575
        %v2032 = vunpack.c.h.b16 %v575
        %v2033 = vunpack.c.l.b16 %v576
        %v2034 = vunpack.c.h.b16 %v576
        %v2035 = vunpack.c.l.b16 %v577
        %v2036 = vunpack.c.h.b16 %v577
        %v2037 = vunpack.c.l.b16 %v578
        %v2038 = vunpack.c.h.b16 %v578
        %v2039 = vunpack.c.l.b16 %v579
        %v2040 = vunpack.c.h.b16 %v579
        %v2041 = vunpack.c.l.b16 %v580
        %v2042 = vunpack.c.h.b16 %v580
        %v2043 = vunpack.c.l.b16 %v581
        %v2044 = vunpack.c.h.b16 %v581
        %v2045 = vunpack.c.l.b16 %v582
        %v2046 = vunpack.c.h.b16 %v582
        %v2047 = vunpack.c.l.b16 %v583
        %v2048 = vunpack.c.h.b16 %v583
        %v2049 = vunpack.c.l.b16 %v584
        %v2050 = vunpack.c.h.b16 %v584
        %v2051 = vunpack.c.l.b16 %v585
        %v2052 = vunpack.c.h.b16 %v585
        %v2053 = vunpack.c.l.b16 %v586
        %v2054 = vunpack.c.h.b16 %v586
        %v2055 = vunpack.c.l.b16 %v587
        %v2056 = vunpack.c.h.b16 %v587
        %v2057 = vunpack.c.l.b16 %v588
        %v2058 = vunpack.c.h.b16 %v588
        %v2059 = vunpack.c.l.b16 %v589
        %v2060 = vunpack.c.h.b16 %v589
        %v2061 = vunpack.c.l.b16 %v590
        %v2062 = vunpack.c.h.b16 %v590
        %v2063 = vunpack.c.l.b16 %v591
        %v2064 = vunpack.c.h.b16 %v591
        %v2065 = vunpack.c.l.b16 %v592
        %v2066 = vunpack.c.h.b16 %v592
        %v2067 = vunpack.c.l.b16 %v593
        %v2068 = vunpack.c.h.b16 %v593
        %v2069 = vunpack.c.l.b16 %v594
        %v2070 = vunpack.c.h.b16 %v594
        %v2071 = vunpack.c.l.b16 %v595
        %v2072 = vunpack.c.h.b16 %v595
        %v2073 = vunpack.c.l.b16 %v596
        %v2074 = vunpack.c.h.b16 %v596
        %v2075 = vunpack.c.l.b16 %v597
        %v2076 = vunpack.c.h.b16 %v597
        %v2077 = vunpack.c.l.b16 %v598
        %v2078 = vunpack.c.h.b16 %v598
        %v2079 = vunpack.c.l.b16 %v599
        %v2080 = vunpack.c.h.b16 %v599
        %v2081 = vunpack.c.l.b16 %v600
        %v2082 = vunpack.c.h.b16 %v600
        %v2083 = vunpack.c.l.b16 %v601
        %v2084 = vunpack.c.h.b16 %v601
        %v2085 = vunpack.c.l.b16 %v602
        %v2086 = vunpack.c.h.b16 %v602
        %v2087 = vunpack.c.l.b16 %v603
        %v2088 = vunpack.c.h.b16 %v603
        %v2089 = vunpack.c.l.b16 %v604
        %v2090 = vunpack.c.h.b16 %v604
        %v2091 = vunpack.c.l.b16 %v605
        %v2092 = vunpack.c.h.b16 %v605
        %v2093 = vunpack.c.l.b16 %v606
        %v2094 = vunpack.c.h.b16 %v606
        %v2095 = vunpack.c.l.b16 %v607
        %v2096 = vunpack.c.h.b16 %v607
        %v2097 = vunpack.c.l.b16 %v608
        %v2098 = vunpack.c.h.b16 %v608
        %v2099 = vunpack.c.l.b16 %v609
        %v2100 = vunpack.c.h.b16 %v609
        %v2101 = vunpack.c.l.b16 %v610
        %v2102 = vunpack.c.h.b16 %v610
        %v2103 = vunpack.c.l.b16 %v611
        %v2104 = vunpack.c.h.b16 %v611
        %v2105 = vunpack.c.l.b16 %v612
        %v2106 = vunpack.c.h.b16 %v612
        %v2107 = vunpack.c.l.b16 %v613
        %v2108 = vunpack.c.h.b16 %v613
        %v2109 = vunpack.c.l.b16 %v614
        %v2110 = vunpack.c.h.b16 %v614
        %v2111 = vunpack.c.l.b16 %v615
        %v2112 = vunpack.c.h.b16 %v615
        %v2113 = vunpack.c.l.b16 %v616
        %v2114 = vunpack.c.h.b16 %v616
        %v2115 = vunpack.c.l.b16 %v617
        %v2116 = vunpack.c.h.b16 %v617
        %v2117 = vunpack.c.l.b16 %v618
        %v2118 = vunpack.c.h.b16 %v618
        %v2119 = vunpack.c.l.b16 %v619
        %v2120 = vunpack.c.h.b16 %v619
        %v2121 = vunpack.c.l.b16 %v620
        %v2122 = vunpack.c.h.b16 %v620
        %v2123 = vunpack.c.l.b16 %v621
        %v2124 = vunpack.c.h.b16 %v621
        %v2125 = vunpack.c.l.b16 %v622
        %v2126 = vunpack.c.h.b16 %v622
        %v2127 = vunpack.c.l.b16 %v623
        %v2128 = vunpack.c.h.b16 %v623
        %v2129 = vunpack.c.l.b16 %v624
        %v2130 = vunpack.c.h.b16 %v624
        %v2131 = vunpack.c.l.b16 %v625
        %v2132 = vunpack.c.h.b16 %v625
        %v2133 = vunpack.c.l.b16 %v626
        %v2134 = vunpack.c.h.b16 %v626
        %v2135 = vunpack.c.l.b16 %v627
        %v2136 = vunpack.c.h.b16 %v627
        %v2137 = vunpack.c.l.b16 %v628
        %v2138 = vunpack.c.h.b16 %v628
        %v2139 = vunpack.c.l.b16 %v629
        %v2140 = vunpack.c.h.b16 %v629
        %v2141 = vunpack.c.l.b16 %v630
        %v2142 = vunpack.c.h.b16 %v630
        %v2143 = vunpack.c.l.b16 %v631
        %v2144 = vunpack.c.h.b16 %v631
        %v2145 = vunpack.c.l.b16 %v632
        %v2146 = vunpack.c.h.b16 %v632
        %v2147 = vunpack.c.l.b16 %v633
        %v2148 = vunpack.c.h.b16 %v633
        %v2149 = vunpack.c.l.b16 %v634
        %v2150 = vunpack.c.h.b16 %v634
        %v2151 = vunpack.c.l.b16 %v635
        %v2152 = vunpack.c.h.b16 %v635
        %v2153 = vunpack.c.l.b16 %v636
        %v2154 = vunpack.c.h.b16 %v636
        %v2155 = vunpack.c.l.b16 %v637
        %v2156 = vunpack.c.h.b16 %v637
        %v2157 = vunpack.c.l.b16 %v638
        %v2158 = vunpack.c.h.b16 %v638
        %v2159 = vunpack.c.l.b16 %v639
        %v2160 = vunpack.c.h.b16 %v639
        %v2161 = vunpack.c.l.b16 %v640
        %v2162 = vunpack.c.h.b16 %v640
        %v2163 = vunpack.c.l.b16 %v641
        %v2164 = vunpack.c.h.b16 %v641
        %v2165 = vunpack.c.l.b16 %v642
        %v2166 = vunpack.c.h.b16 %v642
        %v2167 = vunpack.c.l.b16 %v643
        %v2168 = vunpack.c.h.b16 %v643
        %v2169 = vunpack.c.l.b16 %v644
        %v2170 = vunpack.c.h.b16 %v644
        %v2171 = vunpack.c.l.b16 %v645
        %v2172 = vunpack.c.h.b16 %v645
        %v2173 = vunpack.c.l.b16 %v646
        %v2174 = vunpack.c.h.b16 %v646
        %v2175 = vunpack.c.l.b16 %v647
        %v2176 = vunpack.c.h.b16 %v647
        %v2177 = vunpack.c.l.b16 %v648
        %v2178 = vunpack.c.h.b16 %v648
        %v2179 = vunpack.c.l.b16 %v649
        %v2180 = vunpack.c.h.b16 %v649
        %v2181 = vunpack.c.l.b16 %v650
        %v2182 = vunpack.c.h.b16 %v650
        %v2183 = vunpack.c.l.b16 %v651
        %v2184 = vunpack.c.h.b16 %v651
        %v2185 = vunpack.c.l.b16 %v652
        %v2186 = vunpack.c.h.b16 %v652
        %v2187 = vunpack.c.l.b16 %v653
        %v2188 = vunpack.c.h.b16 %v653
        %v2189 = vunpack.c.l.b16 %v654
        %v2190 = vunpack.c.h.b16 %v654
        %v2191 = vunpack.c.l.b16 %v655
        %v2192 = vunpack.c.h.b16 %v655
        %v2193 = vunpack.c.l.b16 %v656
        %v2194 = vunpack.c.h.b16 %v656
        %v2195 = vunpack.c.l.b16 %v657
        %v2196 = vunpack.c.h.b16 %v657
        %v2197 = vunpack.c.l.b16 %v658
        %v2198 = vunpack.c.h.b16 %v658
        %v2199 = vunpack.c.l.b16 %v659
        %v2200 = vunpack.c.h.b16 %v659
        %v2201 = vunpack.c.l.b16 %v660
        %v2202 = vunpack.c.h.b16 %v660
        %v2203 = vunpack.c.l.b16 %v661
        %v2204 = vunpack.c.h.b16 %v661
        %v2205 = vunpack.c.l.b16 %v662
        %v2206 = vunpack.c.h.b16 %v662
        %v2207 = vunpack.c.l.b16 %v663
        %v2208 = vunpack.c.h.b16 %v663
        %v2209 = vunpack.c.l.b16 %v664
        %v2210 = vunpack.c.h.b16 %v664
        %v2211 = vunpack.c.l.b16 %v665
        %v2212 = vunpack.c.h.b16 %v665
        %v2213 = vunpack.c.l.b16 %v666
        %v2214 = vunpack.c.h.b16 %v666
        %v2215 = vunpack.c.l.b16 %v667
        %v2216 = vunpack.c.h.b16 %v667
        %v2217 = vunpack.c.l.b16 %v668
        %v2218 = vunpack.c.h.b16 %v668
        %v2219 = vunpack.c.l.b16 %v669
        %v2220 = vunpack.c.h.b16 %v669
        %v2221 = vunpack.c.l.b16 %v670
        %v2222 = vunpack.c.h.b16 %v670
        %v2223 = vunpack.c.l.b16 %v671
        %v2224 = vunpack.c.h.b16 %v671
        %v2225 = vunpack.c.l.b16 %v672
        %v2226 = vunpack.c.h.b16 %v672
        %v2227 = vunpack.c.l.b16 %v673
        %v2228 = vunpack.c.h.b16 %v673
        %v2229 = vunpack.c.l.b16 %v674
        %v2230 = vunpack.c.h.b16 %v674
        %v2231 = vunpack.c.l.b16 %v675
        %v2232 = vunpack.c.h.b16 %v675
        %v2233 = vunpack.c.l.b16 %v676
        %v2234 = vunpack.c.h.b16 %v676
        %v2235 = vunpack.c.l.b16 %v677
        %v2236 = vunpack.c.h.b16 %v677
        %v2237 = vunpack.c.l.b16 %v678
        %v2238 = vunpack.c.h.b16 %v678
        %v2239 = vunpack.c.l.b16 %v679
        %v2240 = vunpack.c.h.b16 %v679
        %v2241 = vunpack.c.l.b16 %v680
        %v2242 = vunpack.c.h.b16 %v680
        %v2243 = vunpack.c.l.b16 %v681
        %v2244 = vunpack.c.h.b16 %v681
        %v2245 = vunpack.c.l.b16 %v682
        %v2246 = vunpack.c.h.b16 %v682
        %v2247 = vunpack.c.l.b16 %v683
        %v2248 = vunpack.c.h.b16 %v683
        %v2249 = vunpack.c.l.b16 %v684
        %v2250 = vunpack.c.h.b16 %v684
        %v2251 = vunpack.c.l.b16 %v685
        %v2252 = vunpack.c.h.b16 %v685
        %v2253 = vunpack.c.l.b16 %v686
        %v2254 = vunpack.c.h.b16 %v686
        %v2255 = vunpack.c.l.b16 %v687
        %v2256 = vunpack.c.h.b16 %v687
        %v2257 = vunpack.c.l.b16 %v688
        %v2258 = vunpack.c.h.b16 %v688
        %v2259 = vunpack.c.l.b16 %v689
        %v2260 = vunpack.c.h.b16 %v689
        %v2261 = vunpack.c.l.b16 %v690
        %v2262 = vunpack.c.h.b16 %v690
        %v2263 = vunpack.c.l.b16 %v691
        %v2264 = vunpack.c.h.b16 %v691
        %v2265 = vunpack.c.l.b16 %v692
        %v2266 = vunpack.c.h.b16 %v692
        %v2267 = vunpack.c.l.b16 %v693
        %v2268 = vunpack.c.h.b16 %v693
        %v2269 = vunpack.c.l.b16 %v694
        %v2270 = vunpack.c.h.b16 %v694
        %v2271 = vunpack.c.l.b16 %v695
        %v2272 = vunpack.c.h.b16 %v695
        %v2273 = vunpack.c.l.b16 %v696
        %v2274 = vunpack.c.h.b16 %v696
        %v2275 = vunpack.c.l.b16 %v697
        %v2276 = vunpack.c.h.b16 %v697
        %v2277 = vunpack.c.l.b16 %v698
        %v2278 = vunpack.c.h.b16 %v698
        %v2279 = vunpack.c.l.b16 %v699
        %v2280 = vunpack.c.h.b16 %v699
        %v2281 = vunpack.c.l.b16 %v700
        %v2282 = vunpack.c.h.b16 %v700
        %v2283 = vunpack.c.l.b16 %v701
        %v2284 = vunpack.c.h.b16 %v701
        %v2285 = vunpack.c.l.b16 %v702
        %v2286 = vunpack.c.h.b16 %v702
        %v2287 = vunpack.c.l.b16 %v703
        %v2288 = vunpack.c.h.b16 %v703
        %v2289 = vunpack.c.l.b16 %v704
        %v2290 = vunpack.c.h.b16 %v704
        %v2291 = vunpack.c.l.b16 %v705
        %v2292 = vunpack.c.h.b16 %v705
        %v2293 = vunpack.c.l.b16 %v706
        %v2294 = vunpack.c.h.b16 %v706
        %v2295 = vunpack.c.l.b16 %v707
        %v2296 = vunpack.c.h.b16 %v707
        %v2297 = vunpack.c.l.b16 %v708
        %v2298 = vunpack.c.h.b16 %v708
        %v2299 = vunpack.c.l.b16 %v709
        %v2300 = vunpack.c.h.b16 %v709
        %v2301 = vunpack.c.l.b16 %v710
        %v2302 = vunpack.c.h.b16 %v710
        %v2303 = vunpack.c.l.b16 %v711
        %v2304 = vunpack.c.h.b16 %v711
        %v2305 = vunpack.c.l.b16 %v712
        %v2306 = vunpack.c.h.b16 %v712
        %v2307 = vunpack.c.l.b16 %v713
        %v2308 = vunpack.c.h.b16 %v713
        %v2309 = vunpack.c.l.b16 %v714
        %v2310 = vunpack.c.h.b16 %v714
        %v2311 = vunpack.c.l.b16 %v715
        %v2312 = vunpack.c.h.b16 %v715
        %v2313 = vunpack.c.l.b16 %v716
        %v2314 = vunpack.c.h.b16 %v716
        %v2315 = vunpack.c.l.b16 %v717
        %v2316 = vunpack.c.h.b16 %v717
        %v2317 = vunpack.c.l.b16 %v718
        %v2318 = vunpack.c.h.b16 %v718
        %v2319 = vunpack.c.l.b16 %v719
        %v2320 = vunpack.c.h.b16 %v719
        %v2321 = vunpack.c.l.b16 %v720
        %v2322 = vunpack.c.h.b16 %v720
        %v2323 = vunpack.c.l.b16 %v721
        %v2324 = vunpack.c.h.b16 %v721
        %v2325 = vunpack.c.l.b16 %v722
        %v2326 = vunpack.c.h.b16 %v722
        %v2327 = vunpack.c.l.b16 %v723
        %v2328 = vunpack.c.h.b16 %v723
        %v2329 = vunpack.c.l.b16 %v724
        %v2330 = vunpack.c.h.b16 %v724
        %v2331 = vunpack.c.l.b16 %v725
        %v2332 = vunpack.c.h.b16 %v725
        %v2333 = vunpack.c.l.b16 %v726
        %v2334 = vunpack.c.h.b16 %v726
        %v2335 = vunpack.c.l.b16 %v727
        %v2336 = vunpack.c.h.b16 %v727
        %v2337 = vunpack.c.l.b16 %v728
        %v2338 = vunpack.c.h.b16 %v728
        %v2339 = vunpack.c.l.b16 %v729
        %v2340 = vunpack.c.h.b16 %v729
        %v2341 = vunpack.c.l.b16 %v730
        %v2342 = vunpack.c.h.b16 %v730
        %v2343 = vunpack.c.l.b16 %v731
        %v2344 = vunpack.c.h.b16 %v731
        %v2345 = vunpack.c.l.b16 %v732
        %v2346 = vunpack.c.h.b16 %v732
        %v2347 = vunpack.c.l.b16 %v733
        %v2348 = vunpack.c.h.b16 %v733
        %v2349 = vunpack.c.l.b16 %v734
        %v2350 = vunpack.c.h.b16 %v734
        %v2351 = vunpack.c.l.b16 %v735
        %v2352 = vunpack.c.h.b16 %v735
        %v2353 = vunpack.c.l.b16 %v736
        %v2354 = vunpack.c.h.b16 %v736
        %v2355 = vunpack.c.l.b16 %v737
        %v2356 = vunpack.c.h.b16 %v737
        %v2357 = vunpack.c.l.b16 %v738
        %v2358 = vunpack.c.h.b16 %v738
        %v2359 = vunpack.c.l.b16 %v739
        %v2360 = vunpack.c.h.b16 %v739
        %v2361 = vunpack.c.l.b16 %v740
        %v2362 = vunpack.c.h.b16 %v740
        %v2363 = vunpack.c.l.b16 %v741
        %v2364 = vunpack.c.h.b16 %v741
        %v2365 = vunpack.c.l.b16 %v742
        %v2366 = vunpack.c.h.b16 %v742
        %v2367 = vunpack.c.l.b16 %v743
        %v2368 = vunpack.c.h.b16 %v743
        %v2369 = vunpack.c.l.b16 %v744
        %v2370 = vunpack.c.h.b16 %v744
        %v2371 = vunpack.c.l.b16 %v745
        %v2372 = vunpack.c.h.b16 %v745
        %v2373 = vunpack.c.l.b16 %v746
        %v2374 = vunpack.c.h.b16 %v746
        %v2375 = vunpack.c.l.b16 %v747
        %v2376 = vunpack.c.h.b16 %v747
        %v2377 = vunpack.c.l.b16 %v748
        %v2378 = vunpack.c.h.b16 %v748
        %v2379 = vunpack.c.l.b16 %v749
        %v2380 = vunpack.c.h.b16 %v749
        %v2381 = vunpack.c.l.b16 %v750
        %v2382 = vunpack.c.h.b16 %v750
        %v2383 = vunpack.c.l.b16 %v751
        %v2384 = vunpack.c.h.b16 %v751
        %v2385 = vunpack.c.l.b16 %v752
        %v2386 = vunpack.c.h.b16 %v752
        %v2387 = vunpack.c.l.b16 %v753
        %v2388 = vunpack.c.h.b16 %v753
        %v2389 = vunpack.c.l.b16 %v754
        %v2390 = vunpack.c.h.b16 %v754
        %v2391 = vunpack.c.l.b16 %v755
        %v2392 = vunpack.c.h.b16 %v755
        %v2393 = vunpack.c.l.b16 %v756
        %v2394 = vunpack.c.h.b16 %v756
        %v2395 = vunpack.c.l.b16 %v757
        %v2396 = vunpack.c.h.b16 %v757
        %v2397 = vunpack.c.l.b16 %v758
        %v2398 = vunpack.c.h.b16 %v758
        %v2399 = vunpack.c.l.b16 %v759
        %v2400 = vunpack.c.h.b16 %v759
        %v2401 = vunpack.c.l.b16 %v760
        %v2402 = vunpack.c.h.b16 %v760
        %v2403 = vunpack.c.l.b16 %v761
        %v2404 = vunpack.c.h.b16 %v761
        %v2405 = vunpack.c.l.b16 %v762
        %v2406 = vunpack.c.h.b16 %v762
        %v2407 = vunpack.c.l.b16 %v763
        %v2408 = vunpack.c.h.b16 %v763
        %v2409 = vunpack.c.l.b16 %v764
        %v2410 = vunpack.c.h.b16 %v764
        %v2411 = vunpack.c.l.b16 %v765
        %v2412 = vunpack.c.h.b16 %v765
        %v2413 = vunpack.c.l.b16 %v766
        %v2414 = vunpack.c.h.b16 %v766
        %v2415 = vunpack.c.l.b16 %v767
        %v2416 = vunpack.c.h.b16 %v767
        %v2417 = vunpack.c.l.b16 %v768
        %v2418 = vunpack.c.h.b16 %v768
        %v2419 = vunpack.c.l.b16 %v769
        %v2420 = vunpack.c.h.b16 %v769
        %v2421 = vunpack.c.l.b16 %v770
        %v2422 = vunpack.c.h.b16 %v770
        %v2423 = vunpack.c.l.b16 %v771
        %v2424 = vunpack.c.h.b16 %v771
        %v2425 = vunpack.c.l.b16 %v772
        %v2426 = vunpack.c.h.b16 %v772
        %v2427 = vunpack.c.l.b16 %v773
        %v2428 = vunpack.c.h.b16 %v773
        %v2429 = vunpack.c.l.b16 %v774
        %v2430 = vunpack.c.h.b16 %v774
        %v2431 = vunpack.c.l.b16 %v775
        %v2432 = vunpack.c.h.b16 %v775
        %v2433 = vunpack.c.l.b16 %v776
        %v2434 = vunpack.c.h.b16 %v776
        %v2435 = vunpack.c.l.b16 %v777
        %v2436 = vunpack.c.h.b16 %v777
        %v2437 = vunpack.c.l.b16 %v778
        %v2438 = vunpack.c.h.b16 %v778
        %v2439 = vunpack.c.l.b16 %v779
        %v2440 = vunpack.c.h.b16 %v779
        %v2441 = vunpack.c.l.b16 %v780
        %v2442 = vunpack.c.h.b16 %v780
        %v2443 = vunpack.c.l.b16 %v781
        %v2444 = vunpack.c.h.b16 %v781
        %v2445 = vunpack.c.l.b16 %v782
        %v2446 = vunpack.c.h.b16 %v782
        %v2447 = vunpack.c.l.b16 %v783
        %v2448 = vunpack.c.h.b16 %v783
        %v2449 = vunpack.c.l.b16 %v784
        %v2450 = vunpack.c.h.b16 %v784
        %v2451 = vunpack.c.l.b16 %v785
        %v2452 = vunpack.c.h.b16 %v785
        %v2453 = vunpack.c.l.b16 %v786
        %v2454 = vunpack.c.h.b16 %v786
        %v2455 = vunpack.c.l.b16 %v787
        %v2456 = vunpack.c.h.b16 %v787
        %v2457 = vunpack.c.l.b16 %v788
        %v2458 = vunpack.c.h.b16 %v788
        %v2459 = vunpack.c.l.b16 %v789
        %v2460 = vunpack.c.h.b16 %v789
        %v2461 = vunpack.c.l.b16 %v790
        %v2462 = vunpack.c.h.b16 %v790
        %v2463 = vunpack.c.l.b16 %v791
        %v2464 = vunpack.c.h.b16 %v791
        %v2465 = vunpack.c.l.b16 %v792
        %v2466 = vunpack.c.h.b16 %v792
        %v2467 = vunpack.c.l.b16 %v793
        %v2468 = vunpack.c.h.b16 %v793
        %v2469 = vunpack.c.l.b16 %v794
        %v2470 = vunpack.c.h.b16 %v794
        %v2471 = vunpack.c.l.b16 %v795
        %v2472 = vunpack.c.h.b16 %v795
        %v2473 = vunpack.c.l.b16 %v796
        %v2474 = vunpack.c.h.b16 %v796
        %v2475 = vunpack.c.l.b16 %v797
        %v2476 = vunpack.c.h.b16 %v797
        %v2477 = vunpack.c.l.b16 %v798
        %v2478 = vunpack.c.h.b16 %v798
        %v2479 = vunpack.c.l.b16 %v799
        %v2480 = vunpack.c.h.b16 %v799
        %v2481 = vunpack.c.l.b16 %v800
        %v2482 = vunpack.c.h.b16 %v800
        %v2483 = vunpack.c.l.b16 %v801
        %v2484 = vunpack.c.h.b16 %v801
        %v2485 = vunpack.c.l.b16 %v802
        %v2486 = vunpack.c.h.b16 %v802
        %v2487 = vunpack.c.l.b16 %v803
        %v2488 = vunpack.c.h.b16 %v803
        %v2489 = vunpack.c.l.b16 %v804
        %v2490 = vunpack.c.h.b16 %v804
        %v2491 = vunpack.c.l.b16 %v805
        %v2492 = vunpack.c.h.b16 %v805
        %v2493 = vunpack.c.l.b16 %v806
        %v2494 = vunpack.c.h.b16 %v806
        %v2495 = vunpack.c.l.b16 %v807
        %v2496 = vunpack.c.h.b16 %v807
        %v2497 = vunpack.c.l.b16 %v808
        %v2498 = vunpack.c.h.b16 %v808
        %v2499 = vunpack.c.l.b16 %v809
        %v2500 = vunpack.c.h.b16 %v809
        %v2501 = vunpack.c.l.b16 %v810
        %v2502 = vunpack.c.h.b16 %v810
        %v2503 = vunpack.c.l.b16 %v811
        %v2504 = vunpack.c.h.b16 %v811
        %v2505 = vunpack.c.l.b16 %v812
        %v2506 = vunpack.c.h.b16 %v812
        %v2507 = vunpack.c.l.b16 %v813
        %v2508 = vunpack.c.h.b16 %v813
        %v2509 = vunpack.c.l.b16 %v814
        %v2510 = vunpack.c.h.b16 %v814
        %v2511 = vunpack.c.l.b16 %v815
        %v2512 = vunpack.c.h.b16 %v815
        %v2513 = vunpack.c.l.b16 %v816
        %v2514 = vunpack.c.h.b16 %v816
        %v2515 = vunpack.c.l.b16 %v817
        %v2516 = vunpack.c.h.b16 %v817
        %v2517 = vunpack.c.l.b16 %v818
        %v2518 = vunpack.c.h.b16 %v818
        %v2519 = vunpack.c.l.b16 %v819
        %v2520 = vunpack.c.h.b16 %v819
        %v2521 = vunpack.c.l.b16 %v820
        %v2522 = vunpack.c.h.b16 %v820
        %v2523 = vunpack.c.l.b16 %v821
        %v2524 = vunpack.c.h.b16 %v821
        %v2525 = vunpack.c.l.b16 %v822
        %v2526 = vunpack.c.h.b16 %v822
        %v2527 = vunpack.c.l.b16 %v823
        %v2528 = vunpack.c.h.b16 %v823
        %v2529 = vunpack.c.l.b16 %v824
        %v2530 = vunpack.c.h.b16 %v824
        %v2531 = vunpack.c.l.b16 %v825
        %v2532 = vunpack.c.h.b16 %v825
        %v2533 = vunpack.c.l.b16 %v826
        %v2534 = vunpack.c.h.b16 %v826
        %v2535 = vunpack.c.l.b16 %v827
        %v2536 = vunpack.c.h.b16 %v827
        %v2537 = vunpack.c.l.b16 %v828
        %v2538 = vunpack.c.h.b16 %v828
        %v2539 = vunpack.c.l.b16 %v829
        %v2540 = vunpack.c.h.b16 %v829
        %v2541 = vunpack.c.l.b16 %v830
        %v2542 = vunpack.c.h.b16 %v830
        %v2543 = vunpack.c.l.b16 %v831
        %v2544 = vunpack.c.h.b16 %v831
        %v2545 = vunpack.c.l.b16 %v832
        %v2546 = vunpack.c.h.b16 %v832
        %v2547 = vunpack.c.l.b16 %v833
        %v2548 = vunpack.c.h.b16 %v833
        %v2549 = vunpack.c.l.b16 %v834
        %v2550 = vunpack.c.h.b16 %v834
        %v2551 = vunpack.c.l.b16 %v835
        %v2552 = vunpack.c.h.b16 %v835
        %v2553 = vunpack.c.l.b16 %v836
        %v2554 = vunpack.c.h.b16 %v836
        %v2555 = vunpack.c.l.b16 %v837
        %v2556 = vunpack.c.h.b16 %v837
        %v2557 = vunpack.c.l.b16 %v838
        %v2558 = vunpack.c.h.b16 %v838
        %v2559 = vunpack.c.l.b16 %v839
        %v2560 = vunpack.c.h.b16 %v839
        %v2561 = vunpack.c.l.b16 %v840
        %v2562 = vunpack.c.h.b16 %v840
        %v2563 = vunpack.c.l.b16 %v841
        %v2564 = vunpack.c.h.b16 %v841
        %v2565 = vunpack.c.l.b16 %v842
        %v2566 = vunpack.c.h.b16 %v842
        %v2567 = vunpack.c.l.b16 %v843
        %v2568 = vunpack.c.h.b16 %v843
        %v2569 = vunpack.c.l.b16 %v844
        %v2570 = vunpack.c.h.b16 %v844
        %v2571 = vunpack.c.l.b16 %v845
        %v2572 = vunpack.c.h.b16 %v845
        %v2573 = vunpack.c.l.b16 %v846
        %v2574 = vunpack.c.h.b16 %v846
        %v2575 = vunpack.c.l.b16 %v847
        %v2576 = vunpack.c.h.b16 %v847
        %v2577 = vunpack.c.l.b16 %v848
        %v2578 = vunpack.c.h.b16 %v848
        %v2579 = vunpack.c.l.b16 %v849
        %v2580 = vunpack.c.h.b16 %v849
        %v2581 = vunpack.c.l.b16 %v850
        %v2582 = vunpack.c.h.b16 %v850
        %v2583 = vunpack.c.l.b16 %v851
        %v2584 = vunpack.c.h.b16 %v851
        %v2585 = vunpack.c.l.b16 %v852
        %v2586 = vunpack.c.h.b16 %v852
        %v2587 = vunpack.c.l.b16 %v853
        %v2588 = vunpack.c.h.b16 %v853
        %v2589 = vunpack.c.l.b16 %v854
        %v2590 = vunpack.c.h.b16 %v854
        %v2591 = vunpack.c.l.b16 %v855
        %v2592 = vunpack.c.h.b16 %v855
        %v2593 = vunpack.c.l.b16 %v856
        %v2594 = vunpack.c.h.b16 %v856
        %v2595 = vunpack.c.l.b16 %v857
        %v2596 = vunpack.c.h.b16 %v857
        %v2597 = vpack.c.b16 %v1481, %v1445
        %v2598 = vpack.c.b16 %v1482, %v1446
        %v2599 = vpack.c.b16 %v1483, %v1447
        %v2600 = vpack.c.b16 %v1484, %v1448
        %v2601 = vpack.c.b16 %v1485, %v1449
        %v2602 = vpack.c.b16 %v1486, %v1450
        %v2603 = vpack.c.b16 %v1487, %v1451
        %v2604 = vpack.c.b16 %v1488, %v1452
        %v2605 = vpack.c.b16 %v1489, %v1453
        %v2606 = vpack.c.b16 %v1490, %v1454
        %v2607 = vpack.c.b16 %v1491, %v1455
        %v2608 = vpack.c.b16 %v1492, %v1456
        %v2609 = vpack.c.b16 %v1493, %v1457
        %v2610 = vpack.c.b16 %v1494, %v1458
        %v2611 = vpack.c.b16 %v1495, %v1459
        %v2612 = vpack.c.b16 %v1496, %v1460
        %v2613 = vpack.c.b16 %v1497, %v1461
        %v2614 = vpack.c.b16 %v1498, %v1462
        %v2615 = vpack.c.b16 %v1499, %v1463
        %v2616 = vpack.c.b16 %v1500, %v1464
        %v2617 = vpack.c.b16 %v1501, %v1465
        %v2618 = vpack.c.b16 %v1502, %v1466
        %v2619 = vpack.c.b16 %v1503, %v1467
        %v2620 = vpack.c.b16 %v1504, %v1468
        %v2621 = vpack.c.b16 %v1505, %v1469
        %v2622 = vpack.c.b16 %v1506, %v1470
        %v2623 = vpack.c.b16 %v1507, %v1471
        %v2624 = vpack.c.b16 %v1508, %v1472
        %v2625 = vpack.c.b16 %v1509, %v1473
        %v2626 = vpack.c.b16 %v1510, %v1474
        %v2627 = vpack.c.b16 %v1511, %v1475
        %v2628 = vpack.c.b16 %v1512, %v1476
        %v2629 = vpack.c.b16 %v1513, %v1477
        %v2630 = vpack.c.b16 %v1514, %v1478
        %v2631 = vpack.c.b16 %v1515, %v1479
        %v2632 = vpack.c.b16 %v1516, %v1480
        %v2633 = vpack.c.b16 %v1553, %v1517
        %v2634 = vpack.c.b16 %v1554, %v1518
        %v2635 = vpack.c.b16 %v1555, %v1519
        %v2636 = vpack.c.b16 %v1556, %v1520
        %v2637 = vpack.c.b16 %v1557, %v1521
        %v2638 = vpack.c.b16 %v1558, %v1522
        %v2639 = vpack.c.b16 %v1559, %v1523
        %v2640 = vpack.c.b16 %v1560, %v1524
        %v2641 = vpack.c.b16 %v1561, %v1525
        %v2642 = vpack.c.b16 %v1562, %v1526
        %v2643 = vpack.c.b16 %v1563, %v1527
        %v2644 = vpack.c.b16 %v1564, %v1528
        %v2645 = vpack.c.b16 %v1565, %v1529
        %v2646 = vpack.c.b16 %v1566, %v1530
        %v2647 = vpack.c.b16 %v1567, %v1531
        %v2648 = vpack.c.b16 %v1568, %v1532
        %v2649 = vpack.c.b16 %v1569, %v1533
        %v2650 = vpack.c.b16 %v1570, %v1534
        %v2651 = vpack.c.b16 %v1571, %v1535
        %v2652 = vpack.c.b16 %v1572, %v1536
        %v2653 = vpack.c.b16 %v1573, %v1537
        %v2654 = vpack.c.b16 %v1574, %v1538
        %v2655 = vpack.c.b16 %v1575, %v1539
        %v2656 = vpack.c.b16 %v1576, %v1540
        %v2657 = vpack.c.b16 %v1577, %v1541
        %v2658 = vpack.c.b16 %v1578, %v1542
        %v2659 = vpack.c.b16 %v1579, %v1543
        %v2660 = vpack.c.b16 %v1580, %v1544
        %v2661 = vpack.c.b16 %v1581, %v1545
        %v2662 = vpack.c.b16 %v1582, %v1546
        %v2663 = vpack.c.b16 %v1583, %v1547
        %v2664 = vpack.c.b16 %v1584, %v1548
        %v2665 = vpack.c.b16 %v1585, %v1549
        %v2666 = vpack.c.b16 %v1586, %v1550
        %v2667 = vpack.c.b16 %v1587, %v1551
        %v2668 = vpack.c.b16 %v1588, %v1552
        %v2669 = vpack.c.b16 %v1625, %v1589
        %v2670 = vpack.c.b16 %v1626, %v1590
        %v2671 = vpack.c.b16 %v1627, %v1591
        %v2672 = vpack.c.b16 %v1628, %v1592
        %v2673 = vpack.c.b16 %v1629, %v1593
        %v2674 = vpack.c.b16 %v1630, %v1594
        %v2675 = vpack.c.b16 %v1631, %v1595
        %v2676 = vpack.c.b16 %v1632, %v1596
        %v2677 = vpack.c.b16 %v1633, %v1597
        %v2678 = vpack.c.b16 %v1634, %v1598
        %v2679 = vpack.c.b16 %v1635, %v1599
        %v2680 = vpack.c.b16 %v1636, %v1600
        %v2681 = vpack.c.b16 %v1637, %v1601
        %v2682 = vpack.c.b16 %v1638, %v1602
        %v2683 = vpack.c.b16 %v1639, %v1603
        %v2684 = vpack.c.b16 %v1640, %v1604
        %v2685 = vpack.c.b16 %v1641, %v1605
        %v2686 = vpack.c.b16 %v1642, %v1606
        %v2687 = vpack.c.b16 %v1643, %v1607
        %v2688 = vpack.c.b16 %v1644, %v1608
        %v2689 = vpack.c.b16 %v1645, %v1609
        %v2690 = vpack.c.b16 %v1646, %v1610
        %v2691 = vpack.c.b16 %v1647, %v1611
        %v2692 = vpack.c.b16 %v1648, %v1612
        %v2693 = vpack.c.b16 %v1649, %v1613
        %v2694 = vpack.c.b16 %v1650, %v1614
        %v2695 = vpack.c.b16 %v1651, %v1615
        %v2696 = vpack.c.b16 %v1652, %v1616
        %v2697 = vpack.c.b16 %v1653, %v1617
        %v2698 = vpack.c.b16 %v1654, %v1618
        %v2699 = vpack.c.b16 %v1655, %v1619
        %v2700 = vpack.c.b16 %v1656, %v1620
        %v2701 = vpack.c.b16 %v1657, %v1621
        %v2702 = vpack.c.b16 %v1658, %v1622
        %v2703 = vpack.c.b16 %v1659, %v1623
        %v2704 = vpack.c.b16 %v1660, %v1624
        %v2705 = vpack.c.b16 %v1697, %v1661
        %v2706 = vpack.c.b16 %v1698, %v1662
        %v2707 = vpack.c.b16 %v1699, %v1663
        %v2708 = vpack.c.b16 %v1700, %v1664
        %v2709 = vpack.c.b16 %v1701, %v1665
        %v2710 = vpack.c.b16 %v1702, %v1666
        %v2711 = vpack.c.b16 %v1703, %v1667
        %v2712 = vpack.c.b16 %v1704, %v1668
        %v2713 = vpack.c.b16 %v1705, %v1669
        %v2714 = vpack.c.b16 %v1706, %v1670
        %v2715 = vpack.c.b16 %v1707, %v1671
        %v2716 = vpack.c.b16 %v1708, %v1672
        %v2717 = vpack.c.b16 %v1709, %v1673
        %v2718 = vpack.c.b16 %v1710, %v1674
        %v2719 = vpack.c.b16 %v1711, %v1675
        %v2720 = vpack.c.b16 %v1712, %v1676
        %v2721 = vpack.c.b16 %v1713, %v1677
        %v2722 = vpack.c.b16 %v1714, %v1678
        %v2723 = vpack.c.b16 %v1715, %v1679
        %v2724 = vpack.c.b16 %v1716, %v1680
        %v2725 = vpack.c.b16 %v1717, %v1681
        %v2726 = vpack.c.b16 %v1718, %v1682
        %v2727 = vpack.c.b16 %v1719, %v1683
        %v2728 = vpack.c.b16 %v1720, %v1684
        %v2729 = vpack.c.b16 %v1721, %v1685
        %v2730 = vpack.c.b16 %v1722, %v1686
        %v2731 = vpack.c.b16 %v1723, %v1687
        %v2732 = vpack.c.b16 %v1724, %v1688
        %v2733 = vpack.c.b16 %v1725, %v1689
        %v2734 = vpack.c.b16 %v1726, %v1690
        %v2735 = vpack.c.b16 %v1727, %v1691
        %v2736 = vpack.c.b16 %v1728, %v1692
        %v2737 = vpack.c.b16 %v1729, %v1693
        %v2738 = vpack.c.b16 %v1730, %v1694
        %v2739 = vpack.c.b16 %v1731, %v1695
        %v2740 = vpack.c.b16 %v1732, %v1696
        %v2741 = vpack.c.b16 %v1769, %v1733
        %v2742 = vpack.c.b16 %v1770, %v1734
        %v2743 = vpack.c.b16 %v1771, %v1735
        %v2744 = vpack.c.b16 %v1772, %v1736
        %v2745 = vpack.c.b16 %v1773, %v1737
        %v2746 = vpack.c.b16 %v1774, %v1738
        %v2747 = vpack.c.b16 %v1775, %v1739
        %v2748 = vpack.c.b16 %v1776, %v1740
        %v2749 = vpack.c.b16 %v1777, %v1741
        %v2750 = vpack.c.b16 %v1778, %v1742
        %v2751 = vpack.c.b16 %v1779, %v1743
        %v2752 = vpack.c.b16 %v1780, %v1744
        %v2753 = vpack.c.b16 %v1781, %v1745
        %v2754 = vpack.c.b16 %v1782, %v1746
        %v2755 = vpack.c.b16 %v1783, %v1747
        %v2756 = vpack.c.b16 %v1784, %v1748
        %v2757 = vpack.c.b16 %v1785, %v1749
        %v2758 = vpack.c.b16 %v1786, %v1750
        %v2759 = vpack.c.b16 %v1787, %v1751
        %v2760 = vpack.c.b16 %v1788, %v1752
        %v2761 = vpack.c.b16 %v1789, %v1753
        %v2762 = vpack.c.b16 %v1790, %v1754
        %v2763 = vpack.c.b16 %v1791, %v1755
        %v2764 = vpack.c.b16 %v1792, %v1756
        %v2765 = vpack.c.b16 %v1793, %v1757
        %v2766 = vpack.c.b16 %v1794, %v1758
        %v2767 = vpack.c.b16 %v1795, %v1759
        %v2768 = vpack.c.b16 %v1796, %v1760
        %v2769 = vpack.c.b16 %v1797, %v1761
        %v2770 = vpack.c.b16 %v1798, %v1762
        %v2771 = vpack.c.b16 %v1799, %v1763
        %v2772 = vpack.c.b16 %v1800, %v1764
        %v2773 = vpack.c.b16 %v1801, %v1765
        %v2774 = vpack.c.b16 %v1802, %v1766
        %v2775 = vpack.c.b16 %v1803, %v1767
        %v2776 = vpack.c.b16 %v1804, %v1768
        %v2777 = vpack.c.b16 %v1841, %v1805
        %v2778 = vpack.c.b16 %v1842, %v1806
        %v2779 = vpack.c.b16 %v1843, %v1807
        %v2780 = vpack.c.b16 %v1844, %v1808
        %v2781 = vpack.c.b16 %v1845, %v1809
        %v2782 = vpack.c.b16 %v1846, %v1810
        %v2783 = vpack.c.b16 %v1847, %v1811
        %v2784 = vpack.c.b16 %v1848, %v1812
        %v2785 = vpack.c.b16 %v1849, %v1813
        %v2786 = vpack.c.b16 %v1850, %v1814
        %v2787 = vpack.c.b16 %v1851, %v1815
        %v2788 = vpack.c.b16 %v1852, %v1816
        %v2789 = vpack.c.b16 %v1853, %v1817
        %v2790 = vpack.c.b16 %v1854, %v1818
        %v2791 = vpack.c.b16 %v1855, %v1819
        %v2792 = vpack.c.b16 %v1856, %v1820
        %v2793 = vpack.c.b16 %v1857, %v1821
        %v2794 = vpack.c.b16 %v1858, %v1822
        %v2795 = vpack.c.b16 %v1859, %v1823
        %v2796 = vpack.c.b16 %v1860, %v1824
        %v2797 = vpack.c.b16 %v1861, %v1825
        %v2798 = vpack.c.b16 %v1862, %v1826
        %v2799 = vpack.c.b16 %v1863, %v1827
        %v2800 = vpack.c.b16 %v1864, %v1828
        %v2801 = vpack.c.b16 %v1865, %v1829
        %v2802 = vpack.c.b16 %v1866, %v1830
        %v2803 = vpack.c.b16 %v1867, %v1831
        %v2804 = vpack.c.b16 %v1868, %v1832
        %v2805 = vpack.c.b16 %v1869, %v1833
        %v2806 = vpack.c.b16 %v1870, %v1834
        %v2807 = vpack.c.b16 %v1871, %v1835
        %v2808 = vpack.c.b16 %v1872, %v1836
        %v2809 = vpack.c.b16 %v1873, %v1837
        %v2810 = vpack.c.b16 %v1874, %v1838
        %v2811 = vpack.c.b16 %v1875, %v1839
        %v2812 = vpack.c.b16 %v1876, %v1840
        %v2813 = vpack.c.b16 %v1913, %v1877
        %v2814 = vpack.c.b16 %v1914, %v1878
        %v2815 = vpack.c.b16 %v1915, %v1879
        %v2816 = vpack.c.b16 %v1916, %v1880
        %v2817 = vpack.c.b16 %v1917, %v1881
        %v2818 = vpack.c.b16 %v1918, %v1882
        %v2819 = vpack.c.b16 %v1919, %v1883
        %v2820 = vpack.c.b16 %v1920, %v1884
        %v2821 = vpack.c.b16 %v1921, %v1885
        %v2822 = vpack.c.b16 %v1922, %v1886
        %v2823 = vpack.c.b16 %v1923, %v1887
        %v2824 = vpack.c.b16 %v1924, %v1888
        %v2825 = vpack.c.b16 %v1925, %v1889
        %v2826 = vpack.c.b16 %v1926, %v1890
        %v2827 = vpack.c.b16 %v1927, %v1891
        %v2828 = vpack.c.b16 %v1928, %v1892
        %v2829 = vpack.c.b16 %v1929, %v1893
        %v2830 = vpack.c.b16 %v1930, %v1894
        %v2831 = vpack.c.b16 %v1931, %v1895
        %v2832 = vpack.c.b16 %v1932, %v1896
        %v2833 = vpack.c.b16 %v1933, %v1897
        %v2834 = vpack.c.b16 %v1934, %v1898
        %v2835 = vpack.c.b16 %v1935, %v1899
        %v2836 = vpack.c.b16 %v1936, %v1900
        %v2837 = vpack.c.b16 %v1937, %v1901
        %v2838 = vpack.c.b16 %v1938, %v1902
        %v2839 = vpack.c.b16 %v1939, %v1903
        %v2840 = vpack.c.b16 %v1940, %v1904
        %v2841 = vpack.c.b16 %v1941, %v1905
        %v2842 = vpack.c.b16 %v1942, %v1906
        %v2843 = vpack.c.b16 %v1943, %v1907
        %v2844 = vpack.c.b16 %v1944, %v1908
        %v2845 = vpack.c.b16 %v1945, %v1909
        %v2846 = vpack.c.b16 %v1946, %v1910
        %v2847 = vpack.c.b16 %v1947, %v1911
        %v2848 = vpack.c.b16 %v1948, %v1912
        %v2849 = vpack.c.b16 %v1985, %v1949
        %v2850 = vpack.c.b16 %v1986, %v1950
        %v2851 = vpack.c.b16 %v1987, %v1951
        %v2852 = vpack.c.b16 %v1988, %v1952
        %v2853 = vpack.c.b16 %v1989, %v1953
        %v2854 = vpack.c.b16 %v1990, %v1954
        %v2855 = vpack.c.b16 %v1991, %v1955
        %v2856 = vpack.c.b16 %v1992, %v1956
        %v2857 = vpack.c.b16 %v1993, %v1957
        %v2858 = vpack.c.b16 %v1994, %v1958
        %v2859 = vpack.c.b16 %v1995, %v1959
        %v2860 = vpack.c.b16 %v1996, %v1960
        %v2861 = vpack.c.b16 %v1997, %v1961
        %v2862 = vpack.c.b16 %v1998, %v1962
        %v2863 = vpack.c.b16 %v1999, %v1963
        %v2864 = vpack.c.b16 %v2000, %v1964
        %v2865 = vpack.c.b16 %v2001, %v1965
        %v2866 = vpack.c.b16 %v2002, %v1966
        %v2867 = vpack.c.b16 %v2003, %v1967
        %v2868 = vpack.c.b16 %v2004, %v1968
        %v2869 = vpack.c.b16 %v2005, %v1969
        %v2870 = vpack.c.b16 %v2006, %v1970
        %v2871 = vpack.c.b16 %v2007, %v1971
        %v2872 = vpack.c.b16 %v2008, %v1972
        %v2873 = vpack.c.b16 %v2009, %v1973
        %v2874 = vpack.c.b16 %v2010, %v1974
        %v2875 = vpack.c.b16 %v2011, %v1975
        %v2876 = vpack.c.b16 %v2012, %v1976
        %v2877 = vpack.c.b16 %v2013, %v1977
        %v2878 = vpack.c.b16 %v2014, %v1978
        %v2879 = vpack.c.b16 %v2015, %v1979
        %v2880 = vpack.c.b16 %v2016, %v1980
        %v2881 = vpack.c.b16 %v2017, %v1981
        %v2882 = vpack.c.b16 %v2018, %v1982
        %v2883 = vpack.c.b16 %v2019, %v1983
        %v2884 = vpack.c.b16 %v2020, %v1984
        %v2885 = vpack.c.b16 %v2057, %v2021
        %v2886 = vpack.c.b16 %v2058, %v2022
        %v2887 = vpack.c.b16 %v2059, %v2023
        %v2888 = vpack.c.b16 %v2060, %v2024
        %v2889 = vpack.c.b16 %v2061, %v2025
        %v2890 = vpack.c.b16 %v2062, %v2026
        %v2891 = vpack.c.b16 %v2063, %v2027
        %v2892 = vpack.c.b16 %v2064, %v2028
        %v2893 = vpack.c.b16 %v2065, %v2029
        %v2894 = vpack.c.b16 %v2066, %v2030
        %v2895 = vpack.c.b16 %v2067, %v2031
        %v2896 = vpack.c.b16 %v2068, %v2032
        %v2897 = vpack.c.b16 %v2069, %v2033
        %v2898 = vpack.c.b16 %v2070, %v2034
        %v2899 = vpack.c.b16 %v2071, %v2035
        %v2900 = vpack.c.b16 %v2072, %v2036
        %v2901 = vpack.c.b16 %v2073, %v2037
        %v2902 = vpack.c.b16 %v2074, %v2038
        %v2903 = vpack.c.b16 %v2075, %v2039
        %v2904 = vpack.c.b16 %v2076, %v2040
        %v2905 = vpack.c.b16 %v2077, %v2041
        %v2906 = vpack.c.b16 %v2078, %v2042
        %v2907 = vpack.c.b16 %v2079, %v2043
        %v2908 = vpack.c.b16 %v2080, %v2044
        %v2909 = vpack.c.b16 %v2081, %v2045
        %v2910 = vpack.c.b16 %v2082, %v2046
        %v2911 = vpack.c.b16 %v2083, %v2047
        %v2912 = vpack.c.b16 %v2084, %v2048
        %v2913 = vpack.c.b16 %v2085, %v2049
        %v2914 = vpack.c.b16 %v2086, %v2050
        %v2915 = vpack.c.b16 %v2087, %v2051
        %v2916 = vpack.c.b16 %v2088, %v2052
        %v2917 = vpack.c.b16 %v2089, %v2053
        %v2918 = vpack.c.b16 %v2090, %v2054
        %v2919 = vpack.c.b16 %v2091, %v2055
        %v2920 = vpack.c.b16 %v2092, %v2056
        %v2921 = vpack.c.b16 %v2129, %v2093
        %v2922 = vpack.c.b16 %v2130, %v2094
        %v2923 = vpack.c.b16 %v2131, %v2095
        %v2924 = vpack.c.b16 %v2132, %v2096
        %v2925 = vpack.c.b16 %v2133, %v2097
        %v2926 = vpack.c.b16 %v2134, %v2098
        %v2927 = vpack.c.b16 %v2135, %v2099
        %v2928 = vpack.c.b16 %v2136, %v2100
        %v2929 = vpack.c.b16 %v2137, %v2101
        %v2930 = vpack.c.b16 %v2138, %v2102
        %v2931 = vpack.c.b16 %v2139, %v2103
        %v2932 = vpack.c.b16 %v2140, %v2104
        %v2933 = vpack.c.b16 %v2141, %v2105
        %v2934 = vpack.c.b16 %v2142, %v2106
        %v2935 = vpack.c.b16 %v2143, %v2107
        %v2936 = vpack.c.b16 %v2144, %v2108
        %v2937 = vpack.c.b16 %v2145, %v2109
        %v2938 = vpack.c.b16 %v2146, %v2110
        %v2939 = vpack.c.b16 %v2147, %v2111
        %v2940 = vpack.c.b16 %v2148, %v2112
        %v2941 = vpack.c.b16 %v2149, %v2113
        %v2942 = vpack.c.b16 %v2150, %v2114
        %v2943 = vpack.c.b16 %v2151, %v2115
        %v2944 = vpack.c.b16 %v2152, %v2116
        %v2945 = vpack.c.b16 %v2153, %v2117
        %v2946 = vpack.c.b16 %v2154, %v2118
        %v2947 = vpack.c.b16 %v2155, %v2119
        %v2948 = vpack.c.b16 %v2156, %v2120
        %v2949 = vpack.c.b16 %v2157, %v2121
        %v2950 = vpack.c.b16 %v2158, %v2122
        %v2951 = vpack.c.b16 %v2159, %v2123
        %v2952 = vpack.c.b16 %v2160, %v2124
        %v2953 = vpack.c.b16 %v2161, %v2125
        %v2954 = vpack.c.b16 %v2162, %v2126
        %v2955 = vpack.c.b16 %v2163, %v2127
        %v2956 = vpack.c.b16 %v2164, %v2128
        %v2957 = vpack.c.b16 %v2201, %v2165
        %v2958 = vpack.c.b16 %v2202, %v2166
        %v2959 = vpack.c.b16 %v2203, %v2167
        %v2960 = vpack.c.b16 %v2204, %v2168
        %v2961 = vpack.c.b16 %v2205, %v2169
        %v2962 = vpack.c.b16 %v2206, %v2170
        %v2963 = vpack.c.b16 %v2207, %v2171
        %v2964 = vpack.c.b16 %v2208, %v2172
        %v2965 = vpack.c.b16 %v2209, %v2173
        %v2966 = vpack.c.b16 %v2210, %v2174
        %v2967 = vpack.c.b16 %v2211, %v2175
        %v2968 = vpack.c.b16 %v2212, %v2176
        %v2969 = vpack.c.b16 %v2213, %v2177
        %v2970 = vpack.c.b16 %v2214, %v2178
        %v2971 = vpack.c.b16 %v2215, %v2179
        %v2972 = vpack.c.b16 %v2216, %v2180
        %v2973 = vpack.c.b16 %v2217, %v2181
        %v2974 = vpack.c.b16 %v2218, %v2182
        %v2975 = vpack.c.b16 %v2219, %v2183
        %v2976 = vpack.c.b16 %v2220, %v2184
        %v2977 = vpack.c.b16 %v2221, %v2185
        %v2978 = vpack.c.b16 %v2222, %v2186
        %v2979 = vpack.c.b16 %v2223, %v2187
        %v2980 = vpack.c.b16 %v2224, %v2188
        %v2981 = vpack.c.b16 %v2225, %v2189
        %v2982 = vpack.c.b16 %v2226, %v2190
        %v2983 = vpack.c.b16 %v2227, %v2191
        %v2984 = vpack.c.b16 %v2228, %v2192
        %v2985 = vpack.c.b16 %v2229, %v2193
        %v2986 = vpack.c.b16 %v2230, %v2194
        %v2987 = vpack.c.b16 %v2231, %v2195
        %v2988 = vpack.c.b16 %v2232, %v2196
        %v2989 = vpack.c.b16 %v2233, %v2197
        %v2990 = vpack.c.b16 %v2234, %v2198
        %v2991 = vpack.c.b16 %v2235, %v2199
        %v2992 = vpack.c.b16 %v2236, %v2200
        %v2993 = vpack.c.b16 %v2273, %v2237
        %v2994 = vpack.c.b16 %v2274, %v2238
        %v2995 = vpack.c.b16 %v2275, %v2239
        %v2996 = vpack.c.b16 %v2276, %v2240
        %v2997 = vpack.c.b16 %v2277, %v2241
        %v2998 = vpack.c.b16 %v2278, %v2242
        %v2999 = vpack.c.b16 %v2279, %v2243
        %v3000 = vpack.c.b16 %v2280, %v2244
        %v3001 = vpack.c.b16 %v2281, %v2245
        %v3002 = vpack.c.b16 %v2282, %v2246
        %v3003 = vpack.c.b16 %v2283, %v2247
        %v3004 = vpack.c.b16 %v2284, %v2248
        %v3005 = vpack.c.b16 %v2285, %v2249
        %v3006 = vpack.c.b16 %v2286, %v2250
        %v3007 = vpack.c.b16 %v2287, %v2251
        %v3008 = vpack.c.b16 %v2288, %v2252
        %v3009 = vpack.c.b16 %v2289, %v2253
        %v3010 = vpack.c.b16 %v2290, %v2254
        %v3011 = vpack.c.b16 %v2291, %v2255
        %v3012 = vpack.c.b16 %v2292, %v2256
        %v3013 = vpack.c.b16 %v2293, %v2257
        %v3014 = vpack.c.b16 %v2294, %v2258
        %v3015 = vpack.c.b16 %v2295, %v2259
        %v3016 = vpack.c.b16 %v2296, %v2260
        %v3017 = vpack.c.b16 %v2297, %v2261
        %v3018 = vpack.c.b16 %v2298, %v2262
        %v3019 = vpack.c.b16 %v2299, %v2263
        %v3020 = vpack.c.b16 %v2300, %v2264
        %v3021 = vpack.c.b16 %v2301, %v2265
        %v3022 = vpack.c.b16 %v2302, %v2266
        %v3023 = vpack.c.b16 %v2303, %v2267
        %v3024 = vpack.c.b16 %v2304, %v2268
        %v3025 = vpack.c.b16 %v2305, %v2269
        %v3026 = vpack.c.b16 %v2306, %v2270
        %v3027 = vpack.c.b16 %v2307, %v2271
        %v3028 = vpack.c.b16 %v2308, %v2272
        %v3029 = vpack.c.b16 %v2345, %v2309
        %v3030 = vpack.c.b16 %v2346, %v2310
        %v3031 = vpack.c.b16 %v2347, %v2311
        %v3032 = vpack.c.b16 %v2348, %v2312
        %v3033 = vpack.c.b16 %v2349, %v2313
        %v3034 = vpack.c.b16 %v2350, %v2314
        %v3035 = vpack.c.b16 %v2351, %v2315
        %v3036 = vpack.c.b16 %v2352, %v2316
        %v3037 = vpack.c.b16 %v2353, %v2317
        %v3038 = vpack.c.b16 %v2354, %v2318
        %v3039 = vpack.c.b16 %v2355, %v2319
        %v3040 = vpack.c.b16 %v2356, %v2320
        %v3041 = vpack.c.b16 %v2357, %v2321
        %v3042 = vpack.c.b16 %v2358, %v2322
        %v3043 = vpack.c.b16 %v2359, %v2323
        %v3044 = vpack.c.b16 %v2360, %v2324
        %v3045 = vpack.c.b16 %v2361, %v2325
        %v3046 = vpack.c.b16 %v2362, %v2326
        %v3047 = vpack.c.b16 %v2363, %v2327
        %v3048 = vpack.c.b16 %v2364, %v2328
        %v3049 = vpack.c.b16 %v2365, %v2329
        %v3050 = vpack.c.b16 %v2366, %v2330
        %v3051 = vpack.c.b16 %v2367, %v2331
        %v3052 = vpack.c.b16 %v2368, %v2332
        %v3053 = vpack.c.b16 %v2369, %v2333
        %v3054 = vpack.c.b16 %v2370, %v2334
        %v3055 = vpack.c.b16 %v2371, %v2335
        %v3056 = vpack.c.b16 %v2372, %v2336
        %v3057 = vpack.c.b16 %v2373, %v2337
        %v3058 = vpack.c.b16 %v2374, %v2338
        %v3059 = vpack.c.b16 %v2375, %v2339
        %v3060 = vpack.c.b16 %v2376, %v2340
        %v3061 = vpack.c.b16 %v2377, %v2341
        %v3062 = vpack.c.b16 %v2378, %v2342
        %v3063 = vpack.c.b16 %v2379, %v2343
        %v3064 = vpack.c.b16 %v2380, %v2344
        %v3065 = vpack.c.b16 %v2417, %v2381
        %v3066 = vpack.c.b16 %v2418, %v2382
        %v3067 = vpack.c.b16 %v2419, %v2383
        %v3068 = vpack.c.b16 %v2420, %v2384
        %v3069 = vpack.c.b16 %v2421, %v2385
        %v3070 = vpack.c.b16 %v2422, %v2386
        %v3071 = vpack.c.b16 %v2423, %v2387
        %v3072 = vpack.c.b16 %v2424, %v2388
        %v3073 = vpack.c.b16 %v2425, %v2389
        %v3074 = vpack.c.b16 %v2426, %v2390
        %v3075 = vpack.c.b16 %v2427, %v2391
        %v3076 = vpack.c.b16 %v2428, %v2392
        %v3077 = vpack.c.b16 %v2429, %v2393
        %v3078 = vpack.c.b16 %v2430, %v2394
        %v3079 = vpack.c.b16 %v2431, %v2395
        %v3080 = vpack.c.b16 %v2432, %v2396
        %v3081 = vpack.c.b16 %v2433, %v2397
        %v3082 = vpack.c.b16 %v2434, %v2398
        %v3083 = vpack.c.b16 %v2435, %v2399
        %v3084 = vpack.c.b16 %v2436, %v2400
        %v3085 = vpack.c.b16 %v2437, %v2401
        %v3086 = vpack.c.b16 %v2438, %v2402
        %v3087 = vpack.c.b16 %v2439, %v2403
        %v3088 = vpack.c.b16 %v2440, %v2404
        %v3089 = vpack.c.b16 %v2441, %v2405
        %v3090 = vpack.c.b16 %v2442, %v2406
        %v3091 = vpack.c.b16 %v2443, %v2407
        %v3092 = vpack.c.b16 %v2444, %v2408
        %v3093 = vpack.c.b16 %v2445, %v2409
        %v3094 = vpack.c.b16 %v2446, %v2410
        %v3095 = vpack.c.b16 %v2447, %v2411
        %v3096 = vpack.c.b16 %v2448, %v2412
        %v3097 = vpack.c.b16 %v2449, %v2413
        %v3098 = vpack.c.b16 %v2450, %v2414
        %v3099 = vpack.c.b16 %v2451, %v2415
        %v3100 = vpack.c.b16 %v2452, %v2416
        %v3101 = vpack.c.b16 %v2489, %v2453
        %v3102 = vpack.c.b16 %v2490, %v2454
        %v3103 = vpack.c.b16 %v2491, %v2455
        %v3104 = vpack.c.b16 %v2492, %v2456
        %v3105 = vpack.c.b16 %v2493, %v2457
        %v3106 = vpack.c.b16 %v2494, %v2458
        %v3107 = vpack.c.b16 %v2495, %v2459
        %v3108 = vpack.c.b16 %v2496, %v2460
        %v3109 = vpack.c.b16 %v2497, %v2461
        %v3110 = vpack.c.b16 %v2498, %v2462
        %v3111 = vpack.c.b16 %v2499, %v2463
        %v3112 = vpack.c.b16 %v2500, %v2464
        %v3113 = vpack.c.b16 %v2501, %v2465
        %v3114 = vpack.c.b16 %v2502, %v2466
        %v3115 = vpack.c.b16 %v2503, %v2467
        %v3116 = vpack.c.b16 %v2504, %v2468
        %v3117 = vpack.c.b16 %v2505, %v2469
        %v3118 = vpack.c.b16 %v2506, %v2470
        %v3119 = vpack.c.b16 %v2507, %v2471
        %v3120 = vpack.c.b16 %v2508, %v2472
        %v3121 = vpack.c.b16 %v2509, %v2473
        %v3122 = vpack.c.b16 %v2510, %v2474
        %v3123 = vpack.c.b16 %v2511, %v2475
        %v3124 = vpack.c.b16 %v2512, %v2476
        %v3125 = vpack.c.b16 %v2513, %v2477
        %v3126 = vpack.c.b16 %v2514, %v2478
        %v3127 = vpack.c.b16 %v2515, %v2479
        %v3128 = vpack.c.b16 %v2516, %v2480
        %v3129 = vpack.c.b16 %v2517, %v2481
        %v3130 = vpack.c.b16 %v2518, %v2482
        %v3131 = vpack.c.b16 %v2519, %v2483
        %v3132 = vpack.c.b16 %v2520, %v2484
        %v3133 = vpack.c.b16 %v2521, %v2485
        %v3134 = vpack.c.b16 %v2522, %v2486
        %v3135 = vpack.c.b16 %v2523, %v2487
        %v3136 = vpack.c.b16 %v2524, %v2488
        %v3137 = vpack.c.b16 %v2561, %v2525
        %v3138 = vpack.c.b16 %v2562, %v2526
        %v3139 = vpack.c.b16 %v2563, %v2527
        %v3140 = vpack.c.b16 %v2564, %v2528
        %v3141 = vpack.c.b16 %v2565, %v2529
        %v3142 = vpack.c.b16 %v2566, %v2530
        %v3143 = vpack.c.b16 %v2567, %v2531
        %v3144 = vpack.c.b16 %v2568, %v2532
        %v3145 = vpack.c.b16 %v2569, %v2533
        %v3146 = vpack.c.b16 %v2570, %v2534
        %v3147 = vpack.c.b16 %v2571, %v2535
        %v3148 = vpack.c.b16 %v2572, %v2536
        %v3149 = vpack.c.b16 %v2573, %v2537
        %v3150 = vpack.c.b16 %v2574, %v2538
        %v3151 = vpack.c.b16 %v2575, %v2539
        %v3152 = vpack.c.b16 %v2576, %v2540
        %v3153 = vpack.c.b16 %v2577, %v2541
        %v3154 = vpack.c.b16 %v2578, %v2542
        %v3155 = vpack.c.b16 %v2579, %v2543
        %v3156 = vpack.c.b16 %v2580, %v2544
        %v3157 = vpack.c.b16 %v2581, %v2545
        %v3158 = vpack.c.b16 %v2582, %v2546
        %v3159 = vpack.c.b16 %v2583, %v2547
        %v3160 = vpack.c.b16 %v2584, %v2548
        %v3161 = vpack.c.b16 %v2585, %v2549
        %v3162 = vpack.c.b16 %v2586, %v2550
        %v3163 = vpack.c.b16 %v2587, %v2551
        %v3164 = vpack.c.b16 %v2588, %v2552
        %v3165 = vpack.c.b16 %v2589, %v2553
        %v3166 = vpack.c.b16 %v2590, %v2554
        %v3167 = vpack.c.b16 %v2591, %v2555
        %v3168 = vpack.c.b16 %v2592, %v2556
        %v3169 = vpack.c.b16 %v2593, %v2557
        %v3170 = vpack.c.b16 %v2594, %v2558
        %v3171 = vpack.c.b16 %v2595, %v2559
        %v3172 = vpack.c.b16 %v2596, %v2560
        %3749 = vmatprep.subr.bf16.mxu0 %v2850
        %3750 = vmatpush1.bf16.msra.mxu0 %v2849
        %3751 = vmatprep.subr.bf16.mxu0 %v2814
        %3752 = vmatpush1.bf16.msra.mxu0 %v2813
        %3753 = vmatprep.subr.bf16.mxu0 %v2778
        %3754 = vmatpush1.bf16.msra.mxu0 %v2777
        %3755 = vmatprep.subr.bf16.mxu0 %v2742
        %3756 = vmatpush1.bf16.msra.mxu0 %v2741
        %3757 = vmatprep.subr.bf16.mxu0 %v2706
        %3758 = vmatpush1.bf16.msra.mxu0 %v2705
        %3759 = vmatprep.subr.bf16.mxu0 %v2670
        %3760 = vmatpush1.bf16.msra.mxu0 %v2669
        %3761 = vmatprep.subr.bf16.mxu0 %v2634
        %3762 = vmatpush1.bf16.msra.mxu0 %v2633
        %3763 = vmatprep.subr.bf16.mxu0 %v2598
        %3764 = vmatpush1.bf16.msra.mxu0 %v2597
        %3765 = vmatprep.subr.bf16.mxu0 %v3138
        %3766 = vmatpush2.bf16.msra.mxu0 %v3137
        %3767 = vmatprep.subr.bf16.mxu0 %v3102
        %3768 = vmatpush2.bf16.msra.mxu0 %v3101
        %3769 = vmatprep.subr.bf16.mxu0 %v3066
        %3770 = vmatpush2.bf16.msra.mxu0 %v3065
        %3771 = vmatprep.subr.bf16.mxu0 %v3030
        %3772 = vmatpush2.bf16.msra.mxu0 %v3029
        %3773 = vmatprep.subr.bf16.mxu0 %v2994
        %3774 = vmatpush2.bf16.msra.mxu0 %v2993
        %3775 = vmatprep.subr.bf16.mxu0 %v2958
        %3776 = vmatpush2.bf16.msra.mxu0 %v2957
        %3777 = vmatprep.subr.bf16.mxu0 %v2922
        %3778 = vmatpush2.bf16.msra.mxu0 %v2921
        %3779 = vmatprep.subr.bf16.mxu0 %v2886
        %3780 = vmatpush2.bf16.msra.mxu0 %v2885
        %3781 = vmatprep.mubr.bf16.mxu0 %v866
        %3782 = vmatmul.mubr.bf16.gmra.mxu0 %v865
        %v3783 = vpop.f32.mrf.mxu0
        %v3784 = vadd.f32 0.0, %v3783
        %v3785 = vpop.f32.mrf.mxu0
        %v3786 = vadd.f32 0.0, %v3785
        %v3787 = vpop.f32.mrf.mxu0
        %v3788 = vpop.f32.mrf.mxu0
        %3789 = vdwg.mxu0
        %3790 = vmatprep.subr.bf16.mxu0 %v2852
        %3791 = vmatpush1.bf16.msra.mxu0 %v2851
        %3792 = vmatprep.subr.bf16.mxu0 %v2816
        %3793 = vmatpush1.bf16.msra.mxu0 %v2815
        %3794 = vmatprep.subr.bf16.mxu0 %v2780
        %3795 = vmatpush1.bf16.msra.mxu0 %v2779
        %3796 = vmatprep.subr.bf16.mxu0 %v2744
        %3797 = vmatpush1.bf16.msra.mxu0 %v2743
        %3798 = vmatprep.subr.bf16.mxu0 %v2708
        %3799 = vmatpush1.bf16.msra.mxu0 %v2707
        %3800 = vmatprep.subr.bf16.mxu0 %v2672
        %3801 = vmatpush1.bf16.msra.mxu0 %v2671
        %3802 = vmatprep.subr.bf16.mxu0 %v2636
        %3803 = vmatpush1.bf16.msra.mxu0 %v2635
        %3804 = vmatprep.subr.bf16.mxu0 %v2600
        %3805 = vmatpush1.bf16.msra.mxu0 %v2599
        %3806 = vmatprep.subr.bf16.mxu0 %v3140
        %3807 = vmatpush2.bf16.msra.mxu0 %v3139
        %3808 = vmatprep.subr.bf16.mxu0 %v3104
        %3809 = vmatpush2.bf16.msra.mxu0 %v3103
        %3810 = vmatprep.subr.bf16.mxu0 %v3068
        %3811 = vmatpush2.bf16.msra.mxu0 %v3067
        %3812 = vmatprep.subr.bf16.mxu0 %v3032
        %3813 = vmatpush2.bf16.msra.mxu0 %v3031
        %3814 = vmatprep.subr.bf16.mxu0 %v2996
        %3815 = vmatpush2.bf16.msra.mxu0 %v2995
        %3816 = vmatprep.subr.bf16.mxu0 %v2960
        %3817 = vmatpush2.bf16.msra.mxu0 %v2959
        %3818 = vmatprep.subr.bf16.mxu0 %v2924
        %3819 = vmatpush2.bf16.msra.mxu0 %v2923
        %3820 = vmatprep.subr.bf16.mxu0 %v2888
        %3821 = vmatpush2.bf16.msra.mxu0 %v2887
        %3822 = vmatprep.mubr.bf16.mxu0 %v866
        %3823 = vmatmul.mubr.bf16.gmra.mxu0 %v865
        %v3824 = vpop.f32.mrf.mxu0
        %v3825 = vadd.f32 0.0, %v3824
        %v3826 = vpop.f32.mrf.mxu0
        %v3827 = vadd.f32 0.0, %v3826
        %v3828 = vpop.f32.mrf.mxu0
        %v3829 = vpop.f32.mrf.mxu0
        %3830 = vdwg.mxu0
        %3831 = vmatprep.subr.bf16.mxu0 %v2854
        %3832 = vmatpush1.bf16.msra.mxu0 %v2853
        %3833 = vmatprep.subr.bf16.mxu0 %v2818
        %3834 = vmatpush1.bf16.msra.mxu0 %v2817
        %3835 = vmatprep.subr.bf16.mxu0 %v2782
        %3836 = vmatpush1.bf16.msra.mxu0 %v2781
        %3837 = vmatprep.subr.bf16.mxu0 %v2746
        %3838 = vmatpush1.bf16.msra.mxu0 %v2745
        %3839 = vmatprep.subr.bf16.mxu0 %v2710
        %3840 = vmatpush1.bf16.msra.mxu0 %v2709
        %3841 = vmatprep.subr.bf16.mxu0 %v2674
        %3842 = vmatpush1.bf16.msra.mxu0 %v2673
        %3843 = vmatprep.subr.bf16.mxu0 %v2638
        %3844 = vmatpush1.bf16.msra.mxu0 %v2637
        %3845 = vmatprep.subr.bf16.mxu0 %v2602
        %3846 = vmatpush1.bf16.msra.mxu0 %v2601
        %3847 = vmatprep.subr.bf16.mxu0 %v3142
        %3848 = vmatpush2.bf16.msra.mxu0 %v3141
        %3849 = vmatprep.subr.bf16.mxu0 %v3106
        %3850 = vmatpush2.bf16.msra.mxu0 %v3105
        %3851 = vmatprep.subr.bf16.mxu0 %v3070
        %3852 = vmatpush2.bf16.msra.mxu0 %v3069
        %3853 = vmatprep.subr.bf16.mxu0 %v3034
        %3854 = vmatpush2.bf16.msra.mxu0 %v3033
        %3855 = vmatprep.subr.bf16.mxu0 %v2998
        %3856 = vmatpush2.bf16.msra.mxu0 %v2997
        %3857 = vmatprep.subr.bf16.mxu0 %v2962
        %3858 = vmatpush2.bf16.msra.mxu0 %v2961
        %3859 = vmatprep.subr.bf16.mxu0 %v2926
        %3860 = vmatpush2.bf16.msra.mxu0 %v2925
        %3861 = vmatprep.subr.bf16.mxu0 %v2890
        %3862 = vmatpush2.bf16.msra.mxu0 %v2889
        %3863 = vmatprep.mubr.bf16.mxu0 %v866
        %3864 = vmatmul.mubr.bf16.gmra.mxu0 %v865
        %v3865 = vpop.f32.mrf.mxu0
        %v3866 = vadd.f32 0.0, %v3865
        %v3867 = vpop.f32.mrf.mxu0
        %v3868 = vadd.f32 0.0, %v3867
        %v3869 = vpop.f32.mrf.mxu0
        %v3870 = vpop.f32.mrf.mxu0
        %3871 = vdwg.mxu0
        %3872 = vmatprep.subr.bf16.mxu0 %v2856
        %3873 = vmatpush1.bf16.msra.mxu0 %v2855
        %3874 = vmatprep.subr.bf16.mxu0 %v2820
        %3875 = vmatpush1.bf16.msra.mxu0 %v2819
        %3876 = vmatprep.subr.bf16.mxu0 %v2784
        %3877 = vmatpush1.bf16.msra.mxu0 %v2783
        %3878 = vmatprep.subr.bf16.mxu0 %v2748
        %3879 = vmatpush1.bf16.msra.mxu0 %v2747
        %3880 = vmatprep.subr.bf16.mxu0 %v2712
        %3881 = vmatpush1.bf16.msra.mxu0 %v2711
        %3882 = vmatprep.subr.bf16.mxu0 %v2676
        %3883 = vmatpush1.bf16.msra.mxu0 %v2675
        %3884 = vmatprep.subr.bf16.mxu0 %v2640
        %3885 = vmatpush1.bf16.msra.mxu0 %v2639
        %3886 = vmatprep.subr.bf16.mxu0 %v2604
        %3887 = vmatpush1.bf16.msra.mxu0 %v2603
        %3888 = vmatprep.subr.bf16.mxu0 %v3144
        %3889 = vmatpush2.bf16.msra.mxu0 %v3143
        %3890 = vmatprep.subr.bf16.mxu0 %v3108
        %3891 = vmatpush2.bf16.msra.mxu0 %v3107
        %3892 = vmatprep.subr.bf16.mxu0 %v3072
        %3893 = vmatpush2.bf16.msra.mxu0 %v3071
        %3894 = vmatprep.subr.bf16.mxu0 %v3036
        %3895 = vmatpush2.bf16.msra.mxu0 %v3035
        %3896 = vmatprep.subr.bf16.mxu0 %v3000
        %3897 = vmatpush2.bf16.msra.mxu0 %v2999
        %3898 = vmatprep.subr.bf16.mxu0 %v2964
        %3899 = vmatpush2.bf16.msra.mxu0 %v2963
        %3900 = vmatprep.subr.bf16.mxu0 %v2928
        %3901 = vmatpush2.bf16.msra.mxu0 %v2927
        %3902 = vmatprep.subr.bf16.mxu0 %v2892
        %3903 = vmatpush2.bf16.msra.mxu0 %v2891
        %3904 = vmatprep.mubr.bf16.mxu0 %v866
        %3905 = vmatmul.mubr.bf16.gmra.mxu0 %v865
        %v3906 = vpop.f32.mrf.mxu0
        %v3907 = vadd.f32 0.0, %v3906
        %v3908 = vpop.f32.mrf.mxu0
        %v3909 = vadd.f32 0.0, %v3908
        %v3910 = vpop.f32.mrf.mxu0
        %v3911 = vpop.f32.mrf.mxu0
        %3912 = vdwg.mxu0
        %3913 = vmatprep.subr.bf16.mxu0 %v2858
        %3914 = vmatpush1.bf16.msra.mxu0 %v2857
        %3915 = vmatprep.subr.bf16.mxu0 %v2822
        %3916 = vmatpush1.bf16.msra.mxu0 %v2821
        %3917 = vmatprep.subr.bf16.mxu0 %v2786
        %3918 = vmatpush1.bf16.msra.mxu0 %v2785
        %3919 = vmatprep.subr.bf16.mxu0 %v2750
        %3920 = vmatpush1.bf16.msra.mxu0 %v2749
        %3921 = vmatprep.subr.bf16.mxu0 %v2714
        %3922 = vmatpush1.bf16.msra.mxu0 %v2713
        %3923 = vmatprep.subr.bf16.mxu0 %v2678
        %3924 = vmatpush1.bf16.msra.mxu0 %v2677
        %3925 = vmatprep.subr.bf16.mxu0 %v2642
        %3926 = vmatpush1.bf16.msra.mxu0 %v2641
        %3927 = vmatprep.subr.bf16.mxu0 %v2606
        %3928 = vmatpush1.bf16.msra.mxu0 %v2605
        %3929 = vmatprep.subr.bf16.mxu0 %v3146
        %3930 = vmatpush2.bf16.msra.mxu0 %v3145
        %3931 = vmatprep.subr.bf16.mxu0 %v3110
        %3932 = vmatpush2.bf16.msra.mxu0 %v3109
        %3933 = vmatprep.subr.bf16.mxu0 %v3074
        %3934 = vmatpush2.bf16.msra.mxu0 %v3073
        %3935 = vmatprep.subr.bf16.mxu0 %v3038
        %3936 = vmatpush2.bf16.msra.mxu0 %v3037
        %3937 = vmatprep.subr.bf16.mxu0 %v3002
        %3938 = vmatpush2.bf16.msra.mxu0 %v3001
        %3939 = vmatprep.subr.bf16.mxu0 %v2966
        %3940 = vmatpush2.bf16.msra.mxu0 %v2965
        %3941 = vmatprep.subr.bf16.mxu0 %v2930
        %3942 = vmatpush2.bf16.msra.mxu0 %v2929
        %3943 = vmatprep.subr.bf16.mxu0 %v2894
        %3944 = vmatpush2.bf16.msra.mxu0 %v2893
        %3945 = vmatprep.mubr.bf16.mxu0 %v866
        %3946 = vmatmul.mubr.bf16.gmra.mxu0 %v865
        %v3947 = vpop.f32.mrf.mxu0
        %v3948 = vadd.f32 0.0, %v3947
        %v3949 = vpop.f32.mrf.mxu0
        %v3950 = vadd.f32 0.0, %v3949
        %v3951 = vpop.f32.mrf.mxu0
        %v3952 = vpop.f32.mrf.mxu0
        %3953 = vdwg.mxu0
        %3954 = vmatprep.subr.bf16.mxu0 %v2860
        %3955 = vmatpush1.bf16.msra.mxu0 %v2859
        %3956 = vmatprep.subr.bf16.mxu0 %v2824
        %3957 = vmatpush1.bf16.msra.mxu0 %v2823
        %3958 = vmatprep.subr.bf16.mxu0 %v2788
        %3959 = vmatpush1.bf16.msra.mxu0 %v2787
        %3960 = vmatprep.subr.bf16.mxu0 %v2752
        %3961 = vmatpush1.bf16.msra.mxu0 %v2751
        %3962 = vmatprep.subr.bf16.mxu0 %v2716
        %3963 = vmatpush1.bf16.msra.mxu0 %v2715
        %3964 = vmatprep.subr.bf16.mxu0 %v2680
        %3965 = vmatpush1.bf16.msra.mxu0 %v2679
        %3966 = vmatprep.subr.bf16.mxu0 %v2644
        %3967 = vmatpush1.bf16.msra.mxu0 %v2643
        %3968 = vmatprep.subr.bf16.mxu0 %v2608
        %3969 = vmatpush1.bf16.msra.mxu0 %v2607
        %3970 = vmatprep.subr.bf16.mxu0 %v3148
        %3971 = vmatpush2.bf16.msra.mxu0 %v3147
        %3972 = vmatprep.subr.bf16.mxu0 %v3112
        %3973 = vmatpush2.bf16.msra.mxu0 %v3111
        %3974 = vmatprep.subr.bf16.mxu0 %v3076
        %3975 = vmatpush2.bf16.msra.mxu0 %v3075
        %3976 = vmatprep.subr.bf16.mxu0 %v3040
        %3977 = vmatpush2.bf16.msra.mxu0 %v3039
        %3978 = vmatprep.subr.bf16.mxu0 %v3004
        %3979 = vmatpush2.bf16.msra.mxu0 %v3003
        %3980 = vmatprep.subr.bf16.mxu0 %v2968
        %3981 = vmatpush2.bf16.msra.mxu0 %v2967
        %3982 = vmatprep.subr.bf16.mxu0 %v2932
        %3983 = vmatpush2.bf16.msra.mxu0 %v2931
        %3984 = vmatprep.subr.bf16.mxu0 %v2896
        %3985 = vmatpush2.bf16.msra.mxu0 %v2895
        %3986 = vmatprep.mubr.bf16.mxu0 %v866
        %3987 = vmatmul.mubr.bf16.gmra.mxu0 %v865
        %v3988 = vpop.f32.mrf.mxu0
        %v3989 = vadd.f32 0.0, %v3988
        %v3990 = vpop.f32.mrf.mxu0
        %v3991 = vadd.f32 0.0, %v3990
        %v3992 = vpop.f32.mrf.mxu0
        %v3993 = vpop.f32.mrf.mxu0
        %3994 = vdwg.mxu0
        %3995 = vmatprep.subr.bf16.mxu0 %v2862
        %3996 = vmatpush1.bf16.msra.mxu0 %v2861
        %3997 = vmatprep.subr.bf16.mxu0 %v2826
        %3998 = vmatpush1.bf16.msra.mxu0 %v2825
        %3999 = vmatprep.subr.bf16.mxu0 %v2790
        %4000 = vmatpush1.bf16.msra.mxu0 %v2789
        %4001 = vmatprep.subr.bf16.mxu0 %v2754
        %4002 = vmatpush1.bf16.msra.mxu0 %v2753
        %4003 = vmatprep.subr.bf16.mxu0 %v2718
        %4004 = vmatpush1.bf16.msra.mxu0 %v2717
        %4005 = vmatprep.subr.bf16.mxu0 %v2682
        %4006 = vmatpush1.bf16.msra.mxu0 %v2681
        %4007 = vmatprep.subr.bf16.mxu0 %v2646
        %4008 = vmatpush1.bf16.msra.mxu0 %v2645
        %4009 = vmatprep.subr.bf16.mxu0 %v2610
        %4010 = vmatpush1.bf16.msra.mxu0 %v2609
        %4011 = vmatprep.subr.bf16.mxu0 %v3150
        %4012 = vmatpush2.bf16.msra.mxu0 %v3149
        %4013 = vmatprep.subr.bf16.mxu0 %v3114
        %4014 = vmatpush2.bf16.msra.mxu0 %v3113
        %4015 = vmatprep.subr.bf16.mxu0 %v3078
        %4016 = vmatpush2.bf16.msra.mxu0 %v3077
        %4017 = vmatprep.subr.bf16.mxu0 %v3042
        %4018 = vmatpush2.bf16.msra.mxu0 %v3041
        %4019 = vmatprep.subr.bf16.mxu0 %v3006
        %4020 = vmatpush2.bf16.msra.mxu0 %v3005
        %4021 = vmatprep.subr.bf16.mxu0 %v2970
        %4022 = vmatpush2.bf16.msra.mxu0 %v2969
        %4023 = vmatprep.subr.bf16.mxu0 %v2934
        %4024 = vmatpush2.bf16.msra.mxu0 %v2933
        %4025 = vmatprep.subr.bf16.mxu0 %v2898
        %4026 = vmatpush2.bf16.msra.mxu0 %v2897
        %4027 = vmatprep.mubr.bf16.mxu0 %v866
        %4028 = vmatmul.mubr.bf16.gmra.mxu0 %v865
        %v4029 = vpop.f32.mrf.mxu0
        %v4030 = vadd.f32 0.0, %v4029
        %v4031 = vpop.f32.mrf.mxu0
        %v4032 = vadd.f32 0.0, %v4031
        %v4033 = vpop.f32.mrf.mxu0
        %v4034 = vpop.f32.mrf.mxu0
        %4035 = vdwg.mxu0
        %4036 = vmatprep.subr.bf16.mxu0 %v2864
        %4037 = vmatpush1.bf16.msra.mxu0 %v2863
        %4038 = vmatprep.subr.bf16.mxu0 %v2828
        %4039 = vmatpush1.bf16.msra.mxu0 %v2827
        %4040 = vmatprep.subr.bf16.mxu0 %v2792
        %4041 = vmatpush1.bf16.msra.mxu0 %v2791
        %4042 = vmatprep.subr.bf16.mxu0 %v2756
        %4043 = vmatpush1.bf16.msra.mxu0 %v2755
        %4044 = vmatprep.subr.bf16.mxu0 %v2720
        %4045 = vmatpush1.bf16.msra.mxu0 %v2719
        %4046 = vmatprep.subr.bf16.mxu0 %v2684
        %4047 = vmatpush1.bf16.msra.mxu0 %v2683
        %4048 = vmatprep.subr.bf16.mxu0 %v2648
        %4049 = vmatpush1.bf16.msra.mxu0 %v2647
        %4050 = vmatprep.subr.bf16.mxu0 %v2612
        %4051 = vmatpush1.bf16.msra.mxu0 %v2611
        %4052 = vmatprep.subr.bf16.mxu0 %v3152
        %4053 = vmatpush2.bf16.msra.mxu0 %v3151
        %4054 = vmatprep.subr.bf16.mxu0 %v3116
        %4055 = vmatpush2.bf16.msra.mxu0 %v3115
        %4056 = vmatprep.subr.bf16.mxu0 %v3080
        %4057 = vmatpush2.bf16.msra.mxu0 %v3079
        %4058 = vmatprep.subr.bf16.mxu0 %v3044
        %4059 = vmatpush2.bf16.msra.mxu0 %v3043
        %4060 = vmatprep.subr.bf16.mxu0 %v3008
        %4061 = vmatpush2.bf16.msra.mxu0 %v3007
        %4062 = vmatprep.subr.bf16.mxu0 %v2972
        %4063 = vmatpush2.bf16.msra.mxu0 %v2971
        %4064 = vmatprep.subr.bf16.mxu0 %v2936
        %4065 = vmatpush2.bf16.msra.mxu0 %v2935
        %4066 = vmatprep.subr.bf16.mxu0 %v2900
        %4067 = vmatpush2.bf16.msra.mxu0 %v2899
        %4068 = vmatprep.mubr.bf16.mxu0 %v866
        %4069 = vmatmul.mubr.bf16.gmra.mxu0 %v865
        %v4070 = vpop.f32.mrf.mxu0
        %v4071 = vadd.f32 0.0, %v4070
        %v4072 = vpop.f32.mrf.mxu0
        %v4073 = vadd.f32 0.0, %v4072
        %v4074 = vpop.f32.mrf.mxu0
        %v4075 = vpop.f32.mrf.mxu0
        %4076 = vdwg.mxu0
        %4077 = vmatprep.subr.bf16.mxu0 %v2866
        %4078 = vmatpush1.bf16.msra.mxu0 %v2865
        %4079 = vmatprep.subr.bf16.mxu0 %v2830
        %4080 = vmatpush1.bf16.msra.mxu0 %v2829
        %4081 = vmatprep.subr.bf16.mxu0 %v2794
        %4082 = vmatpush1.bf16.msra.mxu0 %v2793
        %4083 = vmatprep.subr.bf16.mxu0 %v2758
        %4084 = vmatpush1.bf16.msra.mxu0 %v2757
        %4085 = vmatprep.subr.bf16.mxu0 %v2722
        %4086 = vmatpush1.bf16.msra.mxu0 %v2721
        %4087 = vmatprep.subr.bf16.mxu0 %v2686
        %4088 = vmatpush1.bf16.msra.mxu0 %v2685
        %4089 = vmatprep.subr.bf16.mxu0 %v2650
        %4090 = vmatpush1.bf16.msra.mxu0 %v2649
        %4091 = vmatprep.subr.bf16.mxu0 %v2614
        %4092 = vmatpush1.bf16.msra.mxu0 %v2613
        %4093 = vmatprep.subr.bf16.mxu0 %v3154
        %4094 = vmatpush2.bf16.msra.mxu0 %v3153
        %4095 = vmatprep.subr.bf16.mxu0 %v3118
        %4096 = vmatpush2.bf16.msra.mxu0 %v3117
        %4097 = vmatprep.subr.bf16.mxu0 %v3082
        %4098 = vmatpush2.bf16.msra.mxu0 %v3081
        %4099 = vmatprep.subr.bf16.mxu0 %v3046
        %4100 = vmatpush2.bf16.msra.mxu0 %v3045
        %4101 = vmatprep.subr.bf16.mxu0 %v3010
        %4102 = vmatpush2.bf16.msra.mxu0 %v3009
        %4103 = vmatprep.subr.bf16.mxu0 %v2974
        %4104 = vmatpush2.bf16.msra.mxu0 %v2973
        %4105 = vmatprep.subr.bf16.mxu0 %v2938
        %4106 = vmatpush2.bf16.msra.mxu0 %v2937
        %4107 = vmatprep.subr.bf16.mxu0 %v2902
        %4108 = vmatpush2.bf16.msra.mxu0 %v2901
        %4109 = vmatprep.mubr.bf16.mxu0 %v866
        %4110 = vmatmul.mubr.bf16.gmra.mxu0 %v865
        %v4111 = vpop.f32.mrf.mxu0
        %v4112 = vadd.f32 0.0, %v4111
        %v4113 = vpop.f32.mrf.mxu0
        %v4114 = vadd.f32 0.0, %v4113
        %v4115 = vpop.f32.mrf.mxu0
        %v4116 = vpop.f32.mrf.mxu0
        %4117 = vdwg.mxu0
        %4118 = vmatprep.subr.bf16.mxu0 %v2868
        %4119 = vmatpush1.bf16.msra.mxu0 %v2867
        %4120 = vmatprep.subr.bf16.mxu0 %v2832
        %4121 = vmatpush1.bf16.msra.mxu0 %v2831
        %4122 = vmatprep.subr.bf16.mxu0 %v2796
        %4123 = vmatpush1.bf16.msra.mxu0 %v2795
        %4124 = vmatprep.subr.bf16.mxu0 %v2760
        %4125 = vmatpush1.bf16.msra.mxu0 %v2759
        %4126 = vmatprep.subr.bf16.mxu0 %v2724
        %4127 = vmatpush1.bf16.msra.mxu0 %v2723
        %4128 = vmatprep.subr.bf16.mxu0 %v2688
        %4129 = vmatpush1.bf16.msra.mxu0 %v2687
        %4130 = vmatprep.subr.bf16.mxu0 %v2652
        %4131 = vmatpush1.bf16.msra.mxu0 %v2651
        %4132 = vmatprep.subr.bf16.mxu0 %v2616
        %4133 = vmatpush1.bf16.msra.mxu0 %v2615
        %4134 = vmatprep.subr.bf16.mxu0 %v3156
        %4135 = vmatpush2.bf16.msra.mxu0 %v3155
        %4136 = vmatprep.subr.bf16.mxu0 %v3120
        %4137 = vmatpush2.bf16.msra.mxu0 %v3119
        %4138 = vmatprep.subr.bf16.mxu0 %v3084
        %4139 = vmatpush2.bf16.msra.mxu0 %v3083
        %4140 = vmatprep.subr.bf16.mxu0 %v3048
        %4141 = vmatpush2.bf16.msra.mxu0 %v3047
        %4142 = vmatprep.subr.bf16.mxu0 %v3012
        %4143 = vmatpush2.bf16.msra.mxu0 %v3011
        %4144 = vmatprep.subr.bf16.mxu0 %v2976
        %4145 = vmatpush2.bf16.msra.mxu0 %v2975
        %4146 = vmatprep.subr.bf16.mxu0 %v2940
        %4147 = vmatpush2.bf16.msra.mxu0 %v2939
        %4148 = vmatprep.subr.bf16.mxu0 %v2904
        %4149 = vmatpush2.bf16.msra.mxu0 %v2903
        %4150 = vmatprep.mubr.bf16.mxu0 %v866
        %4151 = vmatmul.mubr.bf16.gmra.mxu0 %v865
        %v4152 = vpop.f32.mrf.mxu0
        %v4153 = vadd.f32 0.0, %v4152
        %v4154 = vpop.f32.mrf.mxu0
        %v4155 = vadd.f32 0.0, %v4154
        %v4156 = vpop.f32.mrf.mxu0
        %v4157 = vpop.f32.mrf.mxu0
        %4158 = vdwg.mxu0
        %4159 = vmatprep.subr.bf16.mxu0 %v2870
        %4160 = vmatpush1.bf16.msra.mxu0 %v2869
        %4161 = vmatprep.subr.bf16.mxu0 %v2834
        %4162 = vmatpush1.bf16.msra.mxu0 %v2833
        %4163 = vmatprep.subr.bf16.mxu0 %v2798
        %4164 = vmatpush1.bf16.msra.mxu0 %v2797
        %4165 = vmatprep.subr.bf16.mxu0 %v2762
        %4166 = vmatpush1.bf16.msra.mxu0 %v2761
        %4167 = vmatprep.subr.bf16.mxu0 %v2726
        %4168 = vmatpush1.bf16.msra.mxu0 %v2725
        %4169 = vmatprep.subr.bf16.mxu0 %v2690
        %4170 = vmatpush1.bf16.msra.mxu0 %v2689
        %4171 = vmatprep.subr.bf16.mxu0 %v2654
        %4172 = vmatpush1.bf16.msra.mxu0 %v2653
        %4173 = vmatprep.subr.bf16.mxu0 %v2618
        %4174 = vmatpush1.bf16.msra.mxu0 %v2617
        %4175 = vmatprep.subr.bf16.mxu0 %v3158
        %4176 = vmatpush2.bf16.msra.mxu0 %v3157
        %4177 = vmatprep.subr.bf16.mxu0 %v3122
        %4178 = vmatpush2.bf16.msra.mxu0 %v3121
        %4179 = vmatprep.subr.bf16.mxu0 %v3086
        %4180 = vmatpush2.bf16.msra.mxu0 %v3085
        %4181 = vmatprep.subr.bf16.mxu0 %v3050
        %4182 = vmatpush2.bf16.msra.mxu0 %v3049
        %4183 = vmatprep.subr.bf16.mxu0 %v3014
        %4184 = vmatpush2.bf16.msra.mxu0 %v3013
        %4185 = vmatprep.subr.bf16.mxu0 %v2978
        %4186 = vmatpush2.bf16.msra.mxu0 %v2977
        %4187 = vmatprep.subr.bf16.mxu0 %v2942
        %4188 = vmatpush2.bf16.msra.mxu0 %v2941
        %4189 = vmatprep.subr.bf16.mxu0 %v2906
        %4190 = vmatpush2.bf16.msra.mxu0 %v2905
        %4191 = vmatprep.mubr.bf16.mxu0 %v866
        %4192 = vmatmul.mubr.bf16.gmra.mxu0 %v865
        %v4193 = vpop.f32.mrf.mxu0
        %v4194 = vadd.f32 0.0, %v4193
        %v4195 = vpop.f32.mrf.mxu0
        %v4196 = vadd.f32 0.0, %v4195
        %v4197 = vpop.f32.mrf.mxu0
        %v4198 = vpop.f32.mrf.mxu0
        %4199 = vdwg.mxu0
        %4200 = vmatprep.subr.bf16.mxu0 %v2872
        %4201 = vmatpush1.bf16.msra.mxu0 %v2871
        %4202 = vmatprep.subr.bf16.mxu0 %v2836
        %4203 = vmatpush1.bf16.msra.mxu0 %v2835
        %4204 = vmatprep.subr.bf16.mxu0 %v2800
        %4205 = vmatpush1.bf16.msra.mxu0 %v2799
        %4206 = vmatprep.subr.bf16.mxu0 %v2764
        %4207 = vmatpush1.bf16.msra.mxu0 %v2763
        %4208 = vmatprep.subr.bf16.mxu0 %v2728
        %4209 = vmatpush1.bf16.msra.mxu0 %v2727
        %4210 = vmatprep.subr.bf16.mxu0 %v2692
        %4211 = vmatpush1.bf16.msra.mxu0 %v2691
        %4212 = vmatprep.subr.bf16.mxu0 %v2656
        %4213 = vmatpush1.bf16.msra.mxu0 %v2655
        %4214 = vmatprep.subr.bf16.mxu0 %v2620
        %4215 = vmatpush1.bf16.msra.mxu0 %v2619
        %4216 = vmatprep.subr.bf16.mxu0 %v3160
        %4217 = vmatpush2.bf16.msra.mxu0 %v3159
        %4218 = vmatprep.subr.bf16.mxu0 %v3124
        %4219 = vmatpush2.bf16.msra.mxu0 %v3123
        %4220 = vmatprep.subr.bf16.mxu0 %v3088
        %4221 = vmatpush2.bf16.msra.mxu0 %v3087
        %4222 = vmatprep.subr.bf16.mxu0 %v3052
        %4223 = vmatpush2.bf16.msra.mxu0 %v3051
        %4224 = vmatprep.subr.bf16.mxu0 %v3016
        %4225 = vmatpush2.bf16.msra.mxu0 %v3015
        %4226 = vmatprep.subr.bf16.mxu0 %v2980
        %4227 = vmatpush2.bf16.msra.mxu0 %v2979
        %4228 = vmatprep.subr.bf16.mxu0 %v2944
        %4229 = vmatpush2.bf16.msra.mxu0 %v2943
        %4230 = vmatprep.subr.bf16.mxu0 %v2908
        %4231 = vmatpush2.bf16.msra.mxu0 %v2907
        %4232 = vmatprep.mubr.bf16.mxu0 %v866
        %4233 = vmatmul.mubr.bf16.gmra.mxu0 %v865
        %v4234 = vpop.f32.mrf.mxu0
        %v4235 = vadd.f32 0.0, %v4234
        %v4236 = vpop.f32.mrf.mxu0
        %v4237 = vadd.f32 0.0, %v4236
        %v4238 = vpop.f32.mrf.mxu0
        %v4239 = vpop.f32.mrf.mxu0
        %4240 = vdwg.mxu0
        %4241 = vmatprep.subr.bf16.mxu0 %v2874
        %4242 = vmatpush1.bf16.msra.mxu0 %v2873
        %4243 = vmatprep.subr.bf16.mxu0 %v2838
        %4244 = vmatpush1.bf16.msra.mxu0 %v2837
        %4245 = vmatprep.subr.bf16.mxu0 %v2802
        %4246 = vmatpush1.bf16.msra.mxu0 %v2801
        %4247 = vmatprep.subr.bf16.mxu0 %v2766
        %4248 = vmatpush1.bf16.msra.mxu0 %v2765
        %4249 = vmatprep.subr.bf16.mxu0 %v2730
        %4250 = vmatpush1.bf16.msra.mxu0 %v2729
        %4251 = vmatprep.subr.bf16.mxu0 %v2694
        %4252 = vmatpush1.bf16.msra.mxu0 %v2693
        %4253 = vmatprep.subr.bf16.mxu0 %v2658
        %4254 = vmatpush1.bf16.msra.mxu0 %v2657
        %4255 = vmatprep.subr.bf16.mxu0 %v2622
        %4256 = vmatpush1.bf16.msra.mxu0 %v2621
        %4257 = vmatprep.subr.bf16.mxu0 %v3162
        %4258 = vmatpush2.bf16.msra.mxu0 %v3161
        %4259 = vmatprep.subr.bf16.mxu0 %v3126
        %4260 = vmatpush2.bf16.msra.mxu0 %v3125
        %4261 = vmatprep.subr.bf16.mxu0 %v3090
        %4262 = vmatpush2.bf16.msra.mxu0 %v3089
        %4263 = vmatprep.subr.bf16.mxu0 %v3054
        %4264 = vmatpush2.bf16.msra.mxu0 %v3053
        %4265 = vmatprep.subr.bf16.mxu0 %v3018
        %4266 = vmatpush2.bf16.msra.mxu0 %v3017
        %4267 = vmatprep.subr.bf16.mxu0 %v2982
        %4268 = vmatpush2.bf16.msra.mxu0 %v2981
        %4269 = vmatprep.subr.bf16.mxu0 %v2946
        %4270 = vmatpush2.bf16.msra.mxu0 %v2945
        %4271 = vmatprep.subr.bf16.mxu0 %v2910
        %4272 = vmatpush2.bf16.msra.mxu0 %v2909
        %4273 = vmatprep.mubr.bf16.mxu0 %v866
        %4274 = vmatmul.mubr.bf16.gmra.mxu0 %v865
        %v4275 = vpop.f32.mrf.mxu0
        %v4276 = vadd.f32 0.0, %v4275
        %v4277 = vpop.f32.mrf.mxu0
        %v4278 = vadd.f32 0.0, %v4277
        %v4279 = vpop.f32.mrf.mxu0
        %v4280 = vpop.f32.mrf.mxu0
        %4281 = vdwg.mxu0
        %4282 = vmatprep.subr.bf16.mxu0 %v2876
        %4283 = vmatpush1.bf16.msra.mxu0 %v2875
        %4284 = vmatprep.subr.bf16.mxu0 %v2840
        %4285 = vmatpush1.bf16.msra.mxu0 %v2839
        %4286 = vmatprep.subr.bf16.mxu0 %v2804
        %4287 = vmatpush1.bf16.msra.mxu0 %v2803
        %4288 = vmatprep.subr.bf16.mxu0 %v2768
        %4289 = vmatpush1.bf16.msra.mxu0 %v2767
        %4290 = vmatprep.subr.bf16.mxu0 %v2732
        %4291 = vmatpush1.bf16.msra.mxu0 %v2731
        %4292 = vmatprep.subr.bf16.mxu0 %v2696
        %4293 = vmatpush1.bf16.msra.mxu0 %v2695
        %4294 = vmatprep.subr.bf16.mxu0 %v2660
        %4295 = vmatpush1.bf16.msra.mxu0 %v2659
        %4296 = vmatprep.subr.bf16.mxu0 %v2624
        %4297 = vmatpush1.bf16.msra.mxu0 %v2623
        %4298 = vmatprep.subr.bf16.mxu0 %v3164
        %4299 = vmatpush2.bf16.msra.mxu0 %v3163
        %4300 = vmatprep.subr.bf16.mxu0 %v3128
        %4301 = vmatpush2.bf16.msra.mxu0 %v3127
        %4302 = vmatprep.subr.bf16.mxu0 %v3092
        %4303 = vmatpush2.bf16.msra.mxu0 %v3091
        %4304 = vmatprep.subr.bf16.mxu0 %v3056
        %4305 = vmatpush2.bf16.msra.mxu0 %v3055
        %4306 = vmatprep.subr.bf16.mxu0 %v3020
        %4307 = vmatpush2.bf16.msra.mxu0 %v3019
        %4308 = vmatprep.subr.bf16.mxu0 %v2984
        %4309 = vmatpush2.bf16.msra.mxu0 %v2983
        %4310 = vmatprep.subr.bf16.mxu0 %v2948
        %4311 = vmatpush2.bf16.msra.mxu0 %v2947
        %4312 = vmatprep.subr.bf16.mxu0 %v2912
        %4313 = vmatpush2.bf16.msra.mxu0 %v2911
        %4314 = vmatprep.mubr.bf16.mxu0 %v866
        %4315 = vmatmul.mubr.bf16.gmra.mxu0 %v865
        %v4316 = vpop.f32.mrf.mxu0
        %v4317 = vadd.f32 0.0, %v4316
        %v4318 = vpop.f32.mrf.mxu0
        %v4319 = vadd.f32 0.0, %v4318
        %v4320 = vpop.f32.mrf.mxu0
        %v4321 = vpop.f32.mrf.mxu0
        %4322 = vdwg.mxu0
        %4323 = vmatprep.subr.bf16.mxu0 %v2878
        %4324 = vmatpush1.bf16.msra.mxu0 %v2877
        %4325 = vmatprep.subr.bf16.mxu0 %v2842
        %4326 = vmatpush1.bf16.msra.mxu0 %v2841
        %4327 = vmatprep.subr.bf16.mxu0 %v2806
        %4328 = vmatpush1.bf16.msra.mxu0 %v2805
        %4329 = vmatprep.subr.bf16.mxu0 %v2770
        %4330 = vmatpush1.bf16.msra.mxu0 %v2769
        %4331 = vmatprep.subr.bf16.mxu0 %v2734
        %4332 = vmatpush1.bf16.msra.mxu0 %v2733
        %4333 = vmatprep.subr.bf16.mxu0 %v2698
        %4334 = vmatpush1.bf16.msra.mxu0 %v2697
        %4335 = vmatprep.subr.bf16.mxu0 %v2662
        %4336 = vmatpush1.bf16.msra.mxu0 %v2661
        %4337 = vmatprep.subr.bf16.mxu0 %v2626
        %4338 = vmatpush1.bf16.msra.mxu0 %v2625
        %4339 = vmatprep.subr.bf16.mxu0 %v3166
        %4340 = vmatpush2.bf16.msra.mxu0 %v3165
        %4341 = vmatprep.subr.bf16.mxu0 %v3130
        %4342 = vmatpush2.bf16.msra.mxu0 %v3129
        %4343 = vmatprep.subr.bf16.mxu0 %v3094
        %4344 = vmatpush2.bf16.msra.mxu0 %v3093
        %4345 = vmatprep.subr.bf16.mxu0 %v3058
        %4346 = vmatpush2.bf16.msra.mxu0 %v3057
        %4347 = vmatprep.subr.bf16.mxu0 %v3022
        %4348 = vmatpush2.bf16.msra.mxu0 %v3021
        %4349 = vmatprep.subr.bf16.mxu0 %v2986
        %4350 = vmatpush2.bf16.msra.mxu0 %v2985
        %4351 = vmatprep.subr.bf16.mxu0 %v2950
        %4352 = vmatpush2.bf16.msra.mxu0 %v2949
        %4353 = vmatprep.subr.bf16.mxu0 %v2914
        %4354 = vmatpush2.bf16.msra.mxu0 %v2913
        %4355 = vmatprep.mubr.bf16.mxu0 %v866
        %4356 = vmatmul.mubr.bf16.gmra.mxu0 %v865
        %v4357 = vpop.f32.mrf.mxu0
        %v4358 = vadd.f32 0.0, %v4357
        %v4359 = vpop.f32.mrf.mxu0
        %v4360 = vadd.f32 0.0, %v4359
        %v4361 = vpop.f32.mrf.mxu0
        %v4362 = vpop.f32.mrf.mxu0
        %4363 = vdwg.mxu0
        %4364 = vmatprep.subr.bf16.mxu0 %v2880
        %4365 = vmatpush1.bf16.msra.mxu0 %v2879
        %4366 = vmatprep.subr.bf16.mxu0 %v2844
        %4367 = vmatpush1.bf16.msra.mxu0 %v2843
        %4368 = vmatprep.subr.bf16.mxu0 %v2808
        %4369 = vmatpush1.bf16.msra.mxu0 %v2807
        %4370 = vmatprep.subr.bf16.mxu0 %v2772
        %4371 = vmatpush1.bf16.msra.mxu0 %v2771
        %4372 = vmatprep.subr.bf16.mxu0 %v2736
        %4373 = vmatpush1.bf16.msra.mxu0 %v2735
        %4374 = vmatprep.subr.bf16.mxu0 %v2700
        %4375 = vmatpush1.bf16.msra.mxu0 %v2699
        %4376 = vmatprep.subr.bf16.mxu0 %v2664
        %4377 = vmatpush1.bf16.msra.mxu0 %v2663
        %4378 = vmatprep.subr.bf16.mxu0 %v2628
        %4379 = vmatpush1.bf16.msra.mxu0 %v2627
        %4380 = vmatprep.subr.bf16.mxu0 %v3168
        %4381 = vmatpush2.bf16.msra.mxu0 %v3167
        %4382 = vmatprep.subr.bf16.mxu0 %v3132
        %4383 = vmatpush2.bf16.msra.mxu0 %v3131
        %4384 = vmatprep.subr.bf16.mxu0 %v3096
        %4385 = vmatpush2.bf16.msra.mxu0 %v3095
        %4386 = vmatprep.subr.bf16.mxu0 %v3060
        %4387 = vmatpush2.bf16.msra.mxu0 %v3059
        %4388 = vmatprep.subr.bf16.mxu0 %v3024
        %4389 = vmatpush2.bf16.msra.mxu0 %v3023
        %4390 = vmatprep.subr.bf16.mxu0 %v2988
        %4391 = vmatpush2.bf16.msra.mxu0 %v2987
        %4392 = vmatprep.subr.bf16.mxu0 %v2952
        %4393 = vmatpush2.bf16.msra.mxu0 %v2951
        %4394 = vmatprep.subr.bf16.mxu0 %v2916
        %4395 = vmatpush2.bf16.msra.mxu0 %v2915
        %4396 = vmatprep.mubr.bf16.mxu0 %v866
        %4397 = vmatmul.mubr.bf16.gmra.mxu0 %v865
        %v4398 = vpop.f32.mrf.mxu0
        %v4399 = vadd.f32 0.0, %v4398
        %v4400 = vpop.f32.mrf.mxu0
        %v4401 = vadd.f32 0.0, %v4400
        %v4402 = vpop.f32.mrf.mxu0
        %v4403 = vpop.f32.mrf.mxu0
        %4404 = vdwg.mxu0
        %4405 = vmatprep.subr.bf16.mxu0 %v2882
        %4406 = vmatpush1.bf16.msra.mxu0 %v2881
        %4407 = vmatprep.subr.bf16.mxu0 %v2846
        %4408 = vmatpush1.bf16.msra.mxu0 %v2845
        %4409 = vmatprep.subr.bf16.mxu0 %v2810
        %4410 = vmatpush1.bf16.msra.mxu0 %v2809
        %4411 = vmatprep.subr.bf16.mxu0 %v2774
        %4412 = vmatpush1.bf16.msra.mxu0 %v2773
        %4413 = vmatprep.subr.bf16.mxu0 %v2738
        %4414 = vmatpush1.bf16.msra.mxu0 %v2737
        %4415 = vmatprep.subr.bf16.mxu0 %v2702
        %4416 = vmatpush1.bf16.msra.mxu0 %v2701
        %4417 = vmatprep.subr.bf16.mxu0 %v2666
        %4418 = vmatpush1.bf16.msra.mxu0 %v2665
        %4419 = vmatprep.subr.bf16.mxu0 %v2630
        %4420 = vmatpush1.bf16.msra.mxu0 %v2629
        %4421 = vmatprep.subr.bf16.mxu0 %v3170
        %4422 = vmatpush2.bf16.msra.mxu0 %v3169
        %4423 = vmatprep.subr.bf16.mxu0 %v3134
        %4424 = vmatpush2.bf16.msra.mxu0 %v3133
        %4425 = vmatprep.subr.bf16.mxu0 %v3098
        %4426 = vmatpush2.bf16.msra.mxu0 %v3097
        %4427 = vmatprep.subr.bf16.mxu0 %v3062
        %4428 = vmatpush2.bf16.msra.mxu0 %v3061
        %4429 = vmatprep.subr.bf16.mxu0 %v3026
        %4430 = vmatpush2.bf16.msra.mxu0 %v3025
        %4431 = vmatprep.subr.bf16.mxu0 %v2990
        %4432 = vmatpush2.bf16.msra.mxu0 %v2989
        %4433 = vmatprep.subr.bf16.mxu0 %v2954
        %4434 = vmatpush2.bf16.msra.mxu0 %v2953
        %4435 = vmatprep.subr.bf16.mxu0 %v2918
        %4436 = vmatpush2.bf16.msra.mxu0 %v2917
        %4437 = vmatprep.mubr.bf16.mxu0 %v866
        %4438 = vmatmul.mubr.bf16.gmra.mxu0 %v865
        %v4439 = vpop.f32.mrf.mxu0
        %v4440 = vadd.f32 0.0, %v4439
        %v4441 = vpop.f32.mrf.mxu0
        %v4442 = vadd.f32 0.0, %v4441
        %v4443 = vpop.f32.mrf.mxu0
        %v4444 = vpop.f32.mrf.mxu0
        %4445 = vdwg.mxu0
        %4446 = vmatprep.subr.bf16.mxu0 %v2884
        %4447 = vmatpush1.bf16.msra.mxu0 %v2883
        %4448 = vmatprep.subr.bf16.mxu0 %v2848
        %4449 = vmatpush1.bf16.msra.mxu0 %v2847
        %4450 = vmatprep.subr.bf16.mxu0 %v2812
        %4451 = vmatpush1.bf16.msra.mxu0 %v2811
        %4452 = vmatprep.subr.bf16.mxu0 %v2776
        %4453 = vmatpush1.bf16.msra.mxu0 %v2775
        %4454 = vmatprep.subr.bf16.mxu0 %v2740
        %4455 = vmatpush1.bf16.msra.mxu0 %v2739
        %4456 = vmatprep.subr.bf16.mxu0 %v2704
        %4457 = vmatpush1.bf16.msra.mxu0 %v2703
        %4458 = vmatprep.subr.bf16.mxu0 %v2668
        %4459 = vmatpush1.bf16.msra.mxu0 %v2667
        %4460 = vmatprep.subr.bf16.mxu0 %v2632
        %4461 = vmatpush1.bf16.msra.mxu0 %v2631
        %4462 = vmatprep.subr.bf16.mxu0 %v3172
        %4463 = vmatpush2.bf16.msra.mxu0 %v3171
        %4464 = vmatprep.subr.bf16.mxu0 %v3136
        %4465 = vmatpush2.bf16.msra.mxu0 %v3135
        %4466 = vmatprep.subr.bf16.mxu0 %v3100
        %4467 = vmatpush2.bf16.msra.mxu0 %v3099
        %4468 = vmatprep.subr.bf16.mxu0 %v3064
        %4469 = vmatpush2.bf16.msra.mxu0 %v3063
        %4470 = vmatprep.subr.bf16.mxu0 %v3028
        %4471 = vmatpush2.bf16.msra.mxu0 %v3027
        %4472 = vmatprep.subr.bf16.mxu0 %v2992
        %4473 = vmatpush2.bf16.msra.mxu0 %v2991
        %4474 = vmatprep.subr.bf16.mxu0 %v2956
        %4475 = vmatpush2.bf16.msra.mxu0 %v2955
        %4476 = vmatprep.subr.bf16.mxu0 %v2920
        %4477 = vmatpush2.bf16.msra.mxu0 %v2919
        %4478 = vmatprep.mubr.bf16.mxu0 %v866
        %4479 = vmatmul.mubr.bf16.gmra.mxu0 %v865
        %v4480 = vpop.f32.mrf.mxu0
        %v4481 = vadd.f32 0.0, %v4480
        %v4482 = vpop.f32.mrf.mxu0
        %v4483 = vadd.f32 0.0, %v4482
        %v4484 = vpop.f32.mrf.mxu0
        %v4485 = vpop.f32.mrf.mxu0
        %4486 = vdwg.mxu0
        %v4487 = vpack.c.bf16 %v3784, %v3784
        %v4488 = vpack.c.bf16 %v3786, %v3786
        %v4489 = vpack.c.bf16 %v3825, %v3825
        %v4490 = vpack.c.bf16 %v3827, %v3827
        %v4491 = vpack.c.bf16 %v3866, %v3866
        %v4492 = vpack.c.bf16 %v3868, %v3868
        %v4493 = vpack.c.bf16 %v3907, %v3907
        %v4494 = vpack.c.bf16 %v3909, %v3909
        %v4495 = vpack.c.bf16 %v3948, %v3948
        %v4496 = vpack.c.bf16 %v3950, %v3950
        %v4497 = vpack.c.bf16 %v3989, %v3989
        %v4498 = vpack.c.bf16 %v3991, %v3991
        %v4499 = vpack.c.bf16 %v4030, %v4030
        %v4500 = vpack.c.bf16 %v4032, %v4032
        %v4501 = vpack.c.bf16 %v4071, %v4071
        %v4502 = vpack.c.bf16 %v4073, %v4073
        %v4503 = vpack.c.bf16 %v4112, %v4112
        %v4504 = vpack.c.bf16 %v4114, %v4114
        %v4505 = vpack.c.bf16 %v4153, %v4153
        %v4506 = vpack.c.bf16 %v4155, %v4155
        %v4507 = vpack.c.bf16 %v4194, %v4194
        %v4508 = vpack.c.bf16 %v4196, %v4196
        %v4509 = vpack.c.bf16 %v4235, %v4235
        %v4510 = vpack.c.bf16 %v4237, %v4237
        %v4511 = vpack.c.bf16 %v4276, %v4276
        %v4512 = vpack.c.bf16 %v4278, %v4278
        %v4513 = vpack.c.bf16 %v4317, %v4317
        %v4514 = vpack.c.bf16 %v4319, %v4319
        %v4515 = vpack.c.bf16 %v4358, %v4358
        %v4516 = vpack.c.bf16 %v4360, %v4360
        %v4517 = vpack.c.bf16 %v4399, %v4399
        %v4518 = vpack.c.bf16 %v4401, %v4401
        %v4519 = vpack.c.bf16 %v4440, %v4440
        %v4520 = vpack.c.bf16 %v4442, %v4442
        %v4521 = vpack.c.bf16 %v4481, %v4481
        %v4522 = vpack.c.bf16 %v4483, %v4483
        %v4527 = vunpack.c.l.b16 %v4487
        %v4528 = vunpack.c.l.b16 %v4488
        %v4529 = vunpack.c.l.b16 %v4489
        %v4530 = vunpack.c.l.b16 %v4490
        %v4531 = vpack.c.b16 %v4528, %v4527
        %v4532 = vpack.c.b16 %v4530, %v4529
        %4535 = vst [vmem:[#allocation2] sm:$0x33] %v4531
        %4536 = vst [vmem:[#allocation2 + $0x8] sm:$0x33] %v4532
        %v4541 = vunpack.c.l.b16 %v4491
        %v4542 = vunpack.c.l.b16 %v4492
        %v4543 = vunpack.c.l.b16 %v4493
        %v4544 = vunpack.c.l.b16 %v4494
        %v4545 = vpack.c.b16 %v4542, %v4541
        %v4546 = vpack.c.b16 %v4544, %v4543
        %v4547 = vrot.slane %v4545, 6
        %v4548 = vrot.slane %v4546, 6
        %4551 = vst [vmem:[#allocation2] sm:$0xcc] %v4547
        %4552 = vst [vmem:[#allocation2 + $0x8] sm:$0xcc] %v4548
        %v4557 = vunpack.c.l.b16 %v4495
        %v4558 = vunpack.c.l.b16 %v4496
        %v4559 = vunpack.c.l.b16 %v4497
        %v4560 = vunpack.c.l.b16 %v4498
        %v4561 = vpack.c.b16 %v4558, %v4557
        %v4562 = vpack.c.b16 %v4560, %v4559
        %4565 = vst [vmem:[#allocation2 + $0x10] sm:$0x33] %v4561
        %4566 = vst [vmem:[#allocation2 + $0x18] sm:$0x33] %v4562
        %v4571 = vunpack.c.l.b16 %v4499
        %v4572 = vunpack.c.l.b16 %v4500
        %v4573 = vunpack.c.l.b16 %v4501
        %v4574 = vunpack.c.l.b16 %v4502
        %v4575 = vpack.c.b16 %v4572, %v4571
        %v4576 = vpack.c.b16 %v4574, %v4573
        %v4577 = vrot.slane %v4575, 6
        %v4578 = vrot.slane %v4576, 6
        %4581 = vst [vmem:[#allocation2 + $0x10] sm:$0xcc] %v4577
        %4582 = vst [vmem:[#allocation2 + $0x18] sm:$0xcc] %v4578
        %v4587 = vunpack.c.l.b16 %v4503
        %v4588 = vunpack.c.l.b16 %v4504
        %v4589 = vunpack.c.l.b16 %v4505
        %v4590 = vunpack.c.l.b16 %v4506
        %v4591 = vpack.c.b16 %v4588, %v4587
        %v4592 = vpack.c.b16 %v4590, %v4589
        %4595 = vst [vmem:[#allocation2 + $0x20] sm:$0x33] %v4591
        %4596 = vst [vmem:[#allocation2 + $0x28] sm:$0x33] %v4592
        %v4601 = vunpack.c.l.b16 %v4507
        %v4602 = vunpack.c.l.b16 %v4508
        %v4603 = vunpack.c.l.b16 %v4509
        %v4604 = vunpack.c.l.b16 %v4510
        %v4605 = vpack.c.b16 %v4602, %v4601
        %v4606 = vpack.c.b16 %v4604, %v4603
        %v4607 = vrot.slane %v4605, 6
        %v4608 = vrot.slane %v4606, 6
        %4611 = vst [vmem:[#allocation2 + $0x20] sm:$0xcc] %v4607
        %4612 = vst [vmem:[#allocation2 + $0x28] sm:$0xcc] %v4608
        %v4617 = vunpack.c.l.b16 %v4511
        %v4618 = vunpack.c.l.b16 %v4512
        %v4619 = vunpack.c.l.b16 %v4513
        %v4620 = vunpack.c.l.b16 %v4514
        %v4621 = vpack.c.b16 %v4618, %v4617
        %v4622 = vpack.c.b16 %v4620, %v4619
        %4625 = vst [vmem:[#allocation2 + $0x30] sm:$0x33] %v4621
        %4626 = vst [vmem:[#allocation2 + $0x38] sm:$0x33] %v4622
        %v4631 = vunpack.c.l.b16 %v4515
        %v4632 = vunpack.c.l.b16 %v4516
        %v4633 = vunpack.c.l.b16 %v4517
        %v4634 = vunpack.c.l.b16 %v4518
        %v4635 = vpack.c.b16 %v4632, %v4631
        %v4636 = vpack.c.b16 %v4634, %v4633
        %v4637 = vrot.slane %v4635, 6
        %v4638 = vrot.slane %v4636, 6
        %4641 = vst [vmem:[#allocation2 + $0x30] sm:$0xcc] %v4637
        %4642 = vst [vmem:[#allocation2 + $0x38] sm:$0xcc] %v4638
        %v4647 = vunpack.c.l.b16 %v4519
        %v4648 = vunpack.c.l.b16 %v4520
        %v4649 = vunpack.c.l.b16 %v4521
        %v4650 = vunpack.c.l.b16 %v4522
        %v4651 = vpack.c.b16 %v4648, %v4647
        %v4652 = vpack.c.b16 %v4650, %v4649
        %4655 = vst [vmem:[#allocation2 + $0x40] sm:$0x33] %v4651
        %4656 = vst [vmem:[#allocation2 + $0x48] sm:$0x33] %v4652
        %v4657 = vld [vmem:[#allocation8] sm:$0x3]
        %v4658 = vld [vmem:[#allocation2] sm:$0xff]
        %v4659 = vld [vmem:[#allocation2 + $0x8] sm:$0xff]
        %v4660 = vld [vmem:[#allocation2 + $0x10] sm:$0xff]
        %v4661 = vld [vmem:[#allocation2 + $0x18] sm:$0xff]
        %v4662 = vld [vmem:[#allocation2 + $0x20] sm:$0xff]
        %v4663 = vld [vmem:[#allocation2 + $0x28] sm:$0xff]
        %v4664 = vld [vmem:[#allocation2 + $0x30] sm:$0xff]
        %v4665 = vld [vmem:[#allocation2 + $0x38] sm:$0xff]
        %v4666 = vld [vmem:[#allocation2 + $0x40] sm:$0x33]
        %v4667 = vld [vmem:[#allocation2 + $0x48] sm:$0x33]
        %v4668 = vld [vmem:[%s3] sm:$0xf]
        %4670 = vset.pattern.permute.xlu0 0
        %4671 = vperm.xlu0 %4670, %v4668
        %v4672 = vpop.permute.xlu0 %4671
        %v4684 = vunpack.c.l.b16 %v4658
        %v4685 = vunpack.c.h.b16 %v4658
        %v4686 = vunpack.c.l.b16 %v4659
        %v4687 = vunpack.c.h.b16 %v4659
        %v4688 = vunpack.c.l.b16 %v4660
        %v4689 = vunpack.c.h.b16 %v4660
        %v4690 = vunpack.c.l.b16 %v4661
        %v4691 = vunpack.c.h.b16 %v4661
        %v4692 = vunpack.c.l.b16 %v4662
        %v4693 = vunpack.c.h.b16 %v4662
        %v4694 = vunpack.c.l.b16 %v4663
        %v4695 = vunpack.c.h.b16 %v4663
        %v4696 = vunpack.c.l.b16 %v4664
        %v4697 = vunpack.c.h.b16 %v4664
        %v4698 = vunpack.c.l.b16 %v4665
        %v4699 = vunpack.c.h.b16 %v4665
        %v4700 = vunpack.c.l.b16 %v4666
        %v4701 = vunpack.c.h.b16 %v4666
        %v4702 = vunpack.c.l.b16 %v4667
        %v4703 = vunpack.c.h.b16 %v4667
        %v4704 = vpack.c.b16 %v4688, %v4684
        %v4705 = vpack.c.b16 %v4689, %v4685
        %v4706 = vpack.c.b16 %v4690, %v4686
        %v4707 = vpack.c.b16 %v4691, %v4687
        %v4708 = vpack.c.b16 %v4696, %v4692
        %v4709 = vpack.c.b16 %v4697, %v4693
        %v4710 = vpack.c.b16 %v4698, %v4694
        %v4711 = vpack.c.b16 %v4699, %v4695
        %v4712 = vpack.c.b16 %v4700, %v4700
        %v4713 = vpack.c.b16 %v4701, %v4701
        %v4714 = vpack.c.b16 %v4702, %v4702
        %v4715 = vpack.c.b16 %v4703, %v4703
        %vm4724 = vcmask 293888
        %v4726 = vsel %vm4724, %v4657, 0
        %vm4728 = vcmask 1041408
        %v4730 = vsel %vm4728, %v4712, 0
        %v4733 = vsel %vm4728, %v4713, 0
        %v4736 = vsel %vm4728, %v4714, 0
        %v4739 = vsel %vm4728, %v4715, 0
        %4741 = vmatprep.subr.bf16.mxu0 0
        %4742 = vmatpush1.bf16.msra.mxu0 0
        %4743 = vmatprep.subr.bf16.mxu0 0
        %4744 = vmatpush1.bf16.msra.mxu0 0
        %4745 = vmatprep.subr.bf16.mxu0 0
        %4746 = vmatpush1.bf16.msra.mxu0 0
        %4747 = vmatprep.subr.bf16.mxu0 0
        %4748 = vmatpush1.bf16.msra.mxu0 0
        %4749 = vmatprep.subr.bf16.mxu0 0
        %4750 = vmatpush1.bf16.msra.mxu0 0
        %4751 = vmatprep.subr.bf16.mxu0 %v4733
        %4752 = vmatpush1.bf16.msra.mxu0 %v4730
        %4753 = vmatprep.subr.bf16.mxu0 %v4709
        %4754 = vmatpush1.bf16.msra.mxu0 %v4708
        %4755 = vmatprep.subr.bf16.mxu0 %v4705
        %4756 = vmatpush1.bf16.msra.mxu0 %v4704
        %4757 = vmatprep.subr.bf16.mxu0 0
        %4758 = vmatpush2.bf16.msra.mxu0 0
        %4759 = vmatprep.subr.bf16.mxu0 0
        %4760 = vmatpush2.bf16.msra.mxu0 0
        %4761 = vmatprep.subr.bf16.mxu0 0
        %4762 = vmatpush2.bf16.msra.mxu0 0
        %4763 = vmatprep.subr.bf16.mxu0 0
        %4764 = vmatpush2.bf16.msra.mxu0 0
        %4765 = vmatprep.subr.bf16.mxu0 0
        %4766 = vmatpush2.bf16.msra.mxu0 0
        %4767 = vmatprep.subr.bf16.mxu0 0
        %4768 = vmatpush2.bf16.msra.mxu0 0
        %4769 = vmatprep.subr.bf16.mxu0 0
        %4770 = vmatpush2.bf16.msra.mxu0 0
        %4771 = vmatprep.subr.bf16.mxu0 0
        %4772 = vmatpush2.bf16.msra.mxu0 0
        %4773 = vmatprep.mubr.bf16.mxu0 0
        %4774 = vmatmul.mubr.bf16.gmra.mxu0 %v4726
        %v4775 = vpop.f32.mrf.mxu0
        %v4776 = vadd.f32 %v4672, %v4775
        %v4777 = vpop.f32.mrf.mxu0
        %v4778 = vadd.f32 %v4672, %v4777
        %v4779 = vpop.f32.mrf.mxu0
        %v4780 = vpop.f32.mrf.mxu0
        %4781 = vdwg.mxu0
        %4782 = vmatprep.subr.bf16.mxu0 0
        %4783 = vmatpush1.bf16.msra.mxu0 0
        %4784 = vmatprep.subr.bf16.mxu0 0
        %4785 = vmatpush1.bf16.msra.mxu0 0
        %4786 = vmatprep.subr.bf16.mxu0 0
        %4787 = vmatpush1.bf16.msra.mxu0 0
        %4788 = vmatprep.subr.bf16.mxu0 0
        %4789 = vmatpush1.bf16.msra.mxu0 0
        %4790 = vmatprep.subr.bf16.mxu0 0
        %4791 = vmatpush1.bf16.msra.mxu0 0
        %4792 = vmatprep.subr.bf16.mxu0 %v4739
        %4793 = vmatpush1.bf16.msra.mxu0 %v4736
        %4794 = vmatprep.subr.bf16.mxu0 %v4711
        %4795 = vmatpush1.bf16.msra.mxu0 %v4710
        %4796 = vmatprep.subr.bf16.mxu0 %v4707
        %4797 = vmatpush1.bf16.msra.mxu0 %v4706
        %4798 = vmatprep.subr.bf16.mxu0 0
        %4799 = vmatpush2.bf16.msra.mxu0 0
        %4800 = vmatprep.subr.bf16.mxu0 0
        %4801 = vmatpush2.bf16.msra.mxu0 0
        %4802 = vmatprep.subr.bf16.mxu0 0
        %4803 = vmatpush2.bf16.msra.mxu0 0
        %4804 = vmatprep.subr.bf16.mxu0 0
        %4805 = vmatpush2.bf16.msra.mxu0 0
        %4806 = vmatprep.subr.bf16.mxu0 0
        %4807 = vmatpush2.bf16.msra.mxu0 0
        %4808 = vmatprep.subr.bf16.mxu0 0
        %4809 = vmatpush2.bf16.msra.mxu0 0
        %4810 = vmatprep.subr.bf16.mxu0 0
        %4811 = vmatpush2.bf16.msra.mxu0 0
        %4812 = vmatprep.subr.bf16.mxu0 0
        %4813 = vmatpush2.bf16.msra.mxu0 0
        %4814 = vmatprep.mubr.bf16.mxu0 0
        %4815 = vmatmul.mubr.bf16.gmra.mxu0 %v4726
        %v4816 = vpop.f32.mrf.mxu0
        %v4817 = vadd.f32 %v4672, %v4816
        %v4818 = vpop.f32.mrf.mxu0
        %v4819 = vadd.f32 %v4672, %v4818
        %v4820 = vpop.f32.mrf.mxu0
        %v4821 = vpop.f32.mrf.mxu0
        %4822 = vdwg.mxu0
        %v4827 = vcombine.low %v4776, %v4778
        %v4828 = vcombine.low %v4817, %v4819
        %4831 = vst [vmem:[%s279] sm:$0xff] %v4827
        %4832 = vst [vmem:[%s279 + $0x8] sm:$0xff] %v4828
        %s4833 = sand.u32 %s140, 1
        %s4834 = scalar_lea.sflag [#allocation5], %s4833
        %s4835 = sand.u32 %s140, 1
        %s4836 = smul.addr %s4835, 16
        %s4837 = scalar_lea.vmem [#allocation9], %s4836
        // Predicated region
        $region49: #{tpu_custom_call.1} parent=35 // pred_check
          %p4838 = pneg %p150
        $region50: #{tpu_custom_call.1} parent=35 // pred_check_branch
          %4840 = sbr.rel (%p4838) target = $region52
        $region51: #{tpu_custom_call.1} parent=35 // pred_region
          %s4842 = ssub.s32 256, 256
          %4843 = vsyncadd %s4834, %s4842
          %s4844 = smul.addr %s29, 4
          %s4845 = smul.addr %s28, 8
          %s4846 = sadd.s32 %s4844, %s4845
          %s4847 = smul.addr %s4846, 64
          %s4848 = scalar_lea.hbm %s4, %s4847
          %s4850 = sshll.u32 %s4837, 4
          %s4851 = int_to_ptr.vmem [resolvable:$true] %s4850
          %4853 = dma.vmem_to_hbm [thread:$0]  %s4851, 256, %s4848, %s4834
        $region52: #{tpu_custom_call.1} parent=35 // pred_fallthru
          _
      $region36: #{tpu_custom_call.1} parent=5 // pred_fallthru
        _
      %p4854 = scmp.le.s32.totalorder 2, %s19
      // Predicated region
      $region53: #{tpu_custom_call.1} parent=5 // pred_check
        %p4855 = pneg %p4854
      $region54: #{tpu_custom_call.1} parent=5 // pred_check_branch
        %4857 = sbr.rel (%p4855) target = $region56
      $region55: #{tpu_custom_call.1} parent=5 // pred_region
        %s4858 = ssub.s32 %s19, 2
        // Predicated region
        $region57: #{tpu_custom_call.1} parent=55 // pred_check
          %p4859 = pneg %p156
        $region58: #{tpu_custom_call.1} parent=55 // pred_check_branch
          %4861 = sbr.rel (%p4859) target = $region60
        $region59: #{tpu_custom_call.1} parent=55 // pred_region
          %s4862 = sand.u32 %s141, 1
          %s4863 = scalar_lea.sflag [#allocation5], %s4862
          %s4864 = sand.u32 %s141, 1
          %s4865 = smul.addr %s4864, 16
          %s4866 = scalar_lea.vmem [#allocation9], %s4865
          %4867 = dma.done %s4863, 256
        $region60: #{tpu_custom_call.1} parent=55 // pred_fallthru
          _
      $region56: #{tpu_custom_call.1} parent=5 // pred_fallthru
        _
    $region6: #{tpu_custom_call.1} parent=1 // loop_footer
      %s23 = sadd.s32 1, %s19
    $region7: #{tpu_custom_call.1} parent=1 // loop_footer_branch
      %18 = sbr.rel target = $region3
    $region8: #{tpu_custom_call.1} parent=1 // loop_exit
      _
    %4868 = vsyncpa [#allocation4], 1
    %s4869 = scalar_lea.sflag [#allocation4], 1
    %4870 = vsyncpa %s4869, 1
    %4871 = vsyncpa [#allocation7], 1
    %s4872 = scalar_lea.sflag [#allocation7], 1
    %4873 = vsyncpa %s4872, 1
    %4874 = vsyncpa [#allocation5], 1
    %s4875 = scalar_lea.sflag [#allocation5], 1
    %4876 = vsyncpa %s4875, 1

</llo_original>
